<compile_context>
chip_gen: v7x
topology: tpu7x:2x2x1
jax: 0.10.0
libtpu: 0.0.40
codegen_flags: <defaults>
</compile_context>

<pallas_src>
import math

import jax
import jax.numpy as jnp
from jax import lax
from jax.experimental import pallas as pl
from jax.experimental.pallas import tpu as pltpu

LN_EPS = 1e-12                                        # espnet LayerNorm eps
MASK_MIN = float(jnp.finfo(jnp.float32).min) / 2.0    # finite f32 mask fill


def _round_up(x, m):
    return ((x + m - 1) // m) * m


def _layernorm(x, gamma, beta):
    # x: (T, D) f32, gamma/beta: (1, D) f32
    mu = jnp.mean(x, axis=-1, keepdims=True)
    var = jnp.mean((x - mu) ** 2, axis=-1, keepdims=True)
    return (x - mu) * lax.rsqrt(var + LN_EPS) * gamma + beta


def _vmem_limit_bytes():
    # Generation-aware budget: ~75% of physical VMEM (leave compiler headroom).
    try:
        cap = int(pltpu.get_tpu_info().vmem_capacity_bytes)
        if cap > 0:
            return (cap * 3) // 4
    except Exception:
        pass
    return 64 * 1024 * 1024


def _encoder_layer_kernel(
    # inputs
    x_kv_ref, x_q_ref, mask_ref,
    g1_ref, be1_ref, g2_ref, be2_ref,
    wq_ref, bq_ref, wkv_ref, bkv_ref,
    wo_ref, bo_ref,
    wf1_ref, bf1_ref, wf2_ref, bf2_ref,
    # output
    out_ref,
    # scratch
    k_scr, v_scr,
):
    f32, bf16 = jnp.float32, jnp.bfloat16
    qi = pl.program_id(1)
    n_kv, n_head, dk, kv_blk = k_scr.shape            # static
    t_pad = n_kv * kv_blk
    tq = x_q_ref.shape[1]
    d = n_head * dk
    scale = 1.0 / math.sqrt(dk)

    g1 = g1_ref[...]
    be1 = be1_ref[...]

    # ---- K / V for the whole (padded) sequence, once per batch element.
    # NOTE: correctness relies on the q grid axis being innermost & sequential
    # ("arbitrary") so the VMEM scratch persists across query tiles of one b.
    @pl.when(qi == 0)
    def _():
        xk = _layernorm(x_kv_ref[0].astype(f32), g1, be1)
        kv = jnp.dot(xk.astype(bf16), wkv_ref[...],
                     preferred_element_type=f32) + bkv_ref[...]   # (T, 2D) f32
        # K stored transposed & head-major (H, dk, T): lane dim is T (dense),
        # transpose amortized once per batch over all query tiles.
        k_t = jnp.transpose(kv[:, :d]).reshape(n_head, dk, t_pad).astype(bf16)
        v_all = kv[:, d:].astype(bf16)                            # (T, D)
        for i in range(n_kv):                                     # static chunks
            k_scr[i] = k_t[:, :, i * kv_blk:(i + 1) * kv_blk]
            v_scr[i] = v_all[i * kv_blk:(i + 1) * kv_blk, :]

    # ---- Q projection for this query tile: one full-width (TQ,D)@(D,D) dot.
    x_res = x_q_ref[0].astype(f32)                                # (TQ, D)
    xn = _layernorm(x_res, g1, be1)
    q = jnp.dot(xn.astype(bf16), wq_ref[...],
                preferred_element_type=f32) + bq_ref[...]
    q = q * scale                                                 # fold 1/sqrt(dk)
    qh = jnp.transpose(q.astype(bf16).reshape(tq, n_head, dk),
                       (1, 0, 2))                                 # (H, TQ, dk)

    # ---- KV-tiled online-softmax attention (bounds scores to H*TQ*TK f32).
    neg = jnp.float32(MASK_MIN)
    m0 = jnp.full((n_head, tq, 1), neg, f32)
    l0 = jnp.zeros((n_head, tq, 1), f32)
    acc0 = jnp.zeros((n_head, tq, dk), f32)

    def kv_step(i, carry):
        m, l, acc = carry
        k_c = k_scr[i]                                   # (H, dk, TK) bf16
        v_c = v_scr[i]                                   # (TK, D)     bf16
        keep = mask_ref[:, pl.ds(i, 1), :] > 0.0         # (1, 1, TK)
        s = jnp.einsum("hqd,hdt->hqt", qh, k_c,
                       preferred_element_type=f32)       # (H, TQ, TK) f32
        s = jnp.where(keep, s, neg)
        m_new = jnp.maximum(m, jnp.max(s, axis=-1, keepdims=True))
        alpha = jnp.exp(m - m_new)
        e = jnp.where(keep, jnp.exp(s - m_new), 0.0)     # espnet zeros masked attn
        l_new = alpha * l + jnp.sum(e, axis=-1, keepdims=True)
        e_b = e.astype(bf16)
        # P @ V per head: deep T contraction, lane-dense V slices.
        pv = jnp.stack(
            [jnp.dot(e_b[h], v_c[:, h * dk:(h + 1) * dk],
                     preferred_element_type=f32) for h in range(n_head)],
            axis=0)                                      # (H, TQ, dk) f32
        return m_new, l_new, alpha * acc + pv

    m_f, l_f, acc_f = lax.fori_loop(0, n_kv, kv_step, (m0, l0, acc0),
                                    unroll=(n_kv <= 8))

    inv = pl.reciprocal(jnp.maximum(l_f, 1e-30), approx=True)     # EUP slot
    ctx = acc_f * inv                                             # (H, TQ, dk)
    # Lane-dense head concat, then ONE (TQ, D) @ (D, D) output projection.
    ctx_c = jnp.transpose(ctx, (1, 0, 2)).reshape(tq, d).astype(bf16)
    att = jnp.dot(ctx_c, wo_ref[...], preferred_element_type=f32) + bo_ref[...]

    # residual (dropout == identity in eval mode)
    x1 = x_res + att

    # ---- norm2 + PositionwiseFeedForward -----------------------------------
    x2n = _layernorm(x1, g2_ref[...], be2_ref[...]).astype(bf16)
    h1 = jnp.dot(x2n, wf1_ref[...], preferred_element_type=f32) + bf1_ref[...]
    h1 = jnp.maximum(h1, 0.0).astype(bf16)                        # ReLU
    ff = jnp.dot(h1, wf2_ref[...], preferred_element_type=f32) + bf2_ref[...]

    out_ref[0] = (x1 + ff).astype(out_ref.dtype)


def encoder_layer(x, mask, params, *, n_head, q_block=None, kv_block=None):
    """x: (B, T, D) f32, mask: (B, 1, T) float {0,1} -> (out (B, T, D), mask)."""
    B, T, D = x.shape
    assert D % n_head == 0, "size must be divisible by n_head"
    DFF = params["wf1"].shape[1]
    f32, bf16 = jnp.float32, jnp.bfloat16

    # ---- tiling: pad T instead of falling back to one giant tile -----------
    if q_block is None:
        q_block = 128    # TODO(synk): default to 256 on v5e/v6e (128 MiB VMEM)
    q_block = _round_up(max(8, min(q_block, _round_up(T, 8))), 8)
    t_pad = _round_up(T, q_block)
    nq = t_pad // q_block

    if kv_block is None:
        kv_block = t_pad
        for cand in (512, 384, 256, 128, 64, 32, 16, 8):
            if cand <= t_pad and t_pad % cand == 0:
                kv_block = cand
                break
    assert t_pad % kv_block == 0
    n_kv = t_pad // kv_block

    if t_pad != T:
        x_p = jnp.pad(x, ((0, 0), (0, t_pad - T), (0, 0)))
        mask_p = jnp.pad(mask.astype(f32), ((0, 0), (0, 0), (0, t_pad - T)))
    else:
        x_p, mask_p = x, mask.astype(f32)
    mask_r = mask_p.reshape(B, n_kv, kv_block)       # per-chunk mask, lane-dense

    # ---- weight layouts: fused K|V weight, full-width matmuls everywhere ----
    wq = params["wq"].astype(bf16); bq = params["bq"].astype(f32)
    wkv = jnp.concatenate([params["wk"], params["wv"]], axis=1).astype(bf16)
    bkv = jnp.concatenate([params["bk"], params["bv"]], axis=1).astype(f32)
    wo = params["wo"].astype(bf16); bo = params["bo"].astype(f32)
    wf1 = params["wf1"].astype(bf16); bf1 = params["bf1"].astype(f32)
    wf2 = params["wf2"].astype(bf16); bf2 = params["bf2"].astype(f32)
    g1 = params["g1"].astype(f32); be1 = params["be1"].astype(f32)
    g2 = params["g2"].astype(f32); be2 = params["be2"].astype(f32)

    def build(single_buffer):
        def const2(shape):
            if single_buffer:
                return pl.BlockSpec(shape, lambda b, q: (0, 0),
                                    pipeline_mode=pl.Buffered(1))
            return pl.BlockSpec(shape, lambda b, q: (0, 0))

        if single_buffer:   # x_kv block index is constant along the q axis
            x_kv_spec = pl.BlockSpec((1, t_pad, D), lambda b, q: (b, 0, 0),
                                     pipeline_mode=pl.Buffered(1))
        else:
            x_kv_spec = pl.BlockSpec((1, t_pad, D), lambda b, q: (b, 0, 0))

        in_specs = [
            x_kv_spec,                                               # x (keys/vals)
            pl.BlockSpec((1, q_block, D), lambda b, q: (b, q, 0)),   # x (query tile)
            pl.BlockSpec((1, n_kv, kv_block), lambda b, q: (b, 0, 0)),  # mask
            const2((1, D)), const2((1, D)),                          # g1, be1
            const2((1, D)), const2((1, D)),                          # g2, be2
            const2((D, D)), const2((1, D)),                          # wq, bq
            const2((D, 2 * D)), const2((1, 2 * D)),                  # wkv, bkv
            const2((D, D)), const2((1, D)),                          # wo, bo
            const2((D, DFF)), const2((1, DFF)),                      # wf1, bf1
            const2((DFF, D)), const2((1, D)),                        # wf2, bf2
        ]
        return pl.pallas_call(
            _encoder_layer_kernel,
            out_shape=jax.ShapeDtypeStruct((B, t_pad, D), x.dtype),
            grid_spec=pltpu.PrefetchScalarGridSpec(
                num_scalar_prefetch=0,
                grid=(B, nq),
                in_specs=in_specs,
                out_specs=pl.BlockSpec((1, q_block, D), lambda b, q: (b, q, 0)),
                scratch_shapes=[
                    pltpu.VMEM((n_kv, n_head, D // n_head, kv_block), bf16),  # K^T
                    pltpu.VMEM((n_kv, kv_block, D), bf16),                    # V
                ],
            ),
            compiler_params=pltpu.CompilerParams(
                dimension_semantics=("parallel", "arbitrary"),
                vmem_limit_bytes=_vmem_limit_bytes(),
            ),
        )

    args = (x_p, x_p, mask_r, g1, be1, g2, be2,
            wq, bq, wkv, bkv, wo, bo, wf1, bf1, wf2, bf2)
    try:
        out = jax.block_until_ready(build(True)(*args))   # single-buffered consts
    except Exception:
        out = build(False)(*args)                         # default double-buffering

    if t_pad != T:
        out = out[:, :T, :]
    return out, mask


def init_params(key, D, DFF):
    ks = jax.random.split(key, 8)
    s = 0.05
    return {
        "g1": jnp.ones((1, D), jnp.float32),
        "be1": jnp.zeros((1, D), jnp.float32),
        "g2": jnp.ones((1, D), jnp.float32),
        "be2": jnp.zeros((1, D), jnp.float32),
        "wq": s * jax.random.normal(ks[0], (D, D), jnp.float32),
        "bq": jnp.zeros((1, D), jnp.float32),
        "wk": s * jax.random.normal(ks[1], (D, D), jnp.float32),
        "bk": jnp.zeros((1, D), jnp.float32),
        "wv": s * jax.random.normal(ks[2], (D, D), jnp.float32),
        "bv": jnp.zeros((1, D), jnp.float32),
        "wo": s * jax.random.normal(ks[3], (D, D), jnp.float32),
        "bo": jnp.zeros((1, D), jnp.float32),
        "wf1": s * jax.random.normal(ks[4], (D, DFF), jnp.float32),
        "bf1": jnp.zeros((1, DFF), jnp.float32),
        "wf2": s * jax.random.normal(ks[5], (DFF, D), jnp.float32),
        "bf2": jnp.zeros((1, D), jnp.float32),
    }


def _reference(x, mask, params, n_head):
    """Pure-JAX f32 reference of the EncoderLayer forward (eval mode)."""
    B, T, D = x.shape
    dk = D // n_head

    def ln(v, g, b):
        mu = v.mean(-1, keepdims=True)
        var = ((v - mu) ** 2).mean(-1, keepdims=True)
        return (v - mu) / jnp.sqrt(var + LN_EPS) * g + b

    xn = ln(x, params["g1"], params["be1"])

    def proj(v, w, b):
        return (v @ w + b).reshape(B, T, n_head, dk).transpose(0, 2, 1, 3)

    q = proj(xn, params["wq"], params["bq"])
    k = proj(xn, params["wk"], params["bk"])
    v = proj(xn, params["wv"], params["bv"])
    s = jnp.einsum("bhqd,bhkd->bhqk", q, k) / math.sqrt(dk)
    keep = mask[:, None, :, :] > 0
    s = jnp.where(keep, s, jnp.finfo(jnp.float32).min)
    a = jax.nn.softmax(s, axis=-1)
    a = jnp.where(keep, a, 0.0)
    ctx = jnp.einsum("bhqk,bhkd->bhqd", a, v).transpose(0, 2, 1, 3).reshape(B, T, D)
    att = ctx @ params["wo"] + params["bo"]
    x1 = x + att
    x2 = ln(x1, params["g2"], params["be2"])
    ff = jnp.maximum(x2 @ params["wf1"] + params["bf1"], 0.0) @ params["wf2"] \
        + params["bf2"]
    return x1 + ff


if __name__ == "__main__":
    # TODO(synk): cache branch (incremental decoding) and concat_after=True are
    # not implemented; this covers the standard encoder path (eval mode).
    # TODO(synk): for B=1 long-audio inputs on v7x, precompute K/V in a separate
    # pallas_call so the query axis can be megacore-"parallel".
    B, T, D, H, DFF = 2, 16, 128, 4, 256   # lane-dense D/DFF; dk = 32

    key = jax.random.PRNGKey(0)
    kx, kp = jax.random.split(key)
    x = jax.random.normal(kx, (B, T, D), jnp.float32)
    # mask: (B, 1, T), last four time steps of batch 1 are padding
    mask = jnp.ones((B, 1, T), jnp.float32)
    mask = mask.at[1, 0, T - 4:].set(0.0)

    params = init_params(kp, D, DFF)

    out, out_mask = encoder_layer(x, mask, params, n_head=H, q_block=8)
    out = jax.block_until_ready(out)

    assert out.shape == (B, T, D) and out.dtype == jnp.float32
    assert bool(jnp.all(jnp.isfinite(out)))

    ref = _reference(x, mask, params, H)
    max_err = float(jnp.max(jnp.abs(out - ref)))
    assert max_err < 0.25, f"mismatch vs f32 reference: {max_err}"

    print("KERNEL_OK")
</pallas_src>

<mosaic_0001>
module attributes {stable_mosaic.version = 11 : i64} {
  func.func @_encoder_layer_kernel(%arg0: i32, %arg1: i32, %arg2: memref<1x16x128xf32, #tpu.memory_space<vmem>>, %arg3: memref<1x8x128xf32, #tpu.memory_space<vmem>>, %arg4: memref<1x1x16xf32, #tpu.memory_space<vmem>>, %arg5: memref<1x128xf32, #tpu.memory_space<vmem>>, %arg6: memref<1x128xf32, #tpu.memory_space<vmem>>, %arg7: memref<1x128xf32, #tpu.memory_space<vmem>>, %arg8: memref<1x128xf32, #tpu.memory_space<vmem>>, %arg9: memref<128x128xbf16, #tpu.memory_space<vmem>>, %arg10: memref<1x128xf32, #tpu.memory_space<vmem>>, %arg11: memref<128x256xbf16, #tpu.memory_space<vmem>>, %arg12: memref<1x256xf32, #tpu.memory_space<vmem>>, %arg13: memref<128x128xbf16, #tpu.memory_space<vmem>>, %arg14: memref<1x128xf32, #tpu.memory_space<vmem>>, %arg15: memref<128x256xbf16, #tpu.memory_space<vmem>>, %arg16: memref<1x256xf32, #tpu.memory_space<vmem>>, %arg17: memref<256x128xbf16, #tpu.memory_space<vmem>>, %arg18: memref<1x128xf32, #tpu.memory_space<vmem>>, %arg19: memref<1x8x128xf32, #tpu.memory_space<vmem>>, %arg20: memref<1x4x32x16xbf16, #tpu.memory_space<vmem>>, %arg21: memref<1x16x128xbf16, #tpu.memory_space<vmem>>) attributes {dimension_semantics = [#tpu.dimension_semantics<parallel>, #tpu.dimension_semantics<arbitrary>], iteration_bounds = array<i64: 2, 2>, scalar_prefetch = 0 : i64, scratch_operands = 2 : i64, tpu.core_type = #tpu.core_type<tc>, window_params = [{pipeline_mode = #tpu.pipeline_mode<synchronous>, transform_indices = @transform_0, window_bounds = array<i64: 1, 16, 128>}, {transform_indices = @transform_1, window_bounds = array<i64: 1, 8, 128>}, {transform_indices = @transform_2, window_bounds = array<i64: 1, 1, 16>}, {pipeline_mode = #tpu.pipeline_mode<synchronous>, transform_indices = @transform_3, window_bounds = array<i64: 1, 128>}, {pipeline_mode = #tpu.pipeline_mode<synchronous>, transform_indices = @transform_4, window_bounds = array<i64: 1, 128>}, {pipeline_mode = #tpu.pipeline_mode<synchronous>, transform_indices = @transform_5, window_bounds = array<i64: 1, 128>}, {pipeline_mode = #tpu.pipeline_mode<synchronous>, transform_indices = @transform_6, window_bounds = array<i64: 1, 128>}, {pipeline_mode = #tpu.pipeline_mode<synchronous>, transform_indices = @transform_7, window_bounds = array<i64: 128, 128>}, {pipeline_mode = #tpu.pipeline_mode<synchronous>, transform_indices = @transform_8, window_bounds = array<i64: 1, 128>}, {pipeline_mode = #tpu.pipeline_mode<synchronous>, transform_indices = @transform_9, window_bounds = array<i64: 128, 256>}, {pipeline_mode = #tpu.pipeline_mode<synchronous>, transform_indices = @transform_10, window_bounds = array<i64: 1, 256>}, {pipeline_mode = #tpu.pipeline_mode<synchronous>, transform_indices = @transform_11, window_bounds = array<i64: 128, 128>}, {pipeline_mode = #tpu.pipeline_mode<synchronous>, transform_indices = @transform_12, window_bounds = array<i64: 1, 128>}, {pipeline_mode = #tpu.pipeline_mode<synchronous>, transform_indices = @transform_13, window_bounds = array<i64: 128, 256>}, {pipeline_mode = #tpu.pipeline_mode<synchronous>, transform_indices = @transform_14, window_bounds = array<i64: 1, 256>}, {pipeline_mode = #tpu.pipeline_mode<synchronous>, transform_indices = @transform_15, window_bounds = array<i64: 256, 128>}, {pipeline_mode = #tpu.pipeline_mode<synchronous>, transform_indices = @transform_16, window_bounds = array<i64: 1, 128>}, {transform_indices = @transform_17, window_bounds = array<i64: 1, 8, 128>}]} {
    %c0 = arith.constant 0 : index
    %c0_0 = arith.constant 0 : index
    %0 = vector.load %arg5[%c0, %c0_0] : memref<1x128xf32, #tpu.memory_space<vmem>>, vector<1x128xf32>
    %c0_1 = arith.constant 0 : index
    %c0_2 = arith.constant 0 : index
    %1 = vector.load %arg6[%c0_1, %c0_2] : memref<1x128xf32, #tpu.memory_space<vmem>>, vector<1x128xf32>
    %c0_i32 = arith.constant 0 : i32
    %2 = arith.cmpi eq, %arg1, %c0_i32 : i32
    %3 = arith.extui %2 : i1 to i32
    %c0_i32_3 = arith.constant 0 : i32
    %4 = arith.cmpi ne, %3, %c0_i32_3 : i32
    scf.if %4 {
      %c0_67 = arith.constant 0 : index
      %c0_68 = arith.constant 0 : index
      %c0_69 = arith.constant 0 : index
      %155 = vector.load %arg2[%c0_67, %c0_68, %c0_69] : memref<1x16x128xf32, #tpu.memory_space<vmem>>, vector<1x16x128xf32>
      %156 = vector.shape_cast %155 : vector<1x16x128xf32> to vector<16x128xf32>
      %cst_70 = arith.constant dense<0.000000e+00> : vector<16xf32>
      %157 = vector.multi_reduction <add>, %156, %cst_70 [1] : vector<16x128xf32> to vector<16xf32>
      %158 = vector.shape_cast %157 : vector<16xf32> to vector<16x1xf32>
      %cst_71 = arith.constant 1.280000e+02 : f32
      %159 = vector.broadcast %cst_71 : f32 to vector<16x1xf32>
      %160 = arith.divf %158, %159 : vector<16x1xf32>
      %161 = vector.broadcast %160 : vector<16x1xf32> to vector<16x128xf32>
      %162 = arith.subf %156, %161 : vector<16x128xf32>
      %163 = arith.mulf %162, %162 : vector<16x128xf32>
      %cst_72 = arith.constant dense<0.000000e+00> : vector<16xf32>
      %164 = vector.multi_reduction <add>, %163, %cst_72 [1] : vector<16x128xf32> to vector<16xf32>
      %165 = vector.shape_cast %164 : vector<16xf32> to vector<16x1xf32>
      %cst_73 = arith.constant 1.280000e+02 : f32
      %166 = vector.broadcast %cst_73 : f32 to vector<16x1xf32>
      %167 = arith.divf %165, %166 : vector<16x1xf32>
      %168 = vector.broadcast %160 : vector<16x1xf32> to vector<16x128xf32>
      %169 = arith.subf %156, %168 : vector<16x128xf32>
      %cst_74 = arith.constant 9.99999996E-13 : f32
      %170 = vector.broadcast %cst_74 : f32 to vector<16x1xf32>
      %171 = arith.addf %167, %170 : vector<16x1xf32>
      %172 = math.rsqrt %171 : vector<16x1xf32>
      %173 = vector.broadcast %172 : vector<16x1xf32> to vector<16x128xf32>
      %174 = arith.mulf %169, %173 : vector<16x128xf32>
      %175 = vector.broadcast %0 : vector<1x128xf32> to vector<16x128xf32>
      %176 = arith.mulf %174, %175 : vector<16x128xf32>
      %177 = vector.broadcast %1 : vector<1x128xf32> to vector<16x128xf32>
      %178 = arith.addf %176, %177 : vector<16x128xf32>
      %179 = arith.truncf %178 : vector<16x128xf32> to vector<16x128xbf16>
      %c0_75 = arith.constant 0 : index
      %c0_76 = arith.constant 0 : index
      %180 = vector.load %arg11[%c0_75, %c0_76] : memref<128x256xbf16, #tpu.memory_space<vmem>>, vector<128x256xbf16>
      %cst_77 = arith.constant dense<0.000000e+00> : vector<16x256xf32>
      %181 = tpu.matmul %179, %180, %cst_77 {dimension_numbers = #tpu.dot_dimension_numbers<[1], [0], [0], [1], [0, 0, 1, 1], [], []>} : vector<16x128xbf16>, vector<128x256xbf16>, vector<16x256xf32> -> vector<16x256xf32>
      %c0_78 = arith.constant 0 : index
      %c0_79 = arith.constant 0 : index
      %182 = vector.load %arg12[%c0_78, %c0_79] : memref<1x256xf32, #tpu.memory_space<vmem>>, vector<1x256xf32>
      %183 = vector.broadcast %182 : vector<1x256xf32> to vector<16x256xf32>
      %184 = arith.addf %181, %183 : vector<16x256xf32>
      %185 = vector.extract_strided_slice %184 {offsets = [0, 0], sizes = [16, 128], strides = [1, 1]} : vector<16x256xf32> to vector<16x128xf32>
      %186 = tpu.transpose %185, [1, 0] : vector<16x128xf32> -> vector<128x16xf32>
      %187 = vector.shape_cast %186 : vector<128x16xf32> to vector<4x32x16xf32>
      %188 = arith.truncf %187 : vector<4x32x16xf32> to vector<4x32x16xbf16>
      %189 = vector.extract_strided_slice %184 {offsets = [0, 128], sizes = [16, 128], strides = [1, 1]} : vector<16x256xf32> to vector<16x128xf32>
      %190 = arith.truncf %189 : vector<16x128xf32> to vector<16x128xbf16>
      %c0_80 = arith.constant 0 : index
      %c0_81 = arith.constant 0 : index
      %c0_82 = arith.constant 0 : index
      %c0_83 = arith.constant 0 : index
      %191 = vector.load %arg20[%c0_80, %c0_81, %c0_82, %c0_83] : memref<1x4x32x16xbf16, #tpu.memory_space<vmem>>, vector<1x4x32x16xbf16>
      %192 = vector.shape_cast %191 : vector<1x4x32x16xbf16> to vector<4x32x16xbf16>
      %193 = vector.shape_cast %188 : vector<4x32x16xbf16> to vector<1x4x32x16xbf16>
      tpu.vector_store %arg20[%c0_80, %c0_81, %c0_82, %c0_83], %193 {strides = array<i32>} : memref<1x4x32x16xbf16, #tpu.memory_space<vmem>>, vector<1x4x32x16xbf16>,
      %c0_84 = arith.constant 0 : index
      %c0_85 = arith.constant 0 : index
      %c0_86 = arith.constant 0 : index
      %194 = vector.load %arg21[%c0_84, %c0_85, %c0_86] : memref<1x16x128xbf16, #tpu.memory_space<vmem>>, vector<1x16x128xbf16>
      %195 = vector.shape_cast %194 : vector<1x16x128xbf16> to vector<16x128xbf16>
      %196 = vector.shape_cast %190 : vector<16x128xbf16> to vector<1x16x128xbf16>
      tpu.vector_store %arg21[%c0_84, %c0_85, %c0_86], %196 {strides = array<i32>} : memref<1x16x128xbf16, #tpu.memory_space<vmem>>, vector<1x16x128xbf16>,
    } else {
    }
    %c0_4 = arith.constant 0 : index
    %c0_5 = arith.constant 0 : index
    %c0_6 = arith.constant 0 : index
    %5 = vector.load %arg3[%c0_4, %c0_5, %c0_6] : memref<1x8x128xf32, #tpu.memory_space<vmem>>, vector<1x8x128xf32>
    %6 = vector.shape_cast %5 : vector<1x8x128xf32> to vector<8x128xf32>
    %cst = arith.constant dense<0.000000e+00> : vector<8xf32>
    %7 = vector.multi_reduction <add>, %6, %cst [1] : vector<8x128xf32> to vector<8xf32>
    %8 = vector.shape_cast %7 : vector<8xf32> to vector<8x1xf32>
    %cst_7 = arith.constant 1.280000e+02 : f32
    %9 = vector.broadcast %cst_7 : f32 to vector<8x1xf32>
    %10 = arith.divf %8, %9 : vector<8x1xf32>
    %11 = vector.broadcast %10 : vector<8x1xf32> to vector<8x128xf32>
    %12 = arith.subf %6, %11 : vector<8x128xf32>
    %13 = arith.mulf %12, %12 : vector<8x128xf32>
    %cst_8 = arith.constant dense<0.000000e+00> : vector<8xf32>
    %14 = vector.multi_reduction <add>, %13, %cst_8 [1] : vector<8x128xf32> to vector<8xf32>
    %15 = vector.shape_cast %14 : vector<8xf32> to vector<8x1xf32>
    %cst_9 = arith.constant 1.280000e+02 : f32
    %16 = vector.broadcast %cst_9 : f32 to vector<8x1xf32>
    %17 = arith.divf %15, %16 : vector<8x1xf32>
    %18 = vector.broadcast %10 : vector<8x1xf32> to vector<8x128xf32>
    %19 = arith.subf %6, %18 : vector<8x128xf32>
    %cst_10 = arith.constant 9.99999996E-13 : f32
    %20 = vector.broadcast %cst_10 : f32 to vector<8x1xf32>
    %21 = arith.addf %17, %20 : vector<8x1xf32>
    %22 = math.rsqrt %21 : vector<8x1xf32>
    %23 = vector.broadcast %22 : vector<8x1xf32> to vector<8x128xf32>
    %24 = arith.mulf %19, %23 : vector<8x128xf32>
    %25 = vector.broadcast %0 : vector<1x128xf32> to vector<8x128xf32>
    %26 = arith.mulf %24, %25 : vector<8x128xf32>
    %27 = vector.broadcast %1 : vector<1x128xf32> to vector<8x128xf32>
    %28 = arith.addf %26, %27 : vector<8x128xf32>
    %29 = arith.truncf %28 : vector<8x128xf32> to vector<8x128xbf16>
    %c0_11 = arith.constant 0 : index
    %c0_12 = arith.constant 0 : index
    %30 = vector.load %arg9[%c0_11, %c0_12] : memref<128x128xbf16, #tpu.memory_space<vmem>>, vector<128x128xbf16>
    %cst_13 = arith.constant dense<0.000000e+00> : vector<8x128xf32>
    %31 = tpu.matmul %29, %30, %cst_13 {dimension_numbers = #tpu.dot_dimension_numbers<[1], [0], [0], [1], [0, 0, 1, 1], [], []>} : vector<8x128xbf16>, vector<128x128xbf16>, vector<8x128xf32> -> vector<8x128xf32>
    %c0_14 = arith.constant 0 : index
    %c0_15 = arith.constant 0 : index
    %32 = vector.load %arg10[%c0_14, %c0_15] : memref<1x128xf32, #tpu.memory_space<vmem>>, vector<1x128xf32>
    %33 = vector.broadcast %32 : vector<1x128xf32> to vector<8x128xf32>
    %34 = arith.addf %31, %33 : vector<8x128xf32>
    %cst_16 = arith.constant 0.176776692 : f32
    %35 = vector.broadcast %cst_16 : f32 to vector<8x128xf32>
    %36 = arith.mulf %34, %35 : vector<8x128xf32>
    %37 = arith.truncf %36 : vector<8x128xf32> to vector<8x128xbf16>
    %38 = vector.shape_cast %37 : vector<8x128xbf16> to vector<8x4x32xbf16>
    %39 = tpu.transpose %38, [1, 0, 2] : vector<8x4x32xbf16> -> vector<4x8x32xbf16>
    %cst_17 = arith.constant -1.70141173E+38 : f32
    %40 = vector.broadcast %cst_17 : f32 to vector<4x8x1xf32>
    %cst_18 = arith.constant 0.000000e+00 : f32
    %41 = vector.broadcast %cst_18 : f32 to vector<4x8x1xf32>
    %cst_19 = arith.constant 0.000000e+00 : f32
    %42 = vector.broadcast %cst_19 : f32 to vector<4x8x32xf32>
    %cst_20 = arith.constant -1.70141173E+38 : f32
    %c0_i32_21 = arith.constant 0 : i32
    %43 = arith.index_cast %c0_i32_21 : i32 to index
    %c0_22 = arith.constant 0 : index
    %c0_23 = arith.constant 0 : index
    %c0_24 = arith.constant 0 : index
    %44 = vector.load %arg20[%43, %c0_22, %c0_23, %c0_24] : memref<1x4x32x16xbf16, #tpu.memory_space<vmem>>, vector<1x4x32x16xbf16>
    %45 = vector.shape_cast %44 : vector<1x4x32x16xbf16> to vector<4x32x16xbf16>
    %46 = arith.index_cast %c0_i32_21 : i32 to index
    %c0_25 = arith.constant 0 : index
    %c0_26 = arith.constant 0 : index
    %47 = vector.load %arg21[%46, %c0_25, %c0_26] : memref<1x16x128xbf16, #tpu.memory_space<vmem>>, vector<1x16x128xbf16>
    %48 = vector.shape_cast %47 : vector<1x16x128xbf16> to vector<16x128xbf16>
    %c0_27 = arith.constant 0 : index
    %49 = arith.index_cast %c0_i32_21 : i32 to index
    %c0_28 = arith.constant 0 : index
    %50 = vector.load %arg4[%c0_27, %49, %c0_28] : memref<1x1x16xf32, #tpu.memory_space<vmem>>, vector<1x1x16xf32>
    %cst_29 = arith.constant 0.000000e+00 : f32
    %51 = vector.broadcast %cst_29 : f32 to vector<1x1x16xf32>
    %52 = arith.cmpf ogt, %50, %51 : vector<1x1x16xf32>
    "tpu.trace_start"() <{level = 10 : i32, message = "hqd,hdt->hqt"}> : () -> ()
    %cst_30 = arith.constant dense<0.000000e+00> : vector<4x8x16xf32>
    %53 = tpu.matmul %39, %45, %cst_30 {dimension_numbers = #tpu.dot_dimension_numbers<[2], [1], [1], [2], [0, 0, 0, 1, 1, 2], [0], [0]>} : vector<4x8x32xbf16>, vector<4x32x16xbf16>, vector<4x8x16xf32> -> vector<4x8x16xf32>
    "tpu.trace_stop"() : () -> ()
    %54 = vector.shape_cast %52 : vector<1x1x16xi1> to vector<1x1x16xi1>
    %55 = vector.broadcast %54 : vector<1x1x16xi1> to vector<4x8x16xi1>
    %56 = vector.broadcast %cst_20 : f32 to vector<4x8x16xf32>
    %57 = arith.select %55, %53, %56 : vector<4x8x16xi1>, vector<4x8x16xf32>
    %cst_31 = arith.constant dense<0xFF800000> : vector<4x8xf32>
    %58 = vector.multi_reduction <maximumf>, %57, %cst_31 [2] : vector<4x8x16xf32> to vector<4x8xf32>
    %59 = vector.shape_cast %58 : vector<4x8xf32> to vector<4x8x1xf32>
    %60 = arith.maximumf %40, %59 : vector<4x8x1xf32>
    %61 = arith.subf %40, %60 : vector<4x8x1xf32>
    %62 = math.exp %61 : vector<4x8x1xf32>
    %63 = vector.broadcast %60 : vector<4x8x1xf32> to vector<4x8x16xf32>
    %64 = arith.subf %57, %63 : vector<4x8x16xf32>
    %65 = math.exp %64 : vector<4x8x16xf32>
    %cst_32 = arith.constant 0.000000e+00 : f32
    %66 = vector.shape_cast %52 : vector<1x1x16xi1> to vector<1x1x16xi1>
    %67 = vector.broadcast %66 : vector<1x1x16xi1> to vector<4x8x16xi1>
    %68 = vector.broadcast %cst_32 : f32 to vector<4x8x16xf32>
    %69 = arith.select %67, %65, %68 : vector<4x8x16xi1>, vector<4x8x16xf32>
    %70 = arith.mulf %62, %41 : vector<4x8x1xf32>
    %cst_33 = arith.constant dense<0.000000e+00> : vector<4x8xf32>
    %71 = vector.multi_reduction <add>, %69, %cst_33 [2] : vector<4x8x16xf32> to vector<4x8xf32>
    %72 = vector.shape_cast %71 : vector<4x8xf32> to vector<4x8x1xf32>
    %73 = arith.addf %70, %72 : vector<4x8x1xf32>
    %74 = arith.truncf %69 : vector<4x8x16xf32> to vector<4x8x16xbf16>
    %75 = vector.extract_strided_slice %74 {offsets = [0, 0, 0], sizes = [1, 8, 16], strides = [1, 1, 1]} : vector<4x8x16xbf16> to vector<1x8x16xbf16>
    %76 = vector.shape_cast %75 : vector<1x8x16xbf16> to vector<8x16xbf16>
    %77 = vector.extract_strided_slice %48 {offsets = [0, 0], sizes = [16, 32], strides = [1, 1]} : vector<16x128xbf16> to vector<16x32xbf16>
    %cst_34 = arith.constant dense<0.000000e+00> : vector<8x32xf32>
    %78 = tpu.matmul %76, %77, %cst_34 {dimension_numbers = #tpu.dot_dimension_numbers<[1], [0], [0], [1], [0, 0, 1, 1], [], []>} : vector<8x16xbf16>, vector<16x32xbf16>, vector<8x32xf32> -> vector<8x32xf32>
    %79 = vector.extract_strided_slice %74 {offsets = [1, 0, 0], sizes = [1, 8, 16], strides = [1, 1, 1]} : vector<4x8x16xbf16> to vector<1x8x16xbf16>
    %80 = vector.shape_cast %79 : vector<1x8x16xbf16> to vector<8x16xbf16>
    %81 = vector.extract_strided_slice %48 {offsets = [0, 32], sizes = [16, 32], strides = [1, 1]} : vector<16x128xbf16> to vector<16x32xbf16>
    %cst_35 = arith.constant dense<0.000000e+00> : vector<8x32xf32>
    %82 = tpu.matmul %80, %81, %cst_35 {dimension_numbers = #tpu.dot_dimension_numbers<[1], [0], [0], [1], [0, 0, 1, 1], [], []>} : vector<8x16xbf16>, vector<16x32xbf16>, vector<8x32xf32> -> vector<8x32xf32>
    %83 = vector.extract_strided_slice %74 {offsets = [2, 0, 0], sizes = [1, 8, 16], strides = [1, 1, 1]} : vector<4x8x16xbf16> to vector<1x8x16xbf16>
    %84 = vector.shape_cast %83 : vector<1x8x16xbf16> to vector<8x16xbf16>
    %85 = vector.extract_strided_slice %48 {offsets = [0, 64], sizes = [16, 32], strides = [1, 1]} : vector<16x128xbf16> to vector<16x32xbf16>
    %cst_36 = arith.constant dense<0.000000e+00> : vector<8x32xf32>
    %86 = tpu.matmul %84, %85, %cst_36 {dimension_numbers = #tpu.dot_dimension_numbers<[1], [0], [0], [1], [0, 0, 1, 1], [], []>} : vector<8x16xbf16>, vector<16x32xbf16>, vector<8x32xf32> -> vector<8x32xf32>
    %87 = vector.extract_strided_slice %74 {offsets = [3, 0, 0], sizes = [1, 8, 16], strides = [1, 1, 1]} : vector<4x8x16xbf16> to vector<1x8x16xbf16>
    %88 = vector.shape_cast %87 : vector<1x8x16xbf16> to vector<8x16xbf16>
    %89 = vector.extract_strided_slice %48 {offsets = [0, 96], sizes = [16, 32], strides = [1, 1]} : vector<16x128xbf16> to vector<16x32xbf16>
    %cst_37 = arith.constant dense<0.000000e+00> : vector<8x32xf32>
    %90 = tpu.matmul %88, %89, %cst_37 {dimension_numbers = #tpu.dot_dimension_numbers<[1], [0], [0], [1], [0, 0, 1, 1], [], []>} : vector<8x16xbf16>, vector<16x32xbf16>, vector<8x32xf32> -> vector<8x32xf32>
    %91 = vector.shape_cast %78 : vector<8x32xf32> to vector<1x8x32xf32>
    %92 = vector.shape_cast %82 : vector<8x32xf32> to vector<1x8x32xf32>
    %93 = vector.shape_cast %86 : vector<8x32xf32> to vector<1x8x32xf32>
    %94 = vector.shape_cast %90 : vector<8x32xf32> to vector<1x8x32xf32>
    %95 = tpu.concatenate %91, %92, %93, %94 in 0 : vector<1x8x32xf32>, vector<1x8x32xf32>, vector<1x8x32xf32>, vector<1x8x32xf32> -> vector<4x8x32xf32>
    %96 = vector.broadcast %62 : vector<4x8x1xf32> to vector<4x8x32xf32>
    %97 = arith.mulf %96, %42 : vector<4x8x32xf32>
    %98 = arith.addf %97, %95 : vector<4x8x32xf32>
    %c1_i32 = arith.constant 1 : i32
    %cst_38 = arith.constant 1.000000e-30 : f32
    %99 = vector.broadcast %cst_38 : f32 to vector<4x8x1xf32>
    %100 = arith.maximumf %73, %99 : vector<4x8x1xf32>
    %101 = tpu.reciprocal %100 {approx = true} : vector<4x8x1xf32> -> vector<4x8x1xf32>
    %102 = vector.broadcast %101 : vector<4x8x1xf32> to vector<4x8x32xf32>
    %103 = arith.mulf %98, %102 : vector<4x8x32xf32>
    %104 = tpu.transpose %103, [1, 0, 2] : vector<4x8x32xf32> -> vector<8x4x32xf32>
    %105 = vector.shape_cast %104 : vector<8x4x32xf32> to vector<8x128xf32>
    %106 = arith.truncf %105 : vector<8x128xf32> to vector<8x128xbf16>
    %c0_39 = arith.constant 0 : index
    %c0_40 = arith.constant 0 : index
    %107 = vector.load %arg13[%c0_39, %c0_40] : memref<128x128xbf16, #tpu.memory_space<vmem>>, vector<128x128xbf16>
    %cst_41 = arith.constant dense<0.000000e+00> : vector<8x128xf32>
    %108 = tpu.matmul %106, %107, %cst_41 {dimension_numbers = #tpu.dot_dimension_numbers<[1], [0], [0], [1], [0, 0, 1, 1], [], []>} : vector<8x128xbf16>, vector<128x128xbf16>, vector<8x128xf32> -> vector<8x128xf32>
    %c0_42 = arith.constant 0 : index
    %c0_43 = arith.constant 0 : index
    %109 = vector.load %arg14[%c0_42, %c0_43] : memref<1x128xf32, #tpu.memory_space<vmem>>, vector<1x128xf32>
    %110 = vector.broadcast %109 : vector<1x128xf32> to vector<8x128xf32>
    %111 = arith.addf %108, %110 : vector<8x128xf32>
    %112 = arith.addf %6, %111 : vector<8x128xf32>
    %c0_44 = arith.constant 0 : index
    %c0_45 = arith.constant 0 : index
    %113 = vector.load %arg7[%c0_44, %c0_45] : memref<1x128xf32, #tpu.memory_space<vmem>>, vector<1x128xf32>
    %c0_46 = arith.constant 0 : index
    %c0_47 = arith.constant 0 : index
    %114 = vector.load %arg8[%c0_46, %c0_47] : memref<1x128xf32, #tpu.memory_space<vmem>>, vector<1x128xf32>
    %cst_48 = arith.constant dense<0.000000e+00> : vector<8xf32>
    %115 = vector.multi_reduction <add>, %112, %cst_48 [1] : vector<8x128xf32> to vector<8xf32>
    %116 = vector.shape_cast %115 : vector<8xf32> to vector<8x1xf32>
    %cst_49 = arith.constant 1.280000e+02 : f32
    %117 = vector.broadcast %cst_49 : f32 to vector<8x1xf32>
    %118 = arith.divf %116, %117 : vector<8x1xf32>
    %119 = vector.broadcast %118 : vector<8x1xf32> to vector<8x128xf32>
    %120 = arith.subf %112, %119 : vector<8x128xf32>
    %121 = arith.mulf %120, %120 : vector<8x128xf32>
    %cst_50 = arith.constant dense<0.000000e+00> : vector<8xf32>
    %122 = vector.multi_reduction <add>, %121, %cst_50 [1] : vector<8x128xf32> to vector<8xf32>
    %123 = vector.shape_cast %122 : vector<8xf32> to vector<8x1xf32>
    %cst_51 = arith.constant 1.280000e+02 : f32
    %124 = vector.broadcast %cst_51 : f32 to vector<8x1xf32>
    %125 = arith.divf %123, %124 : vector<8x1xf32>
    %126 = vector.broadcast %118 : vector<8x1xf32> to vector<8x128xf32>
    %127 = arith.subf %112, %126 : vector<8x128xf32>
    %cst_52 = arith.constant 9.99999996E-13 : f32
    %128 = vector.broadcast %cst_52 : f32 to vector<8x1xf32>
    %129 = arith.addf %125, %128 : vector<8x1xf32>
    %130 = math.rsqrt %129 : vector<8x1xf32>
    %131 = vector.broadcast %130 : vector<8x1xf32> to vector<8x128xf32>
    %132 = arith.mulf %127, %131 : vector<8x128xf32>
    %133 = vector.broadcast %113 : vector<1x128xf32> to vector<8x128xf32>
    %134 = arith.mulf %132, %133 : vector<8x128xf32>
    %135 = vector.broadcast %114 : vector<1x128xf32> to vector<8x128xf32>
    %136 = arith.addf %134, %135 : vector<8x128xf32>
    %137 = arith.truncf %136 : vector<8x128xf32> to vector<8x128xbf16>
    %c0_53 = arith.constant 0 : index
    %c0_54 = arith.constant 0 : index
    %138 = vector.load %arg15[%c0_53, %c0_54] : memref<128x256xbf16, #tpu.memory_space<vmem>>, vector<128x256xbf16>
    %cst_55 = arith.constant dense<0.000000e+00> : vector<8x256xf32>
    %139 = tpu.matmul %137, %138, %cst_55 {dimension_numbers = #tpu.dot_dimension_numbers<[1], [0], [0], [1], [0, 0, 1, 1], [], []>} : vector<8x128xbf16>, vector<128x256xbf16>, vector<8x256xf32> -> vector<8x256xf32>
    %c0_56 = arith.constant 0 : index
    %c0_57 = arith.constant 0 : index
    %140 = vector.load %arg16[%c0_56, %c0_57] : memref<1x256xf32, #tpu.memory_space<vmem>>, vector<1x256xf32>
    %141 = vector.broadcast %140 : vector<1x256xf32> to vector<8x256xf32>
    %142 = arith.addf %139, %141 : vector<8x256xf32>
    %cst_58 = arith.constant 0.000000e+00 : f32
    %143 = vector.broadcast %cst_58 : f32 to vector<8x256xf32>
    %144 = arith.maximumf %142, %143 : vector<8x256xf32>
    %145 = arith.truncf %144 : vector<8x256xf32> to vector<8x256xbf16>
    %c0_59 = arith.constant 0 : index
    %c0_60 = arith.constant 0 : index
    %146 = vector.load %arg17[%c0_59, %c0_60] : memref<256x128xbf16, #tpu.memory_space<vmem>>, vector<256x128xbf16>
    %cst_61 = arith.constant dense<0.000000e+00> : vector<8x128xf32>
    %147 = tpu.matmul %145, %146, %cst_61 {dimension_numbers = #tpu.dot_dimension_numbers<[1], [0], [0], [1], [0, 0, 1, 1], [], []>} : vector<8x256xbf16>, vector<256x128xbf16>, vector<8x128xf32> -> vector<8x128xf32>
    %c0_62 = arith.constant 0 : index
    %c0_63 = arith.constant 0 : index
    %148 = vector.load %arg18[%c0_62, %c0_63] : memref<1x128xf32, #tpu.memory_space<vmem>>, vector<1x128xf32>
    %149 = vector.broadcast %148 : vector<1x128xf32> to vector<8x128xf32>
    %150 = arith.addf %147, %149 : vector<8x128xf32>
    %151 = arith.addf %112, %150 : vector<8x128xf32>
    %c0_64 = arith.constant 0 : index
    %c0_65 = arith.constant 0 : index
    %c0_66 = arith.constant 0 : index
    %152 = vector.load %arg19[%c0_64, %c0_65, %c0_66] : memref<1x8x128xf32, #tpu.memory_space<vmem>>, vector<1x8x128xf32>
    %153 = vector.shape_cast %152 : vector<1x8x128xf32> to vector<8x128xf32>
    %154 = vector.shape_cast %151 : vector<8x128xf32> to vector<1x8x128xf32>
    tpu.vector_store %arg19[%c0_64, %c0_65, %c0_66], %154 {strides = array<i32>} : memref<1x8x128xf32, #tpu.memory_space<vmem>>, vector<1x8x128xf32>,
    return
  }
  func.func @transform_0(%arg0: i32, %arg1: i32) -> (i32, i32, i32) {
    %c0_i32 = arith.constant 0 : i32
    %c0_i32_0 = arith.constant 0 : i32
    %c0_i32_1 = arith.constant 0 : i32
    return %arg0, %c0_i32, %c0_i32_0 : i32, i32, i32
  }
  func.func @transform_1(%arg0: i32, %arg1: i32) -> (i32, i32, i32) {
    %c0_i32 = arith.constant 0 : i32
    %c0_i32_0 = arith.constant 0 : i32
    return %arg0, %arg1, %c0_i32 : i32, i32, i32
  }
  func.func @transform_2(%arg0: i32, %arg1: i32) -> (i32, i32, i32) {
    %c0_i32 = arith.constant 0 : i32
    %c0_i32_0 = arith.constant 0 : i32
    %c0_i32_1 = arith.constant 0 : i32
    return %arg0, %c0_i32, %c0_i32_0 : i32, i32, i32
  }
  func.func @transform_3(%arg0: i32, %arg1: i32) -> (i32, i32) {
    %c0_i32 = arith.constant 0 : i32
    %c0_i32_0 = arith.constant 0 : i32
    %c0_i32_1 = arith.constant 0 : i32
    return %c0_i32, %c0_i32_0 : i32, i32
  }
  func.func @transform_4(%arg0: i32, %arg1: i32) -> (i32, i32) {
    %c0_i32 = arith.constant 0 : i32
    %c0_i32_0 = arith.constant 0 : i32
    %c0_i32_1 = arith.constant 0 : i32
    return %c0_i32, %c0_i32_0 : i32, i32
  }
  func.func @transform_5(%arg0: i32, %arg1: i32) -> (i32, i32) {
    %c0_i32 = arith.constant 0 : i32
    %c0_i32_0 = arith.constant 0 : i32
    %c0_i32_1 = arith.constant 0 : i32
    return %c0_i32, %c0_i32_0 : i32, i32
  }
  func.func @transform_6(%arg0: i32, %arg1: i32) -> (i32, i32) {
    %c0_i32 = arith.constant 0 : i32
    %c0_i32_0 = arith.constant 0 : i32
    %c0_i32_1 = arith.constant 0 : i32
    return %c0_i32, %c0_i32_0 : i32, i32
  }
  func.func @transform_7(%arg0: i32, %arg1: i32) -> (i32, i32) {
    %c0_i32 = arith.constant 0 : i32
    %c0_i32_0 = arith.constant 0 : i32
    %c0_i32_1 = arith.constant 0 : i32
    return %c0_i32, %c0_i32_0 : i32, i32
  }
  func.func @transform_8(%arg0: i32, %arg1: i32) -> (i32, i32) {
    %c0_i32 = arith.constant 0 : i32
    %c0_i32_0 = arith.constant 0 : i32
    %c0_i32_1 = arith.constant 0 : i32
    return %c0_i32, %c0_i32_0 : i32, i32
  }
  func.func @transform_9(%arg0: i32, %arg1: i32) -> (i32, i32) {
    %c0_i32 = arith.constant 0 : i32
    %c0_i32_0 = arith.constant 0 : i32
    %c0_i32_1 = arith.constant 0 : i32
    return %c0_i32, %c0_i32_0 : i32, i32
  }
  func.func @transform_10(%arg0: i32, %arg1: i32) -> (i32, i32) {
    %c0_i32 = arith.constant 0 : i32
    %c0_i32_0 = arith.constant 0 : i32
    %c0_i32_1 = arith.constant 0 : i32
    return %c0_i32, %c0_i32_0 : i32, i32
  }
  func.func @transform_11(%arg0: i32, %arg1: i32) -> (i32, i32) {
    %c0_i32 = arith.constant 0 : i32
    %c0_i32_0 = arith.constant 0 : i32
    %c0_i32_1 = arith.constant 0 : i32
    return %c0_i32, %c0_i32_0 : i32, i32
  }
  func.func @transform_12(%arg0: i32, %arg1: i32) -> (i32, i32) {
    %c0_i32 = arith.constant 0 : i32
    %c0_i32_0 = arith.constant 0 : i32
    %c0_i32_1 = arith.constant 0 : i32
    return %c0_i32, %c0_i32_0 : i32, i32
  }
  func.func @transform_13(%arg0: i32, %arg1: i32) -> (i32, i32) {
    %c0_i32 = arith.constant 0 : i32
    %c0_i32_0 = arith.constant 0 : i32
    %c0_i32_1 = arith.constant 0 : i32
    return %c0_i32, %c0_i32_0 : i32, i32
  }
  func.func @transform_14(%arg0: i32, %arg1: i32) -> (i32, i32) {
    %c0_i32 = arith.constant 0 : i32
    %c0_i32_0 = arith.constant 0 : i32
    %c0_i32_1 = arith.constant 0 : i32
    return %c0_i32, %c0_i32_0 : i32, i32
  }
  func.func @transform_15(%arg0: i32, %arg1: i32) -> (i32, i32) {
    %c0_i32 = arith.constant 0 : i32
    %c0_i32_0 = arith.constant 0 : i32
    %c0_i32_1 = arith.constant 0 : i32
    return %c0_i32, %c0_i32_0 : i32, i32
  }
  func.func @transform_16(%arg0: i32, %arg1: i32) -> (i32, i32) {
    %c0_i32 = arith.constant 0 : i32
    %c0_i32_0 = arith.constant 0 : i32
    %c0_i32_1 = arith.constant 0 : i32
    return %c0_i32, %c0_i32_0 : i32, i32
  }
  func.func @transform_17(%arg0: i32, %arg1: i32) -> (i32, i32, i32) {
    %c0_i32 = arith.constant 0 : i32
    %c0_i32_0 = arith.constant 0 : i32
    return %arg0, %arg1, %c0_i32 : i32, i32, i32
  }
}

module attributes {stable_mosaic.version = 11 : i64} {
  func.func @_encoder_layer_kernel(%arg0: i32, %arg1: i32, %arg2: memref<1x16x128xf32, #tpu.memory_space<vmem>>, %arg3: memref<1x8x128xf32, #tpu.memory_space<vmem>>, %arg4: memref<1x1x16xf32, #tpu.memory_space<vmem>>, %arg5: memref<1x128xf32, #tpu.memory_space<vmem>>, %arg6: memref<1x128xf32, #tpu.memory_space<vmem>>, %arg7: memref<1x128xf32, #tpu.memory_space<vmem>>, %arg8: memref<1x128xf32, #tpu.memory_space<vmem>>, %arg9: memref<128x128xbf16, #tpu.memory_space<vmem>>, %arg10: memref<1x128xf32, #tpu.memory_space<vmem>>, %arg11: memref<128x256xbf16, #tpu.memory_space<vmem>>, %arg12: memref<1x256xf32, #tpu.memory_space<vmem>>, %arg13: memref<128x128xbf16, #tpu.memory_space<vmem>>, %arg14: memref<1x128xf32, #tpu.memory_space<vmem>>, %arg15: memref<128x256xbf16, #tpu.memory_space<vmem>>, %arg16: memref<1x256xf32, #tpu.memory_space<vmem>>, %arg17: memref<256x128xbf16, #tpu.memory_space<vmem>>, %arg18: memref<1x128xf32, #tpu.memory_space<vmem>>, %arg19: memref<1x8x128xf32, #tpu.memory_space<vmem>>, %arg20: memref<1x4x32x16xbf16, #tpu.memory_space<vmem>>, %arg21: memref<1x16x128xbf16, #tpu.memory_space<vmem>>) attributes {dimension_semantics = [#tpu.dimension_semantics<parallel>, #tpu.dimension_semantics<arbitrary>], iteration_bounds = array<i64: 2, 2>, scalar_prefetch = 0 : i64, scratch_operands = 2 : i64, tpu.core_type = #tpu.core_type<tc>, window_params = [{transform_indices = @transform_0, window_bounds = array<i64: 1, 16, 128>}, {transform_indices = @transform_1, window_bounds = array<i64: 1, 8, 128>}, {transform_indices = @transform_2, window_bounds = array<i64: 1, 1, 16>}, {pipeline_mode = #tpu.pipeline_mode<synchronous>, transform_indices = @transform_3, window_bounds = array<i64: 1, 128>}, {pipeline_mode = #tpu.pipeline_mode<synchronous>, transform_indices = @transform_4, window_bounds = array<i64: 1, 128>}, {pipeline_mode = #tpu.pipeline_mode<synchronous>, transform_indices = @transform_5, window_bounds = array<i64: 1, 128>}, {pipeline_mode = #tpu.pipeline_mode<synchronous>, transform_indices = @transform_6, window_bounds = array<i64: 1, 128>}, {pipeline_mode = #tpu.pipeline_mode<synchronous>, transform_indices = @transform_7, window_bounds = array<i64: 128, 128>}, {pipeline_mode = #tpu.pipeline_mode<synchronous>, transform_indices = @transform_8, window_bounds = array<i64: 1, 128>}, {pipeline_mode = #tpu.pipeline_mode<synchronous>, transform_indices = @transform_9, window_bounds = array<i64: 128, 256>}, {pipeline_mode = #tpu.pipeline_mode<synchronous>, transform_indices = @transform_10, window_bounds = array<i64: 1, 256>}, {pipeline_mode = #tpu.pipeline_mode<synchronous>, transform_indices = @transform_11, window_bounds = array<i64: 128, 128>}, {pipeline_mode = #tpu.pipeline_mode<synchronous>, transform_indices = @transform_12, window_bounds = array<i64: 1, 128>}, {pipeline_mode = #tpu.pipeline_mode<synchronous>, transform_indices = @transform_13, window_bounds = array<i64: 128, 256>}, {pipeline_mode = #tpu.pipeline_mode<synchronous>, transform_indices = @transform_14, window_bounds = array<i64: 1, 256>}, {pipeline_mode = #tpu.pipeline_mode<synchronous>, transform_indices = @transform_15, window_bounds = array<i64: 256, 128>}, {pipeline_mode = #tpu.pipeline_mode<synchronous>, transform_indices = @transform_16, window_bounds = array<i64: 1, 128>}, {transform_indices = @transform_17, window_bounds = array<i64: 1, 8, 128>}]} {
    %c0 = arith.constant 0 : index
    %c0_0 = arith.constant 0 : index
    %0 = vector.load %arg5[%c0, %c0_0] : memref<1x128xf32, #tpu.memory_space<vmem>>, vector<1x128xf32>
    %c0_1 = arith.constant 0 : index
    %c0_2 = arith.constant 0 : index
    %1 = vector.load %arg6[%c0_1, %c0_2] : memref<1x128xf32, #tpu.memory_space<vmem>>, vector<1x128xf32>
    %c0_i32 = arith.constant 0 : i32
    %2 = arith.cmpi eq, %arg1, %c0_i32 : i32
    %3 = arith.extui %2 : i1 to i32
    %c0_i32_3 = arith.constant 0 : i32
    %4 = arith.cmpi ne, %3, %c0_i32_3 : i32
    scf.if %4 {
      %c0_67 = arith.constant 0 : index
      %c0_68 = arith.constant 0 : index
      %c0_69 = arith.constant 0 : index
      %155 = vector.load %arg2[%c0_67, %c0_68, %c0_69] : memref<1x16x128xf32, #tpu.memory_space<vmem>>, vector<1x16x128xf32>
      %156 = vector.shape_cast %155 : vector<1x16x128xf32> to vector<16x128xf32>
      %cst_70 = arith.constant dense<0.000000e+00> : vector<16xf32>
      %157 = vector.multi_reduction <add>, %156, %cst_70 [1] : vector<16x128xf32> to vector<16xf32>
      %158 = vector.shape_cast %157 : vector<16xf32> to vector<16x1xf32>
      %cst_71 = arith.constant 1.280000e+02 : f32
      %159 = vector.broadcast %cst_71 : f32 to vector<16x1xf32>
      %160 = arith.divf %158, %159 : vector<16x1xf32>
      %161 = vector.broadcast %160 : vector<16x1xf32> to vector<16x128xf32>
      %162 = arith.subf %156, %161 : vector<16x128xf32>
      %163 = arith.mulf %162, %162 : vector<16x128xf32>
      %cst_72 = arith.constant dense<0.000000e+00> : vector<16xf32>
      %164 = vector.multi_reduction <add>, %163, %cst_72 [1] : vector<16x128xf32> to vector<16xf32>
      %165 = vector.shape_cast %164 : vector<16xf32> to vector<16x1xf32>
      %cst_73 = arith.constant 1.280000e+02 : f32
      %166 = vector.broadcast %cst_73 : f32 to vector<16x1xf32>
      %167 = arith.divf %165, %166 : vector<16x1xf32>
      %168 = vector.broadcast %160 : vector<16x1xf32> to vector<16x128xf32>
      %169 = arith.subf %156, %168 : vector<16x128xf32>
      %cst_74 = arith.constant 9.99999996E-13 : f32
      %170 = vector.broadcast %cst_74 : f32 to vector<16x1xf32>
      %171 = arith.addf %167, %170 : vector<16x1xf32>
      %172 = math.rsqrt %171 : vector<16x1xf32>
      %173 = vector.broadcast %172 : vector<16x1xf32> to vector<16x128xf32>
      %174 = arith.mulf %169, %173 : vector<16x128xf32>
      %175 = vector.broadcast %0 : vector<1x128xf32> to vector<16x128xf32>
      %176 = arith.mulf %174, %175 : vector<16x128xf32>
      %177 = vector.broadcast %1 : vector<1x128xf32> to vector<16x128xf32>
      %178 = arith.addf %176, %177 : vector<16x128xf32>
      %179 = arith.truncf %178 : vector<16x128xf32> to vector<16x128xbf16>
      %c0_75 = arith.constant 0 : index
      %c0_76 = arith.constant 0 : index
      %180 = vector.load %arg11[%c0_75, %c0_76] : memref<128x256xbf16, #tpu.memory_space<vmem>>, vector<128x256xbf16>
      %cst_77 = arith.constant dense<0.000000e+00> : vector<16x256xf32>
      %181 = tpu.matmul %179, %180, %cst_77 {dimension_numbers = #tpu.dot_dimension_numbers<[1], [0], [0], [1], [0, 0, 1, 1], [], []>} : vector<16x128xbf16>, vector<128x256xbf16>, vector<16x256xf32> -> vector<16x256xf32>
      %c0_78 = arith.constant 0 : index
      %c0_79 = arith.constant 0 : index
      %182 = vector.load %arg12[%c0_78, %c0_79] : memref<1x256xf32, #tpu.memory_space<vmem>>, vector<1x256xf32>
      %183 = vector.broadcast %182 : vector<1x256xf32> to vector<16x256xf32>
      %184 = arith.addf %181, %183 : vector<16x256xf32>
      %185 = vector.extract_strided_slice %184 {offsets = [0, 0], sizes = [16, 128], strides = [1, 1]} : vector<16x256xf32> to vector<16x128xf32>
      %186 = tpu.transpose %185, [1, 0] : vector<16x128xf32> -> vector<128x16xf32>
      %187 = vector.shape_cast %186 : vector<128x16xf32> to vector<4x32x16xf32>
      %188 = arith.truncf %187 : vector<4x32x16xf32> to vector<4x32x16xbf16>
      %189 = vector.extract_strided_slice %184 {offsets = [0, 128], sizes = [16, 128], strides = [1, 1]} : vector<16x256xf32> to vector<16x128xf32>
      %190 = arith.truncf %189 : vector<16x128xf32> to vector<16x128xbf16>
      %c0_80 = arith.constant 0 : index
      %c0_81 = arith.constant 0 : index
      %c0_82 = arith.constant 0 : index
      %c0_83 = arith.constant 0 : index
      %191 = vector.load %arg20[%c0_80, %c0_81, %c0_82, %c0_83] : memref<1x4x32x16xbf16, #tpu.memory_space<vmem>>, vector<1x4x32x16xbf16>
      %192 = vector.shape_cast %191 : vector<1x4x32x16xbf16> to vector<4x32x16xbf16>
      %193 = vector.shape_cast %188 : vector<4x32x16xbf16> to vector<1x4x32x16xbf16>
      tpu.vector_store %arg20[%c0_80, %c0_81, %c0_82, %c0_83], %193 {strides = array<i32>} : memref<1x4x32x16xbf16, #tpu.memory_space<vmem>>, vector<1x4x32x16xbf16>,
      %c0_84 = arith.constant 0 : index
      %c0_85 = arith.constant 0 : index
      %c0_86 = arith.constant 0 : index
      %194 = vector.load %arg21[%c0_84, %c0_85, %c0_86] : memref<1x16x128xbf16, #tpu.memory_space<vmem>>, vector<1x16x128xbf16>
      %195 = vector.shape_cast %194 : vector<1x16x128xbf16> to vector<16x128xbf16>
      %196 = vector.shape_cast %190 : vector<16x128xbf16> to vector<1x16x128xbf16>
      tpu.vector_store %arg21[%c0_84, %c0_85, %c0_86], %196 {strides = array<i32>} : memref<1x16x128xbf16, #tpu.memory_space<vmem>>, vector<1x16x128xbf16>,
    } else {
    }
    %c0_4 = arith.constant 0 : index
    %c0_5 = arith.constant 0 : index
    %c0_6 = arith.constant 0 : index
    %5 = vector.load %arg3[%c0_4, %c0_5, %c0_6] : memref<1x8x128xf32, #tpu.memory_space<vmem>>, vector<1x8x128xf32>
    %6 = vector.shape_cast %5 : vector<1x8x128xf32> to vector<8x128xf32>
    %cst = arith.constant dense<0.000000e+00> : vector<8xf32>
    %7 = vector.multi_reduction <add>, %6, %cst [1] : vector<8x128xf32> to vector<8xf32>
    %8 = vector.shape_cast %7 : vector<8xf32> to vector<8x1xf32>
    %cst_7 = arith.constant 1.280000e+02 : f32
    %9 = vector.broadcast %cst_7 : f32 to vector<8x1xf32>
    %10 = arith.divf %8, %9 : vector<8x1xf32>
    %11 = vector.broadcast %10 : vector<8x1xf32> to vector<8x128xf32>
    %12 = arith.subf %6, %11 : vector<8x128xf32>
    %13 = arith.mulf %12, %12 : vector<8x128xf32>
    %cst_8 = arith.constant dense<0.000000e+00> : vector<8xf32>
    %14 = vector.multi_reduction <add>, %13, %cst_8 [1] : vector<8x128xf32> to vector<8xf32>
    %15 = vector.shape_cast %14 : vector<8xf32> to vector<8x1xf32>
    %cst_9 = arith.constant 1.280000e+02 : f32
    %16 = vector.broadcast %cst_9 : f32 to vector<8x1xf32>
    %17 = arith.divf %15, %16 : vector<8x1xf32>
    %18 = vector.broadcast %10 : vector<8x1xf32> to vector<8x128xf32>
    %19 = arith.subf %6, %18 : vector<8x128xf32>
    %cst_10 = arith.constant 9.99999996E-13 : f32
    %20 = vector.broadcast %cst_10 : f32 to vector<8x1xf32>
    %21 = arith.addf %17, %20 : vector<8x1xf32>
    %22 = math.rsqrt %21 : vector<8x1xf32>
    %23 = vector.broadcast %22 : vector<8x1xf32> to vector<8x128xf32>
    %24 = arith.mulf %19, %23 : vector<8x128xf32>
    %25 = vector.broadcast %0 : vector<1x128xf32> to vector<8x128xf32>
    %26 = arith.mulf %24, %25 : vector<8x128xf32>
    %27 = vector.broadcast %1 : vector<1x128xf32> to vector<8x128xf32>
    %28 = arith.addf %26, %27 : vector<8x128xf32>
    %29 = arith.truncf %28 : vector<8x128xf32> to vector<8x128xbf16>
    %c0_11 = arith.constant 0 : index
    %c0_12 = arith.constant 0 : index
    %30 = vector.load %arg9[%c0_11, %c0_12] : memref<128x128xbf16, #tpu.memory_space<vmem>>, vector<128x128xbf16>
    %cst_13 = arith.constant dense<0.000000e+00> : vector<8x128xf32>
    %31 = tpu.matmul %29, %30, %cst_13 {dimension_numbers = #tpu.dot_dimension_numbers<[1], [0], [0], [1], [0, 0, 1, 1], [], []>} : vector<8x128xbf16>, vector<128x128xbf16>, vector<8x128xf32> -> vector<8x128xf32>
    %c0_14 = arith.constant 0 : index
    %c0_15 = arith.constant 0 : index
    %32 = vector.load %arg10[%c0_14, %c0_15] : memref<1x128xf32, #tpu.memory_space<vmem>>, vector<1x128xf32>
    %33 = vector.broadcast %32 : vector<1x128xf32> to vector<8x128xf32>
    %34 = arith.addf %31, %33 : vector<8x128xf32>
    %cst_16 = arith.constant 0.176776692 : f32
    %35 = vector.broadcast %cst_16 : f32 to vector<8x128xf32>
    %36 = arith.mulf %34, %35 : vector<8x128xf32>
    %37 = arith.truncf %36 : vector<8x128xf32> to vector<8x128xbf16>
    %38 = vector.shape_cast %37 : vector<8x128xbf16> to vector<8x4x32xbf16>
    %39 = tpu.transpose %38, [1, 0, 2] : vector<8x4x32xbf16> -> vector<4x8x32xbf16>
    %cst_17 = arith.constant -1.70141173E+38 : f32
    %40 = vector.broadcast %cst_17 : f32 to vector<4x8x1xf32>
    %cst_18 = arith.constant 0.000000e+00 : f32
    %41 = vector.broadcast %cst_18 : f32 to vector<4x8x1xf32>
    %cst_19 = arith.constant 0.000000e+00 : f32
    %42 = vector.broadcast %cst_19 : f32 to vector<4x8x32xf32>
    %cst_20 = arith.constant -1.70141173E+38 : f32
    %c0_i32_21 = arith.constant 0 : i32
    %43 = arith.index_cast %c0_i32_21 : i32 to index
    %c0_22 = arith.constant 0 : index
    %c0_23 = arith.constant 0 : index
    %c0_24 = arith.constant 0 : index
    %44 = vector.load %arg20[%43, %c0_22, %c0_23, %c0_24] : memref<1x4x32x16xbf16, #tpu.memory_space<vmem>>, vector<1x4x32x16xbf16>
    %45 = vector.shape_cast %44 : vector<1x4x32x16xbf16> to vector<4x32x16xbf16>
    %46 = arith.index_cast %c0_i32_21 : i32 to index
    %c0_25 = arith.constant 0 : index
    %c0_26 = arith.constant 0 : index
    %47 = vector.load %arg21[%46, %c0_25, %c0_26] : memref<1x16x128xbf16, #tpu.memory_space<vmem>>, vector<1x16x128xbf16>
    %48 = vector.shape_cast %47 : vector<1x16x128xbf16> to vector<16x128xbf16>
    %c0_27 = arith.constant 0 : index
    %49 = arith.index_cast %c0_i32_21 : i32 to index
    %c0_28 = arith.constant 0 : index
    %50 = vector.load %arg4[%c0_27, %49, %c0_28] : memref<1x1x16xf32, #tpu.memory_space<vmem>>, vector<1x1x16xf32>
    %cst_29 = arith.constant 0.000000e+00 : f32
    %51 = vector.broadcast %cst_29 : f32 to vector<1x1x16xf32>
    %52 = arith.cmpf ogt, %50, %51 : vector<1x1x16xf32>
    "tpu.trace_start"() <{level = 10 : i32, message = "hqd,hdt->hqt"}> : () -> ()
    %cst_30 = arith.constant dense<0.000000e+00> : vector<4x8x16xf32>
    %53 = tpu.matmul %39, %45, %cst_30 {dimension_numbers = #tpu.dot_dimension_numbers<[2], [1], [1], [2], [0, 0, 0, 1, 1, 2], [0], [0]>} : vector<4x8x32xbf16>, vector<4x32x16xbf16>, vector<4x8x16xf32> -> vector<4x8x16xf32>
    "tpu.trace_stop"() : () -> ()
    %54 = vector.shape_cast %52 : vector<1x1x16xi1> to vector<1x1x16xi1>
    %55 = vector.broadcast %54 : vector<1x1x16xi1> to vector<4x8x16xi1>
    %56 = vector.broadcast %cst_20 : f32 to vector<4x8x16xf32>
    %57 = arith.select %55, %53, %56 : vector<4x8x16xi1>, vector<4x8x16xf32>
    %cst_31 = arith.constant dense<0xFF800000> : vector<4x8xf32>
    %58 = vector.multi_reduction <maximumf>, %57, %cst_31 [2] : vector<4x8x16xf32> to vector<4x8xf32>
    %59 = vector.shape_cast %58 : vector<4x8xf32> to vector<4x8x1xf32>
    %60 = arith.maximumf %40, %59 : vector<4x8x1xf32>
    %61 = arith.subf %40, %60 : vector<4x8x1xf32>
    %62 = math.exp %61 : vector<4x8x1xf32>
    %63 = vector.broadcast %60 : vector<4x8x1xf32> to vector<4x8x16xf32>
    %64 = arith.subf %57, %63 : vector<4x8x16xf32>
    %65 = math.exp %64 : vector<4x8x16xf32>
    %cst_32 = arith.constant 0.000000e+00 : f32
    %66 = vector.shape_cast %52 : vector<1x1x16xi1> to vector<1x1x16xi1>
    %67 = vector.broadcast %66 : vector<1x1x16xi1> to vector<4x8x16xi1>
    %68 = vector.broadcast %cst_32 : f32 to vector<4x8x16xf32>
    %69 = arith.select %67, %65, %68 : vector<4x8x16xi1>, vector<4x8x16xf32>
    %70 = arith.mulf %62, %41 : vector<4x8x1xf32>
    %cst_33 = arith.constant dense<0.000000e+00> : vector<4x8xf32>
    %71 = vector.multi_reduction <add>, %69, %cst_33 [2] : vector<4x8x16xf32> to vector<4x8xf32>
    %72 = vector.shape_cast %71 : vector<4x8xf32> to vector<4x8x1xf32>
    %73 = arith.addf %70, %72 : vector<4x8x1xf32>
    %74 = arith.truncf %69 : vector<4x8x16xf32> to vector<4x8x16xbf16>
    %75 = vector.extract_strided_slice %74 {offsets = [0, 0, 0], sizes = [1, 8, 16], strides = [1, 1, 1]} : vector<4x8x16xbf16> to vector<1x8x16xbf16>
    %76 = vector.shape_cast %75 : vector<1x8x16xbf16> to vector<8x16xbf16>
    %77 = vector.extract_strided_slice %48 {offsets = [0, 0], sizes = [16, 32], strides = [1, 1]} : vector<16x128xbf16> to vector<16x32xbf16>
    %cst_34 = arith.constant dense<0.000000e+00> : vector<8x32xf32>
    %78 = tpu.matmul %76, %77, %cst_34 {dimension_numbers = #tpu.dot_dimension_numbers<[1], [0], [0], [1], [0, 0, 1, 1], [], []>} : vector<8x16xbf16>, vector<16x32xbf16>, vector<8x32xf32> -> vector<8x32xf32>
    %79 = vector.extract_strided_slice %74 {offsets = [1, 0, 0], sizes = [1, 8, 16], strides = [1, 1, 1]} : vector<4x8x16xbf16> to vector<1x8x16xbf16>
    %80 = vector.shape_cast %79 : vector<1x8x16xbf16> to vector<8x16xbf16>
    %81 = vector.extract_strided_slice %48 {offsets = [0, 32], sizes = [16, 32], strides = [1, 1]} : vector<16x128xbf16> to vector<16x32xbf16>
    %cst_35 = arith.constant dense<0.000000e+00> : vector<8x32xf32>
    %82 = tpu.matmul %80, %81, %cst_35 {dimension_numbers = #tpu.dot_dimension_numbers<[1], [0], [0], [1], [0, 0, 1, 1], [], []>} : vector<8x16xbf16>, vector<16x32xbf16>, vector<8x32xf32> -> vector<8x32xf32>
    %83 = vector.extract_strided_slice %74 {offsets = [2, 0, 0], sizes = [1, 8, 16], strides = [1, 1, 1]} : vector<4x8x16xbf16> to vector<1x8x16xbf16>
    %84 = vector.shape_cast %83 : vector<1x8x16xbf16> to vector<8x16xbf16>
    %85 = vector.extract_strided_slice %48 {offsets = [0, 64], sizes = [16, 32], strides = [1, 1]} : vector<16x128xbf16> to vector<16x32xbf16>
    %cst_36 = arith.constant dense<0.000000e+00> : vector<8x32xf32>
    %86 = tpu.matmul %84, %85, %cst_36 {dimension_numbers = #tpu.dot_dimension_numbers<[1], [0], [0], [1], [0, 0, 1, 1], [], []>} : vector<8x16xbf16>, vector<16x32xbf16>, vector<8x32xf32> -> vector<8x32xf32>
    %87 = vector.extract_strided_slice %74 {offsets = [3, 0, 0], sizes = [1, 8, 16], strides = [1, 1, 1]} : vector<4x8x16xbf16> to vector<1x8x16xbf16>
    %88 = vector.shape_cast %87 : vector<1x8x16xbf16> to vector<8x16xbf16>
    %89 = vector.extract_strided_slice %48 {offsets = [0, 96], sizes = [16, 32], strides = [1, 1]} : vector<16x128xbf16> to vector<16x32xbf16>
    %cst_37 = arith.constant dense<0.000000e+00> : vector<8x32xf32>
    %90 = tpu.matmul %88, %89, %cst_37 {dimension_numbers = #tpu.dot_dimension_numbers<[1], [0], [0], [1], [0, 0, 1, 1], [], []>} : vector<8x16xbf16>, vector<16x32xbf16>, vector<8x32xf32> -> vector<8x32xf32>
    %91 = vector.shape_cast %78 : vector<8x32xf32> to vector<1x8x32xf32>
    %92 = vector.shape_cast %82 : vector<8x32xf32> to vector<1x8x32xf32>
    %93 = vector.shape_cast %86 : vector<8x32xf32> to vector<1x8x32xf32>
    %94 = vector.shape_cast %90 : vector<8x32xf32> to vector<1x8x32xf32>
    %95 = tpu.concatenate %91, %92, %93, %94 in 0 : vector<1x8x32xf32>, vector<1x8x32xf32>, vector<1x8x32xf32>, vector<1x8x32xf32> -> vector<4x8x32xf32>
    %96 = vector.broadcast %62 : vector<4x8x1xf32> to vector<4x8x32xf32>
    %97 = arith.mulf %96, %42 : vector<4x8x32xf32>
    %98 = arith.addf %97, %95 : vector<4x8x32xf32>
    %c1_i32 = arith.constant 1 : i32
    %cst_38 = arith.constant 1.000000e-30 : f32
    %99 = vector.broadcast %cst_38 : f32 to vector<4x8x1xf32>
    %100 = arith.maximumf %73, %99 : vector<4x8x1xf32>
    %101 = tpu.reciprocal %100 {approx = true} : vector<4x8x1xf32> -> vector<4x8x1xf32>
    %102 = vector.broadcast %101 : vector<4x8x1xf32> to vector<4x8x32xf32>
    %103 = arith.mulf %98, %102 : vector<4x8x32xf32>
    %104 = tpu.transpose %103, [1, 0, 2] : vector<4x8x32xf32> -> vector<8x4x32xf32>
    %105 = vector.shape_cast %104 : vector<8x4x32xf32> to vector<8x128xf32>
    %106 = arith.truncf %105 : vector<8x128xf32> to vector<8x128xbf16>
    %c0_39 = arith.constant 0 : index
    %c0_40 = arith.constant 0 : index
    %107 = vector.load %arg13[%c0_39, %c0_40] : memref<128x128xbf16, #tpu.memory_space<vmem>>, vector<128x128xbf16>
    %cst_41 = arith.constant dense<0.000000e+00> : vector<8x128xf32>
    %108 = tpu.matmul %106, %107, %cst_41 {dimension_numbers = #tpu.dot_dimension_numbers<[1], [0], [0], [1], [0, 0, 1, 1], [], []>} : vector<8x128xbf16>, vector<128x128xbf16>, vector<8x128xf32> -> vector<8x128xf32>
    %c0_42 = arith.constant 0 : index
    %c0_43 = arith.constant 0 : index
    %109 = vector.load %arg14[%c0_42, %c0_43] : memref<1x128xf32, #tpu.memory_space<vmem>>, vector<1x128xf32>
    %110 = vector.broadcast %109 : vector<1x128xf32> to vector<8x128xf32>
    %111 = arith.addf %108, %110 : vector<8x128xf32>
    %112 = arith.addf %6, %111 : vector<8x128xf32>
    %c0_44 = arith.constant 0 : index
    %c0_45 = arith.constant 0 : index
    %113 = vector.load %arg7[%c0_44, %c0_45] : memref<1x128xf32, #tpu.memory_space<vmem>>, vector<1x128xf32>
    %c0_46 = arith.constant 0 : index
    %c0_47 = arith.constant 0 : index
    %114 = vector.load %arg8[%c0_46, %c0_47] : memref<1x128xf32, #tpu.memory_space<vmem>>, vector<1x128xf32>
    %cst_48 = arith.constant dense<0.000000e+00> : vector<8xf32>
    %115 = vector.multi_reduction <add>, %112, %cst_48 [1] : vector<8x128xf32> to vector<8xf32>
    %116 = vector.shape_cast %115 : vector<8xf32> to vector<8x1xf32>
    %cst_49 = arith.constant 1.280000e+02 : f32
    %117 = vector.broadcast %cst_49 : f32 to vector<8x1xf32>
    %118 = arith.divf %116, %117 : vector<8x1xf32>
    %119 = vector.broadcast %118 : vector<8x1xf32> to vector<8x128xf32>
    %120 = arith.subf %112, %119 : vector<8x128xf32>
    %121 = arith.mulf %120, %120 : vector<8x128xf32>
    %cst_50 = arith.constant dense<0.000000e+00> : vector<8xf32>
    %122 = vector.multi_reduction <add>, %121, %cst_50 [1] : vector<8x128xf32> to vector<8xf32>
    %123 = vector.shape_cast %122 : vector<8xf32> to vector<8x1xf32>
    %cst_51 = arith.constant 1.280000e+02 : f32
    %124 = vector.broadcast %cst_51 : f32 to vector<8x1xf32>
    %125 = arith.divf %123, %124 : vector<8x1xf32>
    %126 = vector.broadcast %118 : vector<8x1xf32> to vector<8x128xf32>
    %127 = arith.subf %112, %126 : vector<8x128xf32>
    %cst_52 = arith.constant 9.99999996E-13 : f32
    %128 = vector.broadcast %cst_52 : f32 to vector<8x1xf32>
    %129 = arith.addf %125, %128 : vector<8x1xf32>
    %130 = math.rsqrt %129 : vector<8x1xf32>
    %131 = vector.broadcast %130 : vector<8x1xf32> to vector<8x128xf32>
    %132 = arith.mulf %127, %131 : vector<8x128xf32>
    %133 = vector.broadcast %113 : vector<1x128xf32> to vector<8x128xf32>
    %134 = arith.mulf %132, %133 : vector<8x128xf32>
    %135 = vector.broadcast %114 : vector<1x128xf32> to vector<8x128xf32>
    %136 = arith.addf %134, %135 : vector<8x128xf32>
    %137 = arith.truncf %136 : vector<8x128xf32> to vector<8x128xbf16>
    %c0_53 = arith.constant 0 : index
    %c0_54 = arith.constant 0 : index
    %138 = vector.load %arg15[%c0_53, %c0_54] : memref<128x256xbf16, #tpu.memory_space<vmem>>, vector<128x256xbf16>
    %cst_55 = arith.constant dense<0.000000e+00> : vector<8x256xf32>
    %139 = tpu.matmul %137, %138, %cst_55 {dimension_numbers = #tpu.dot_dimension_numbers<[1], [0], [0], [1], [0, 0, 1, 1], [], []>} : vector<8x128xbf16>, vector<128x256xbf16>, vector<8x256xf32> -> vector<8x256xf32>
    %c0_56 = arith.constant 0 : index
    %c0_57 = arith.constant 0 : index
    %140 = vector.load %arg16[%c0_56, %c0_57] : memref<1x256xf32, #tpu.memory_space<vmem>>, vector<1x256xf32>
    %141 = vector.broadcast %140 : vector<1x256xf32> to vector<8x256xf32>
    %142 = arith.addf %139, %141 : vector<8x256xf32>
    %cst_58 = arith.constant 0.000000e+00 : f32
    %143 = vector.broadcast %cst_58 : f32 to vector<8x256xf32>
    %144 = arith.maximumf %142, %143 : vector<8x256xf32>
    %145 = arith.truncf %144 : vector<8x256xf32> to vector<8x256xbf16>
    %c0_59 = arith.constant 0 : index
    %c0_60 = arith.constant 0 : index
    %146 = vector.load %arg17[%c0_59, %c0_60] : memref<256x128xbf16, #tpu.memory_space<vmem>>, vector<256x128xbf16>
    %cst_61 = arith.constant dense<0.000000e+00> : vector<8x128xf32>
    %147 = tpu.matmul %145, %146, %cst_61 {dimension_numbers = #tpu.dot_dimension_numbers<[1], [0], [0], [1], [0, 0, 1, 1], [], []>} : vector<8x256xbf16>, vector<256x128xbf16>, vector<8x128xf32> -> vector<8x128xf32>
    %c0_62 = arith.constant 0 : index
    %c0_63 = arith.constant 0 : index
    %148 = vector.load %arg18[%c0_62, %c0_63] : memref<1x128xf32, #tpu.memory_space<vmem>>, vector<1x128xf32>
    %149 = vector.broadcast %148 : vector<1x128xf32> to vector<8x128xf32>
    %150 = arith.addf %147, %149 : vector<8x128xf32>
    %151 = arith.addf %112, %150 : vector<8x128xf32>
    %c0_64 = arith.constant 0 : index
    %c0_65 = arith.constant 0 : index
    %c0_66 = arith.constant 0 : index
    %152 = vector.load %arg19[%c0_64, %c0_65, %c0_66] : memref<1x8x128xf32, #tpu.memory_space<vmem>>, vector<1x8x128xf32>
    %153 = vector.shape_cast %152 : vector<1x8x128xf32> to vector<8x128xf32>
    %154 = vector.shape_cast %151 : vector<8x128xf32> to vector<1x8x128xf32>
    tpu.vector_store %arg19[%c0_64, %c0_65, %c0_66], %154 {strides = array<i32>} : memref<1x8x128xf32, #tpu.memory_space<vmem>>, vector<1x8x128xf32>,
    return
  }
  func.func @transform_0(%arg0: i32, %arg1: i32) -> (i32, i32, i32) {
    %c0_i32 = arith.constant 0 : i32
    %c0_i32_0 = arith.constant 0 : i32
    %c0_i32_1 = arith.constant 0 : i32
    return %arg0, %c0_i32, %c0_i32_0 : i32, i32, i32
  }
  func.func @transform_1(%arg0: i32, %arg1: i32) -> (i32, i32, i32) {
    %c0_i32 = arith.constant 0 : i32
    %c0_i32_0 = arith.constant 0 : i32
    return %arg0, %arg1, %c0_i32 : i32, i32, i32
  }
  func.func @transform_2(%arg0: i32, %arg1: i32) -> (i32, i32, i32) {
    %c0_i32 = arith.constant 0 : i32
    %c0_i32_0 = arith.constant 0 : i32
    %c0_i32_1 = arith.constant 0 : i32
    return %arg0, %c0_i32, %c0_i32_0 : i32, i32, i32
  }
  func.func @transform_3(%arg0: i32, %arg1: i32) -> (i32, i32) {
    %c0_i32 = arith.constant 0 : i32
    %c0_i32_0 = arith.constant 0 : i32
    %c0_i32_1 = arith.constant 0 : i32
    return %c0_i32, %c0_i32_0 : i32, i32
  }
  func.func @transform_4(%arg0: i32, %arg1: i32) -> (i32, i32) {
    %c0_i32 = arith.constant 0 : i32
    %c0_i32_0 = arith.constant 0 : i32
    %c0_i32_1 = arith.constant 0 : i32
    return %c0_i32, %c0_i32_0 : i32, i32
  }
  func.func @transform_5(%arg0: i32, %arg1: i32) -> (i32, i32) {
    %c0_i32 = arith.constant 0 : i32
    %c0_i32_0 = arith.constant 0 : i32
    %c0_i32_1 = arith.constant 0 : i32
    return %c0_i32, %c0_i32_0 : i32, i32
  }
  func.func @transform_6(%arg0: i32, %arg1: i32) -> (i32, i32) {
    %c0_i32 = arith.constant 0 : i32
    %c0_i32_0 = arith.constant 0 : i32
    %c0_i32_1 = arith.constant 0 : i32
    return %c0_i32, %c0_i32_0 : i32, i32
  }
  func.func @transform_7(%arg0: i32, %arg1: i32) -> (i32, i32) {
    %c0_i32 = arith.constant 0 : i32
    %c0_i32_0 = arith.constant 0 : i32
    %c0_i32_1 = arith.constant 0 : i32
    return %c0_i32, %c0_i32_0 : i32, i32
  }
  func.func @transform_8(%arg0: i32, %arg1: i32) -> (i32, i32) {
    %c0_i32 = arith.constant 0 : i32
    %c0_i32_0 = arith.constant 0 : i32
    %c0_i32_1 = arith.constant 0 : i32
    return %c0_i32, %c0_i32_0 : i32, i32
  }
  func.func @transform_9(%arg0: i32, %arg1: i32) -> (i32, i32) {
    %c0_i32 = arith.constant 0 : i32
    %c0_i32_0 = arith.constant 0 : i32
    %c0_i32_1 = arith.constant 0 : i32
    return %c0_i32, %c0_i32_0 : i32, i32
  }
  func.func @transform_10(%arg0: i32, %arg1: i32) -> (i32, i32) {
    %c0_i32 = arith.constant 0 : i32
    %c0_i32_0 = arith.constant 0 : i32
    %c0_i32_1 = arith.constant 0 : i32
    return %c0_i32, %c0_i32_0 : i32, i32
  }
  func.func @transform_11(%arg0: i32, %arg1: i32) -> (i32, i32) {
    %c0_i32 = arith.constant 0 : i32
    %c0_i32_0 = arith.constant 0 : i32
    %c0_i32_1 = arith.constant 0 : i32
    return %c0_i32, %c0_i32_0 : i32, i32
  }
  func.func @transform_12(%arg0: i32, %arg1: i32) -> (i32, i32) {
    %c0_i32 = arith.constant 0 : i32
    %c0_i32_0 = arith.constant 0 : i32
    %c0_i32_1 = arith.constant 0 : i32
    return %c0_i32, %c0_i32_0 : i32, i32
  }
  func.func @transform_13(%arg0: i32, %arg1: i32) -> (i32, i32) {
    %c0_i32 = arith.constant 0 : i32
    %c0_i32_0 = arith.constant 0 : i32
    %c0_i32_1 = arith.constant 0 : i32
    return %c0_i32, %c0_i32_0 : i32, i32
  }
  func.func @transform_14(%arg0: i32, %arg1: i32) -> (i32, i32) {
    %c0_i32 = arith.constant 0 : i32
    %c0_i32_0 = arith.constant 0 : i32
    %c0_i32_1 = arith.constant 0 : i32
    return %c0_i32, %c0_i32_0 : i32, i32
  }
  func.func @transform_15(%arg0: i32, %arg1: i32) -> (i32, i32) {
    %c0_i32 = arith.constant 0 : i32
    %c0_i32_0 = arith.constant 0 : i32
    %c0_i32_1 = arith.constant 0 : i32
    return %c0_i32, %c0_i32_0 : i32, i32
  }
  func.func @transform_16(%arg0: i32, %arg1: i32) -> (i32, i32) {
    %c0_i32 = arith.constant 0 : i32
    %c0_i32_0 = arith.constant 0 : i32
    %c0_i32_1 = arith.constant 0 : i32
    return %c0_i32, %c0_i32_0 : i32, i32
  }
  func.func @transform_17(%arg0: i32, %arg1: i32) -> (i32, i32, i32) {
    %c0_i32 = arith.constant 0 : i32
    %c0_i32_0 = arith.constant 0 : i32
    return %arg0, %arg1, %c0_i32 : i32, i32, i32
  }
}

</mosaic_0001>

<llo_original>
// kernel: tpu_custom_call.1
$region0: #{tpu_custom_call.1}
  #allocation0 [shape = 'u32[]', space=smem, size = 0x4, offset = 0x4, fixed_abs, tag = 'smem constant byte address 0x4 - core index']
  #allocation1 [shape = 'u32[144,128]{1,0:T(1,128)}', space=vmem, size = 0x12000, scoped, tag = 'internal scratch']
  #allocation2 [shape = 'bf16[1,4,32,16]{3,2,1,0:T(16,128)(2,1)}', space=vmem, size = 0x8000, scoped, tag = 'scratch operand']
  #allocation3 [shape = 'bf16[1,16,128]{2,1,0:T(16,128)(2,1)}', space=vmem, size = 0x1000, scoped, tag = 'scratch operand']
  %s0 = inlined_call_operand.hbm [shape: f32[2,16,128], index: 0, kind: input, shape index: {}]
  %s1 = inlined_call_operand.hbm [shape: f32[2,16,128], index: 1, kind: input, shape index: {}]
  %s2 = inlined_call_operand.hbm [shape: f32[2,1,16], index: 2, kind: input, shape index: {}]
  %s3 = inlined_call_operand.hbm [shape: f32[1,128], index: 3, kind: input, shape index: {}]
  %s4 = inlined_call_operand.hbm [shape: f32[1,128], index: 4, kind: input, shape index: {}]
  %s5 = inlined_call_operand.hbm [shape: f32[1,128], index: 5, kind: input, shape index: {}]
  %s6 = inlined_call_operand.hbm [shape: f32[1,128], index: 6, kind: input, shape index: {}]
  %s7 = inlined_call_operand.hbm [shape: bf16[128,128], index: 7, kind: input, shape index: {}]
  %s8 = inlined_call_operand.hbm [shape: f32[1,128], index: 8, kind: input, shape index: {}]
  %s9 = inlined_call_operand.hbm [shape: bf16[128,256], index: 9, kind: input, shape index: {}]
  %s10 = inlined_call_operand.hbm [shape: f32[1,256], index: 10, kind: input, shape index: {}]
  %s11 = inlined_call_operand.hbm [shape: bf16[128,128], index: 11, kind: input, shape index: {}]
  %s12 = inlined_call_operand.hbm [shape: f32[1,128], index: 12, kind: input, shape index: {}]
  %s13 = inlined_call_operand.hbm [shape: bf16[128,256], index: 13, kind: input, shape index: {}]
  %s14 = inlined_call_operand.hbm [shape: f32[1,256], index: 14, kind: input, shape index: {}]
  %s15 = inlined_call_operand.hbm [shape: bf16[256,128], index: 15, kind: input, shape index: {}]
  %s16 = inlined_call_operand.hbm [shape: f32[1,128], index: 16, kind: input, shape index: {}]
  %s17 = inlined_call_operand.hbm [shape: f32[2,16,128], index: 17, kind: output, shape index: {}]
  %s18 = sld [smem:[#allocation0]]
  $region173: #{tpu_custom_call.1} parent=0
    _
  %s20 = ssub.s32 1, %s18
  %s21 = scalar_select 0, %s20, %s18
  $region1: #{tpu_custom_call.1} parent=0
    #allocation4 [shape = 'u8[8192]{0}', space=vmem, size = 0x2000, scoped, tag = 'input window, operand 0, single buffered']
    #allocation5 [shape = 's32[2]{0}', space=sflag, size = 0x8, scoped, tag = 'scoped memory for tpu_custom_call.1']
    #allocation6 [shape = 's32[2]{0}', space=sflag, size = 0x8, scoped, tag = 'scoped memory for tpu_custom_call.1']
    #allocation7 [shape = 'u8[8192]{0}', space=vmem, size = 0x2000, scoped, tag = 'input window, operand 1']
    #allocation8 [shape = 's32[2]{0}', space=sflag, size = 0x8, scoped, tag = 'scoped memory for tpu_custom_call.1']
    #allocation9 [shape = 'u8[1024]{0}', space=vmem, size = 0x400, scoped, tag = 'input window, operand 2']
    #allocation10 [shape = 'u8[512]{0}', space=vmem, size = 0x400, scoped, tag = 'input window, operand 3, single buffered']
    #allocation11 [shape = 's32[1]{0}', space=sflag, size = 0x4, scoped, tag = 'scoped memory for tpu_custom_call.1']
    #allocation12 [shape = 'u8[512]{0}', space=vmem, size = 0x400, scoped, tag = 'input window, operand 4, single buffered']
    #allocation13 [shape = 'u8[512]{0}', space=vmem, size = 0x400, scoped, tag = 'input window, operand 5, single buffered']
    #allocation14 [shape = 's32[1]{0}', space=sflag, size = 0x4, scoped, tag = 'scoped memory for tpu_custom_call.1']
    #allocation15 [shape = 'u8[512]{0}', space=vmem, size = 0x400, scoped, tag = 'input window, operand 6, single buffered']
    #allocation16 [shape = 'u8[32768]{0}', space=vmem, size = 0x8000, scoped, tag = 'input window, operand 7, single buffered']
    #allocation17 [shape = 's32[1]{0}', space=sflag, size = 0x4, scoped, tag = 'scoped memory for tpu_custom_call.1']
    #allocation18 [shape = 'u8[512]{0}', space=vmem, size = 0x400, scoped, tag = 'input window, operand 8, single buffered']
    #allocation19 [shape = 'u8[65536]{0}', space=vmem, size = 0x10000, scoped, tag = 'input window, operand 9, single buffered']
    #allocation20 [shape = 's32[1]{0}', space=sflag, size = 0x4, scoped, tag = 'scoped memory for tpu_custom_call.1']
    #allocation21 [shape = 'u8[1024]{0}', space=vmem, size = 0x400, scoped, tag = 'input window, operand 10, single buffered']
    #allocation22 [shape = 'u8[32768]{0}', space=vmem, size = 0x8000, scoped, tag = 'input window, operand 11, single buffered']
    #allocation23 [shape = 's32[1]{0}', space=sflag, size = 0x4, scoped, tag = 'scoped memory for tpu_custom_call.1']
    #allocation24 [shape = 'u8[512]{0}', space=vmem, size = 0x400, scoped, tag = 'input window, operand 12, single buffered']
    #allocation25 [shape = 'u8[65536]{0}', space=vmem, size = 0x10000, scoped, tag = 'input window, operand 13, single buffered']
    #allocation26 [shape = 's32[1]{0}', space=sflag, size = 0x4, scoped, tag = 'scoped memory for tpu_custom_call.1']
    #allocation27 [shape = 'u8[1024]{0}', space=vmem, size = 0x400, scoped, tag = 'input window, operand 14, single buffered']
    #allocation28 [shape = 'u8[65536]{0}', space=vmem, size = 0x10000, scoped, tag = 'input window, operand 15, single buffered']
    #allocation29 [shape = 's32[1]{0}', space=sflag, size = 0x4, scoped, tag = 'scoped memory for tpu_custom_call.1']
    #allocation30 [shape = 'u8[512]{0}', space=vmem, size = 0x400, scoped, tag = 'input window, operand 16, single buffered']
    #allocation31 [shape = 'u8[8192]{0}', space=vmem, size = 0x2000, scoped, tag = 'output window, operand 0']
    %22 = vsyncpa [#allocation5], 0
    %23 = vsyncpa [#allocation8], 0
    %s24 = scalar_lea.sflag [#allocation8], 1
    %25 = vsyncpa %s24, 0
    %26 = vsyncpa [#allocation11], 0
    %27 = vsyncpa [#allocation14], 0
    %28 = vsyncpa [#allocation17], 0
    %29 = vsyncpa [#allocation20], 0
    %30 = vsyncpa [#allocation23], 0
    %31 = vsyncpa [#allocation26], 0
    %32 = vsyncpa [#allocation29], 0
    %33 = vsyncpa [#allocation6], 0
    %s34 = scalar_lea.sflag [#allocation6], 1
    %35 = vsyncpa %s34, 0
    loop: start=0, step=1, limit=6
    $region2: #{tpu_custom_call.1} parent=1 // loop_pre_header
      _
    $region3: #{tpu_custom_call.1} parent=1 // loop_header
      %s37 = sphi 0, %s41
      %p38 = scmp.ge.s32.totalorder %s37, 6
      %s44 = sphi 0, %s56
      %s45 = sphi 0, %s52
      %s46 = sphi 0, %s44
      %s47 = sphi 0, %s45
      %s48 = sphi 0, %s46
      %s49 = sphi 0, %s47
      %s59 = sphi 0, %s61
      %s62 = sphi 0, %s59
      %s63 = sphi 0, %s62
      %s79 = sphi 0, %s63
      %s87 = sphi 0, %s89
      %s90 = sphi 0, %s87
      %s91 = sphi 0, %s90
      %s107 = sphi 0, %s91
      %s113 = sphi 0, %s115
      %s116 = sphi 0, %s113
      %s117 = sphi 0, %s116
      %s133 = sphi 0, %s117
      %s137 = sphi 0, %s137
      %s139 = sphi 0, %s137
      %s140 = sphi 0, %s139
      %s154 = sphi 0, %s140
      %s158 = sphi 0, %s158
      %s160 = sphi 0, %s158
      %s161 = sphi 0, %s160
      %s175 = sphi 0, %s161
      %s179 = sphi 0, %s179
      %s181 = sphi 0, %s179
      %s182 = sphi 0, %s181
      %s196 = sphi 0, %s182
      %s200 = sphi 0, %s200
      %s202 = sphi 0, %s200
      %s203 = sphi 0, %s202
      %s217 = sphi 0, %s203
      %s221 = sphi 0, %s221
      %s223 = sphi 0, %s221
      %s224 = sphi 0, %s223
      %s238 = sphi 0, %s224
      %s242 = sphi 0, %s242
      %s244 = sphi 0, %s242
      %s245 = sphi 0, %s244
      %s259 = sphi 0, %s245
      %s263 = sphi 0, %s263
      %s265 = sphi 0, %s263
      %s266 = sphi 0, %s265
      %s280 = sphi 0, %s266
      %s284 = sphi 0, %s284
      %s286 = sphi 0, %s284
      %s287 = sphi 0, %s286
      %s301 = sphi 0, %s287
      %s305 = sphi 0, %s305
      %s307 = sphi 0, %s305
      %s308 = sphi 0, %s307
      %s322 = sphi 0, %s308
      %s326 = sphi 0, %s326
      %s328 = sphi 0, %s326
      %s329 = sphi 0, %s328
      %s343 = sphi 0, %s329
      %s347 = sphi 0, %s347
      %s349 = sphi 0, %s347
      %s350 = sphi 0, %s349
      %s364 = sphi 0, %s350
      %s368 = sphi 0, %s368
      %s370 = sphi 0, %s368
      %s371 = sphi 0, %s370
      %s385 = sphi 0, %s371
      %s389 = sphi 0, %s389
      %s391 = sphi 0, %s389
      %s392 = sphi 0, %s391
      %s406 = sphi 0, %s392
      %s410 = sphi 0, %s410
      %s412 = sphi 0, %s410
      %s413 = sphi 0, %s412
      %s427 = sphi 0, %s413
      %s435 = sphi 0, %s437
      %s438 = sphi 0, %s435
      %s439 = sphi 0, %s438
      %s455 = sphi 0, %s439
    $region4: #{tpu_custom_call.1} parent=1 // loop_header_branch
      %40 = sbr.rel (%p38) target = $region8
    $region5: #{tpu_custom_call.1} parent=1 // loop_body
      %s42 = ssub.s32 %s37, 1
      %s43 = ssub.s32 %s37, 2
      %s50 = sadd.s32 1, %s45
      %p51 = scmp.ge.s32.totalorder %s50, 2
      %s52 = scalar_select %p51, 0, %s50
      %s53 = sadd.s32 1, %s44
      %s54 = scalar_select %p51, %s53, %s44
      %p55 = scmp.ge.s32.totalorder %s54, 2
      %s56 = scalar_select %p55, 0, %s54
      %s57 = ssub.s32 %s44, %s56
      %p58 = scmp.eq.s32.totalorder %s57, 0
      %s60 = sadd.s32 %s59, 1
      %s61 = scalar_select %p58, %s59, %s60
      %p64 = pneg %p58
      %p65 = scmp.eq.s32.totalorder %s37, 3
      %p66 = por %p64, %p65
      %p67 = scmp.ne.s32.totalorder %s59, %s62
      %p68 = scmp.eq.s32.totalorder %s37, 0
      %p69 = por %p67, %p68
      %p70 = scmp.ne.s32.totalorder %s59, %s62
      %p71 = scmp.eq.s32.totalorder %s42, 3
      %p72 = por %p70, %p71
      %p73 = scmp.ne.s32.totalorder %s62, %s63
      %p74 = scmp.eq.s32.totalorder %s42, 0
      %p75 = por %p73, %p74
      %p76 = scmp.ne.s32.totalorder %s62, %s63
      %p77 = scmp.eq.s32.totalorder %s43, 3
      %p78 = por %p76, %p77
      %p80 = scmp.ne.s32.totalorder %s63, %s79
      %p81 = scmp.eq.s32.totalorder %s43, 0
      %p82 = por %p80, %p81
      %s83 = ssub.s32 %s44, %s56
      %s84 = ssub.s32 %s45, %s52
      %s85 = sor.u32 %s83, %s84
      %p86 = scmp.eq.s32.totalorder %s85, 0
      %s88 = sadd.s32 %s87, 1
      %s89 = scalar_select %p86, %s87, %s88
      %p92 = pneg %p86
      %p93 = scmp.eq.s32.totalorder %s37, 3
      %p94 = por %p92, %p93
      %p95 = scmp.ne.s32.totalorder %s87, %s90
      %p96 = scmp.eq.s32.totalorder %s37, 0
      %p97 = por %p95, %p96
      %p98 = scmp.ne.s32.totalorder %s87, %s90
      %p99 = scmp.eq.s32.totalorder %s42, 3
      %p100 = por %p98, %p99
      %p101 = scmp.ne.s32.totalorder %s90, %s91
      %p102 = scmp.eq.s32.totalorder %s42, 0
      %p103 = por %p101, %p102
      %p104 = scmp.ne.s32.totalorder %s90, %s91
      %p105 = scmp.eq.s32.totalorder %s43, 3
      %p106 = por %p104, %p105
      %p108 = scmp.ne.s32.totalorder %s91, %s107
      %p109 = scmp.eq.s32.totalorder %s43, 0
      %p110 = por %p108, %p109
      %s111 = ssub.s32 %s44, %s56
      %p112 = scmp.eq.s32.totalorder %s111, 0
      %s114 = sadd.s32 %s113, 1
      %s115 = scalar_select %p112, %s113, %s114
      %p118 = pneg %p112
      %p119 = scmp.eq.s32.totalorder %s37, 3
      %p120 = por %p118, %p119
      %p121 = scmp.ne.s32.totalorder %s113, %s116
      %p122 = scmp.eq.s32.totalorder %s37, 0
      %p123 = por %p121, %p122
      %p124 = scmp.ne.s32.totalorder %s113, %s116
      %p125 = scmp.eq.s32.totalorder %s42, 3
      %p126 = por %p124, %p125
      %p127 = scmp.ne.s32.totalorder %s116, %s117
      %p128 = scmp.eq.s32.totalorder %s42, 0
      %p129 = por %p127, %p128
      %p130 = scmp.ne.s32.totalorder %s116, %s117
      %p131 = scmp.eq.s32.totalorder %s43, 3
      %p132 = por %p130, %p131
      %p134 = scmp.ne.s32.totalorder %s117, %s133
      %p135 = scmp.eq.s32.totalorder %s43, 0
      %p136 = por %p134, %p135
      %s138 = sadd.s32 %s137, 1
      %p141 = scmp.eq.s32.totalorder %s37, 3
      %p142 = scmp.ne.s32.totalorder %s137, %s139
      %p143 = scmp.eq.s32.totalorder %s37, 0
      %p144 = por %p142, %p143
      %p145 = scmp.ne.s32.totalorder %s137, %s139
      %p146 = scmp.eq.s32.totalorder %s42, 3
      %p147 = por %p145, %p146
      %p148 = scmp.ne.s32.totalorder %s139, %s140
      %p149 = scmp.eq.s32.totalorder %s42, 0
      %p150 = por %p148, %p149
      %p151 = scmp.ne.s32.totalorder %s139, %s140
      %p152 = scmp.eq.s32.totalorder %s43, 3
      %p153 = por %p151, %p152
      %p155 = scmp.ne.s32.totalorder %s140, %s154
      %p156 = scmp.eq.s32.totalorder %s43, 0
      %p157 = por %p155, %p156
      %s159 = sadd.s32 %s158, 1
      %p162 = scmp.eq.s32.totalorder %s37, 3
      %p163 = scmp.ne.s32.totalorder %s158, %s160
      %p164 = scmp.eq.s32.totalorder %s37, 0
      %p165 = por %p163, %p164
      %p166 = scmp.ne.s32.totalorder %s158, %s160
      %p167 = scmp.eq.s32.totalorder %s42, 3
      %p168 = por %p166, %p167
      %p169 = scmp.ne.s32.totalorder %s160, %s161
      %p170 = scmp.eq.s32.totalorder %s42, 0
      %p171 = por %p169, %p170
      %p172 = scmp.ne.s32.totalorder %s160, %s161
      %p173 = scmp.eq.s32.totalorder %s43, 3
      %p174 = por %p172, %p173
      %p176 = scmp.ne.s32.totalorder %s161, %s175
      %p177 = scmp.eq.s32.totalorder %s43, 0
      %p178 = por %p176, %p177
      %s180 = sadd.s32 %s179, 1
      %p183 = scmp.eq.s32.totalorder %s37, 3
      %p184 = scmp.ne.s32.totalorder %s179, %s181
      %p185 = scmp.eq.s32.totalorder %s37, 0
      %p186 = por %p184, %p185
      %p187 = scmp.ne.s32.totalorder %s179, %s181
      %p188 = scmp.eq.s32.totalorder %s42, 3
      %p189 = por %p187, %p188
      %p190 = scmp.ne.s32.totalorder %s181, %s182
      %p191 = scmp.eq.s32.totalorder %s42, 0
      %p192 = por %p190, %p191
      %p193 = scmp.ne.s32.totalorder %s181, %s182
      %p194 = scmp.eq.s32.totalorder %s43, 3
      %p195 = por %p193, %p194
      %p197 = scmp.ne.s32.totalorder %s182, %s196
      %p198 = scmp.eq.s32.totalorder %s43, 0
      %p199 = por %p197, %p198
      %s201 = sadd.s32 %s200, 1
      %p204 = scmp.eq.s32.totalorder %s37, 3
      %p205 = scmp.ne.s32.totalorder %s200, %s202
      %p206 = scmp.eq.s32.totalorder %s37, 0
      %p207 = por %p205, %p206
      %p208 = scmp.ne.s32.totalorder %s200, %s202
      %p209 = scmp.eq.s32.totalorder %s42, 3
      %p210 = por %p208, %p209
      %p211 = scmp.ne.s32.totalorder %s202, %s203
      %p212 = scmp.eq.s32.totalorder %s42, 0
      %p213 = por %p211, %p212
      %p214 = scmp.ne.s32.totalorder %s202, %s203
      %p215 = scmp.eq.s32.totalorder %s43, 3
      %p216 = por %p214, %p215
      %p218 = scmp.ne.s32.totalorder %s203, %s217
      %p219 = scmp.eq.s32.totalorder %s43, 0
      %p220 = por %p218, %p219
      %s222 = sadd.s32 %s221, 1
      %p225 = scmp.eq.s32.totalorder %s37, 3
      %p226 = scmp.ne.s32.totalorder %s221, %s223
      %p227 = scmp.eq.s32.totalorder %s37, 0
      %p228 = por %p226, %p227
      %p229 = scmp.ne.s32.totalorder %s221, %s223
      %p230 = scmp.eq.s32.totalorder %s42, 3
      %p231 = por %p229, %p230
      %p232 = scmp.ne.s32.totalorder %s223, %s224
      %p233 = scmp.eq.s32.totalorder %s42, 0
      %p234 = por %p232, %p233
      %p235 = scmp.ne.s32.totalorder %s223, %s224
      %p236 = scmp.eq.s32.totalorder %s43, 3
      %p237 = por %p235, %p236
      %p239 = scmp.ne.s32.totalorder %s224, %s238
      %p240 = scmp.eq.s32.totalorder %s43, 0
      %p241 = por %p239, %p240
      %s243 = sadd.s32 %s242, 1
      %p246 = scmp.eq.s32.totalorder %s37, 3
      %p247 = scmp.ne.s32.totalorder %s242, %s244
      %p248 = scmp.eq.s32.totalorder %s37, 0
      %p249 = por %p247, %p248
      %p250 = scmp.ne.s32.totalorder %s242, %s244
      %p251 = scmp.eq.s32.totalorder %s42, 3
      %p252 = por %p250, %p251
      %p253 = scmp.ne.s32.totalorder %s244, %s245
      %p254 = scmp.eq.s32.totalorder %s42, 0
      %p255 = por %p253, %p254
      %p256 = scmp.ne.s32.totalorder %s244, %s245
      %p257 = scmp.eq.s32.totalorder %s43, 3
      %p258 = por %p256, %p257
      %p260 = scmp.ne.s32.totalorder %s245, %s259
      %p261 = scmp.eq.s32.totalorder %s43, 0
      %p262 = por %p260, %p261
      %s264 = sadd.s32 %s263, 1
      %p267 = scmp.eq.s32.totalorder %s37, 3
      %p268 = scmp.ne.s32.totalorder %s263, %s265
      %p269 = scmp.eq.s32.totalorder %s37, 0
      %p270 = por %p268, %p269
      %p271 = scmp.ne.s32.totalorder %s263, %s265
      %p272 = scmp.eq.s32.totalorder %s42, 3
      %p273 = por %p271, %p272
      %p274 = scmp.ne.s32.totalorder %s265, %s266
      %p275 = scmp.eq.s32.totalorder %s42, 0
      %p276 = por %p274, %p275
      %p277 = scmp.ne.s32.totalorder %s265, %s266
      %p278 = scmp.eq.s32.totalorder %s43, 3
      %p279 = por %p277, %p278
      %p281 = scmp.ne.s32.totalorder %s266, %s280
      %p282 = scmp.eq.s32.totalorder %s43, 0
      %p283 = por %p281, %p282
      %s285 = sadd.s32 %s284, 1
      %p288 = scmp.eq.s32.totalorder %s37, 3
      %p289 = scmp.ne.s32.totalorder %s284, %s286
      %p290 = scmp.eq.s32.totalorder %s37, 0
      %p291 = por %p289, %p290
      %p292 = scmp.ne.s32.totalorder %s284, %s286
      %p293 = scmp.eq.s32.totalorder %s42, 3
      %p294 = por %p292, %p293
      %p295 = scmp.ne.s32.totalorder %s286, %s287
      %p296 = scmp.eq.s32.totalorder %s42, 0
      %p297 = por %p295, %p296
      %p298 = scmp.ne.s32.totalorder %s286, %s287
      %p299 = scmp.eq.s32.totalorder %s43, 3
      %p300 = por %p298, %p299
      %p302 = scmp.ne.s32.totalorder %s287, %s301
      %p303 = scmp.eq.s32.totalorder %s43, 0
      %p304 = por %p302, %p303
      %s306 = sadd.s32 %s305, 1
      %p309 = scmp.eq.s32.totalorder %s37, 3
      %p310 = scmp.ne.s32.totalorder %s305, %s307
      %p311 = scmp.eq.s32.totalorder %s37, 0
      %p312 = por %p310, %p311
      %p313 = scmp.ne.s32.totalorder %s305, %s307
      %p314 = scmp.eq.s32.totalorder %s42, 3
      %p315 = por %p313, %p314
      %p316 = scmp.ne.s32.totalorder %s307, %s308
      %p317 = scmp.eq.s32.totalorder %s42, 0
      %p318 = por %p316, %p317
      %p319 = scmp.ne.s32.totalorder %s307, %s308
      %p320 = scmp.eq.s32.totalorder %s43, 3
      %p321 = por %p319, %p320
      %p323 = scmp.ne.s32.totalorder %s308, %s322
      %p324 = scmp.eq.s32.totalorder %s43, 0
      %p325 = por %p323, %p324
      %s327 = sadd.s32 %s326, 1
      %p330 = scmp.eq.s32.totalorder %s37, 3
      %p331 = scmp.ne.s32.totalorder %s326, %s328
      %p332 = scmp.eq.s32.totalorder %s37, 0
      %p333 = por %p331, %p332
      %p334 = scmp.ne.s32.totalorder %s326, %s328
      %p335 = scmp.eq.s32.totalorder %s42, 3
      %p336 = por %p334, %p335
      %p337 = scmp.ne.s32.totalorder %s328, %s329
      %p338 = scmp.eq.s32.totalorder %s42, 0
      %p339 = por %p337, %p338
      %p340 = scmp.ne.s32.totalorder %s328, %s329
      %p341 = scmp.eq.s32.totalorder %s43, 3
      %p342 = por %p340, %p341
      %p344 = scmp.ne.s32.totalorder %s329, %s343
      %p345 = scmp.eq.s32.totalorder %s43, 0
      %p346 = por %p344, %p345
      %s348 = sadd.s32 %s347, 1
      %p351 = scmp.eq.s32.totalorder %s37, 3
      %p352 = scmp.ne.s32.totalorder %s347, %s349
      %p353 = scmp.eq.s32.totalorder %s37, 0
      %p354 = por %p352, %p353
      %p355 = scmp.ne.s32.totalorder %s347, %s349
      %p356 = scmp.eq.s32.totalorder %s42, 3
      %p357 = por %p355, %p356
      %p358 = scmp.ne.s32.totalorder %s349, %s350
      %p359 = scmp.eq.s32.totalorder %s42, 0
      %p360 = por %p358, %p359
      %p361 = scmp.ne.s32.totalorder %s349, %s350
      %p362 = scmp.eq.s32.totalorder %s43, 3
      %p363 = por %p361, %p362
      %p365 = scmp.ne.s32.totalorder %s350, %s364
      %p366 = scmp.eq.s32.totalorder %s43, 0
      %p367 = por %p365, %p366
      %s369 = sadd.s32 %s368, 1
      %p372 = scmp.eq.s32.totalorder %s37, 3
      %p373 = scmp.ne.s32.totalorder %s368, %s370
      %p374 = scmp.eq.s32.totalorder %s37, 0
      %p375 = por %p373, %p374
      %p376 = scmp.ne.s32.totalorder %s368, %s370
      %p377 = scmp.eq.s32.totalorder %s42, 3
      %p378 = por %p376, %p377
      %p379 = scmp.ne.s32.totalorder %s370, %s371
      %p380 = scmp.eq.s32.totalorder %s42, 0
      %p381 = por %p379, %p380
      %p382 = scmp.ne.s32.totalorder %s370, %s371
      %p383 = scmp.eq.s32.totalorder %s43, 3
      %p384 = por %p382, %p383
      %p386 = scmp.ne.s32.totalorder %s371, %s385
      %p387 = scmp.eq.s32.totalorder %s43, 0
      %p388 = por %p386, %p387
      %s390 = sadd.s32 %s389, 1
      %p393 = scmp.eq.s32.totalorder %s37, 3
      %p394 = scmp.ne.s32.totalorder %s389, %s391
      %p395 = scmp.eq.s32.totalorder %s37, 0
      %p396 = por %p394, %p395
      %p397 = scmp.ne.s32.totalorder %s389, %s391
      %p398 = scmp.eq.s32.totalorder %s42, 3
      %p399 = por %p397, %p398
      %p400 = scmp.ne.s32.totalorder %s391, %s392
      %p401 = scmp.eq.s32.totalorder %s42, 0
      %p402 = por %p400, %p401
      %p403 = scmp.ne.s32.totalorder %s391, %s392
      %p404 = scmp.eq.s32.totalorder %s43, 3
      %p405 = por %p403, %p404
      %p407 = scmp.ne.s32.totalorder %s392, %s406
      %p408 = scmp.eq.s32.totalorder %s43, 0
      %p409 = por %p407, %p408
      %s411 = sadd.s32 %s410, 1
      %p414 = scmp.eq.s32.totalorder %s37, 3
      %p415 = scmp.ne.s32.totalorder %s410, %s412
      %p416 = scmp.eq.s32.totalorder %s37, 0
      %p417 = por %p415, %p416
      %p418 = scmp.ne.s32.totalorder %s410, %s412
      %p419 = scmp.eq.s32.totalorder %s42, 3
      %p420 = por %p418, %p419
      %p421 = scmp.ne.s32.totalorder %s412, %s413
      %p422 = scmp.eq.s32.totalorder %s42, 0
      %p423 = por %p421, %p422
      %p424 = scmp.ne.s32.totalorder %s412, %s413
      %p425 = scmp.eq.s32.totalorder %s43, 3
      %p426 = por %p424, %p425
      %p428 = scmp.ne.s32.totalorder %s413, %s427
      %p429 = scmp.eq.s32.totalorder %s43, 0
      %p430 = por %p428, %p429
      %s431 = ssub.s32 %s44, %s56
      %s432 = ssub.s32 %s45, %s52
      %s433 = sor.u32 %s431, %s432
      %p434 = scmp.eq.s32.totalorder %s433, 0
      %s436 = sadd.s32 %s435, 1
      %s437 = scalar_select %p434, %s435, %s436
      %p440 = pneg %p434
      %p441 = scmp.eq.s32.totalorder %s37, 3
      %p442 = por %p440, %p441
      %p443 = scmp.ne.s32.totalorder %s435, %s438
      %p444 = scmp.eq.s32.totalorder %s37, 0
      %p445 = por %p443, %p444
      %p446 = scmp.ne.s32.totalorder %s435, %s438
      %p447 = scmp.eq.s32.totalorder %s42, 3
      %p448 = por %p446, %p447
      %p449 = scmp.ne.s32.totalorder %s438, %s439
      %p450 = scmp.eq.s32.totalorder %s42, 0
      %p451 = por %p449, %p450
      %p452 = scmp.ne.s32.totalorder %s438, %s439
      %p453 = scmp.eq.s32.totalorder %s43, 3
      %p454 = por %p452, %p453
      %p456 = scmp.ne.s32.totalorder %s439, %s455
      %p457 = scmp.eq.s32.totalorder %s43, 0
      %p458 = por %p456, %p457
      %p459 = scmp.le.s32.totalorder 1, %s37
      %p460 = scmp.lt.s32.totalorder %s37, 5
      %p461 = pnand %p459, %p460
      %p462 = pneg %p461
      // Predicated region
      $region9: #{tpu_custom_call.1} parent=5 // pred_check
        _
      $region10: #{tpu_custom_call.1} parent=5 // pred_check_branch
        %464 = sbr.rel (%p461) target = $region12
      $region11: #{tpu_custom_call.1} parent=5 // pred_region
        %s465 = ssub.s32 %s37, 1
        // Predicated region
        $region13: #{tpu_custom_call.1} parent=11 // pred_check
          %p466 = pneg %p75
        $region14: #{tpu_custom_call.1} parent=11 // pred_check_branch
          %468 = sbr.rel (%p466) target = $region16
        $region15: #{tpu_custom_call.1} parent=11 // pred_region
          %s470 = ssub.s32 256, 256
          %471 = vsyncadd [#allocation5], %s470
          %s472 = smul.addr %s46, 2
          %s473 = smul.addr %s472, 128
          %s474 = scalar_lea.hbm %s0, %s473
          %s475 = sshll.u32 [#allocation4], 4
          %s476 = int_to_ptr.vmem [resolvable:$true] %s475
          %481 = dma.hbm_to_vmem [thread:$0]  %s474, 256, %s476, [#allocation5], 128, 128, 8
        $region16: #{tpu_custom_call.1} parent=11 // pred_fallthru
          _
        // Predicated region
        $region17: #{tpu_custom_call.1} parent=11 // pred_check
          %p482 = pneg %p150
        $region18: #{tpu_custom_call.1} parent=11 // pred_check_branch
          %484 = sbr.rel (%p482) target = $region20
        $region19: #{tpu_custom_call.1} parent=11 // pred_region
          %s486 = ssub.s32 16, 16
          %487 = vsyncadd [#allocation11], %s486
          %s489 = sshll.u32 [#allocation10], 4
          %s490 = int_to_ptr.vmem [resolvable:$true] %s489
          %492 = dma.hbm_to_vmem [thread:$0]  %s3, 16, %s490, [#allocation11]
        $region20: #{tpu_custom_call.1} parent=11 // pred_fallthru
          _
        // Predicated region
        $region21: #{tpu_custom_call.1} parent=11 // pred_check
          %p493 = pneg %p171
        $region22: #{tpu_custom_call.1} parent=11 // pred_check_branch
          %495 = sbr.rel (%p493) target = $region24
        $region23: #{tpu_custom_call.1} parent=11 // pred_region
          %s497 = ssub.s32 16, 16
          %498 = vsyncadd [#allocation11], %s497
          %s500 = sshll.u32 [#allocation12], 4
          %s501 = int_to_ptr.vmem [resolvable:$true] %s500
          %503 = dma.hbm_to_vmem [thread:$0]  %s4, 16, %s501, [#allocation11]
        $region24: #{tpu_custom_call.1} parent=11 // pred_fallthru
          _
        // Predicated region
        $region25: #{tpu_custom_call.1} parent=11 // pred_check
          %p504 = pneg %p192
        $region26: #{tpu_custom_call.1} parent=11 // pred_check_branch
          %506 = sbr.rel (%p504) target = $region28
        $region27: #{tpu_custom_call.1} parent=11 // pred_region
          %s508 = ssub.s32 16, 16
          %509 = vsyncadd [#allocation14], %s508
          %s511 = sshll.u32 [#allocation13], 4
          %s512 = int_to_ptr.vmem [resolvable:$true] %s511
          %514 = dma.hbm_to_vmem [thread:$0]  %s5, 16, %s512, [#allocation14]
        $region28: #{tpu_custom_call.1} parent=11 // pred_fallthru
          _
        // Predicated region
        $region29: #{tpu_custom_call.1} parent=11 // pred_check
          %p515 = pneg %p213
        $region30: #{tpu_custom_call.1} parent=11 // pred_check_branch
          %517 = sbr.rel (%p515) target = $region32
        $region31: #{tpu_custom_call.1} parent=11 // pred_region
          %s519 = ssub.s32 16, 16
          %520 = vsyncadd [#allocation14], %s519
          %s522 = sshll.u32 [#allocation15], 4
          %s523 = int_to_ptr.vmem [resolvable:$true] %s522
          %525 = dma.hbm_to_vmem [thread:$0]  %s6, 16, %s523, [#allocation14]
        $region32: #{tpu_custom_call.1} parent=11 // pred_fallthru
          _
        // Predicated region
        $region33: #{tpu_custom_call.1} parent=11 // pred_check
          %p526 = pneg %p234
        $region34: #{tpu_custom_call.1} parent=11 // pred_check_branch
          %528 = sbr.rel (%p526) target = $region36
        $region35: #{tpu_custom_call.1} parent=11 // pred_region
          %s530 = ssub.s32 1024, 1024
          %531 = vsyncadd [#allocation17], %s530
          %s532 = sshll.u32 [#allocation16], 4
          %s533 = int_to_ptr.vmem [resolvable:$true] %s532
          %538 = dma.hbm_to_vmem [thread:$0]  %s7, 1024, %s533, [#allocation17], 64, 64, 4
        $region36: #{tpu_custom_call.1} parent=11 // pred_fallthru
          _
        // Predicated region
        $region37: #{tpu_custom_call.1} parent=11 // pred_check
          %p539 = pneg %p255
        $region38: #{tpu_custom_call.1} parent=11 // pred_check_branch
          %541 = sbr.rel (%p539) target = $region40
        $region39: #{tpu_custom_call.1} parent=11 // pred_region
          %s543 = ssub.s32 16, 16
          %544 = vsyncadd [#allocation17], %s543
          %s546 = sshll.u32 [#allocation18], 4
          %s547 = int_to_ptr.vmem [resolvable:$true] %s546
          %549 = dma.hbm_to_vmem [thread:$0]  %s8, 16, %s547, [#allocation17]
        $region40: #{tpu_custom_call.1} parent=11 // pred_fallthru
          _
        // Predicated region
        $region41: #{tpu_custom_call.1} parent=11 // pred_check
          %p550 = pneg %p276
        $region42: #{tpu_custom_call.1} parent=11 // pred_check_branch
          %552 = sbr.rel (%p550) target = $region44
        $region43: #{tpu_custom_call.1} parent=11 // pred_region
          %s554 = ssub.s32 2048, 2048
          %555 = vsyncadd [#allocation20], %s554
          %s556 = sshll.u32 [#allocation19], 4
          %s557 = int_to_ptr.vmem [resolvable:$true] %s556
          %562 = dma.hbm_to_vmem [thread:$0]  %s9, 2048, %s557, [#allocation20], 128, 128, 8
        $region44: #{tpu_custom_call.1} parent=11 // pred_fallthru
          _
        // Predicated region
        $region45: #{tpu_custom_call.1} parent=11 // pred_check
          %p563 = pneg %p297
        $region46: #{tpu_custom_call.1} parent=11 // pred_check_branch
          %565 = sbr.rel (%p563) target = $region48
        $region47: #{tpu_custom_call.1} parent=11 // pred_region
          %s567 = ssub.s32 32, 32
          %568 = vsyncadd [#allocation20], %s567
          %s570 = sshll.u32 [#allocation21], 4
          %s571 = int_to_ptr.vmem [resolvable:$true] %s570
          %573 = dma.hbm_to_vmem [thread:$0]  %s10, 32, %s571, [#allocation20]
        $region48: #{tpu_custom_call.1} parent=11 // pred_fallthru
          _
        // Predicated region
        $region49: #{tpu_custom_call.1} parent=11 // pred_check
          %p574 = pneg %p318
        $region50: #{tpu_custom_call.1} parent=11 // pred_check_branch
          %576 = sbr.rel (%p574) target = $region52
        $region51: #{tpu_custom_call.1} parent=11 // pred_region
          %s578 = ssub.s32 1024, 1024
          %579 = vsyncadd [#allocation23], %s578
          %s580 = sshll.u32 [#allocation22], 4
          %s581 = int_to_ptr.vmem [resolvable:$true] %s580
          %586 = dma.hbm_to_vmem [thread:$0]  %s11, 1024, %s581, [#allocation23], 64, 64, 4
        $region52: #{tpu_custom_call.1} parent=11 // pred_fallthru
          _
        // Predicated region
        $region53: #{tpu_custom_call.1} parent=11 // pred_check
          %p587 = pneg %p339
        $region54: #{tpu_custom_call.1} parent=11 // pred_check_branch
          %589 = sbr.rel (%p587) target = $region56
        $region55: #{tpu_custom_call.1} parent=11 // pred_region
          %s591 = ssub.s32 16, 16
          %592 = vsyncadd [#allocation23], %s591
          %s594 = sshll.u32 [#allocation24], 4
          %s595 = int_to_ptr.vmem [resolvable:$true] %s594
          %597 = dma.hbm_to_vmem [thread:$0]  %s12, 16, %s595, [#allocation23]
        $region56: #{tpu_custom_call.1} parent=11 // pred_fallthru
          _
        // Predicated region
        $region57: #{tpu_custom_call.1} parent=11 // pred_check
          %p598 = pneg %p360
        $region58: #{tpu_custom_call.1} parent=11 // pred_check_branch
          %600 = sbr.rel (%p598) target = $region60
        $region59: #{tpu_custom_call.1} parent=11 // pred_region
          %s602 = ssub.s32 2048, 2048
          %603 = vsyncadd [#allocation26], %s602
          %s604 = sshll.u32 [#allocation25], 4
          %s605 = int_to_ptr.vmem [resolvable:$true] %s604
          %610 = dma.hbm_to_vmem [thread:$0]  %s13, 2048, %s605, [#allocation26], 128, 128, 8
        $region60: #{tpu_custom_call.1} parent=11 // pred_fallthru
          _
        // Predicated region
        $region61: #{tpu_custom_call.1} parent=11 // pred_check
          %p611 = pneg %p381
        $region62: #{tpu_custom_call.1} parent=11 // pred_check_branch
          %613 = sbr.rel (%p611) target = $region64
        $region63: #{tpu_custom_call.1} parent=11 // pred_region
          %s615 = ssub.s32 32, 32
          %616 = vsyncadd [#allocation26], %s615
          %s618 = sshll.u32 [#allocation27], 4
          %s619 = int_to_ptr.vmem [resolvable:$true] %s618
          %621 = dma.hbm_to_vmem [thread:$0]  %s14, 32, %s619, [#allocation26]
        $region64: #{tpu_custom_call.1} parent=11 // pred_fallthru
          _
        // Predicated region
        $region65: #{tpu_custom_call.1} parent=11 // pred_check
          %p622 = pneg %p402
        $region66: #{tpu_custom_call.1} parent=11 // pred_check_branch
          %624 = sbr.rel (%p622) target = $region68
        $region67: #{tpu_custom_call.1} parent=11 // pred_region
          %s626 = ssub.s32 2048, 2048
          %627 = vsyncadd [#allocation29], %s626
          %s628 = sshll.u32 [#allocation28], 4
          %s629 = int_to_ptr.vmem [resolvable:$true] %s628
          %634 = dma.hbm_to_vmem [thread:$0]  %s15, 2048, %s629, [#allocation29], 64, 64, 4
        $region68: #{tpu_custom_call.1} parent=11 // pred_fallthru
          _
        // Predicated region
        $region69: #{tpu_custom_call.1} parent=11 // pred_check
          %p635 = pneg %p423
        $region70: #{tpu_custom_call.1} parent=11 // pred_check_branch
          %637 = sbr.rel (%p635) target = $region72
        $region71: #{tpu_custom_call.1} parent=11 // pred_region
          %s639 = ssub.s32 16, 16
          %640 = vsyncadd [#allocation29], %s639
          %s642 = sshll.u32 [#allocation30], 4
          %s643 = int_to_ptr.vmem [resolvable:$true] %s642
          %645 = dma.hbm_to_vmem [thread:$0]  %s16, 16, %s643, [#allocation29]
        $region72: #{tpu_custom_call.1} parent=11 // pred_fallthru
          _
      $region12: #{tpu_custom_call.1} parent=5 // pred_fallthru
        _
      %p646 = scmp.lt.s32.totalorder %s37, 4
      // Predicated region
      $region73: #{tpu_custom_call.1} parent=5 // pred_check
        %p647 = pneg %p646
      $region74: #{tpu_custom_call.1} parent=5 // pred_check_branch
        %649 = sbr.rel (%p647) target = $region76
      $region75: #{tpu_custom_call.1} parent=5 // pred_region
        // Predicated region
        $region77: #{tpu_custom_call.1} parent=75 // pred_check
          %p650 = pneg %p97
        $region78: #{tpu_custom_call.1} parent=75 // pred_check_branch
          %652 = sbr.rel (%p650) target = $region80
        $region79: #{tpu_custom_call.1} parent=75 // pred_region
          %s653 = sand.u32 %s37, 1
          %s654 = scalar_lea.sflag [#allocation8], %s653
          %s655 = sand.u32 %s87, 1
          %s656 = smul.addr %s655, 8
          %s657 = scalar_lea.vmem [#allocation7], %s656
          %s659 = ssub.s32 128, 128
          %660 = vsyncadd %s654, %s659
          %s661 = smul.addr %s44, 2
          %s662 = sadd.s32 %s45, %s661
          %s663 = smul.addr %s662, 128
          %s664 = scalar_lea.hbm %s1, %s663
          %s666 = sshll.u32 %s657, 4
          %s667 = int_to_ptr.vmem [resolvable:$true] %s666
          %669 = dma.hbm_to_vmem [thread:$0]  %s664, 128, %s667, %s654
        $region80: #{tpu_custom_call.1} parent=75 // pred_fallthru
          _
        // Predicated region
        $region81: #{tpu_custom_call.1} parent=75 // pred_check
          %p670 = pneg %p123
        $region82: #{tpu_custom_call.1} parent=75 // pred_check_branch
          %672 = sbr.rel (%p670) target = $region84
        $region83: #{tpu_custom_call.1} parent=75 // pred_region
          %s673 = sand.u32 %s37, 1
          %s674 = scalar_lea.sflag [#allocation8], %s673
          %s675 = sand.u32 %s113, 1
          %s676 = scalar_lea.vmem [#allocation9], %s675
          %s678 = ssub.s32 16, 16
          %679 = vsyncadd %s674, %s678
          %s680 = smul.addr %s44, 16
          %s681 = scalar_lea.hbm %s2, %s680
          %s683 = sshll.u32 %s676, 4
          %s684 = int_to_ptr.vmem [resolvable:$true] %s683
          %686 = dma.hbm_to_vmem [thread:$0]  %s681, 16, %s684, %s674
        $region84: #{tpu_custom_call.1} parent=75 // pred_fallthru
          _
      $region76: #{tpu_custom_call.1} parent=5 // pred_fallthru
        _
      %p687 = scmp.le.s32.totalorder 1, %s37
      %p688 = scmp.lt.s32.totalorder %s37, 5
      %p689 = pnand %p687, %p688
      %p690 = pneg %p689
      // Predicated region
      $region85: #{tpu_custom_call.1} parent=5 // pred_check
        _
      $region86: #{tpu_custom_call.1} parent=5 // pred_check_branch
        %692 = sbr.rel (%p689) target = $region88
      $region87: #{tpu_custom_call.1} parent=5 // pred_region
        %s693 = ssub.s32 %s37, 1
        // Predicated region
        $region89: #{tpu_custom_call.1} parent=87 // pred_check
          %p694 = pneg %p75
        $region90: #{tpu_custom_call.1} parent=87 // pred_check_branch
          %696 = sbr.rel (%p694) target = $region92
        $region91: #{tpu_custom_call.1} parent=87 // pred_region
          %697 = dma.done [#allocation5], 256
        $region92: #{tpu_custom_call.1} parent=87 // pred_fallthru
          _
        %s698 = sand.u32 %s42, 1
        %s699 = scalar_lea.sflag [#allocation8], %s698
        %s700 = sand.u32 %s90, 1
        %s701 = smul.addr %s700, 8
        %s702 = scalar_lea.vmem [#allocation7], %s701
        // Predicated region
        $region93: #{tpu_custom_call.1} parent=87 // pred_check
          %p703 = pneg %p103
        $region94: #{tpu_custom_call.1} parent=87 // pred_check_branch
          %705 = sbr.rel (%p703) target = $region96
        $region95: #{tpu_custom_call.1} parent=87 // pred_region
          %706 = dma.done %s699, 128
        $region96: #{tpu_custom_call.1} parent=87 // pred_fallthru
          _
        %s707 = sand.u32 %s42, 1
        %s708 = scalar_lea.sflag [#allocation8], %s707
        %s709 = sand.u32 %s116, 1
        %s710 = scalar_lea.vmem [#allocation9], %s709
        // Predicated region
        $region97: #{tpu_custom_call.1} parent=87 // pred_check
          %p711 = pneg %p129
        $region98: #{tpu_custom_call.1} parent=87 // pred_check_branch
          %713 = sbr.rel (%p711) target = $region100
        $region99: #{tpu_custom_call.1} parent=87 // pred_region
          %714 = dma.done %s708, 16
        $region100: #{tpu_custom_call.1} parent=87 // pred_fallthru
          _
        // Predicated region
        $region101: #{tpu_custom_call.1} parent=87 // pred_check
          %p715 = pneg %p150
        $region102: #{tpu_custom_call.1} parent=87 // pred_check_branch
          %717 = sbr.rel (%p715) target = $region104
        $region103: #{tpu_custom_call.1} parent=87 // pred_region
          %718 = dma.done [#allocation11], 16
        $region104: #{tpu_custom_call.1} parent=87 // pred_fallthru
          _
        // Predicated region
        $region105: #{tpu_custom_call.1} parent=87 // pred_check
          %p719 = pneg %p171
        $region106: #{tpu_custom_call.1} parent=87 // pred_check_branch
          %721 = sbr.rel (%p719) target = $region108
        $region107: #{tpu_custom_call.1} parent=87 // pred_region
          %722 = dma.done [#allocation11], 16
        $region108: #{tpu_custom_call.1} parent=87 // pred_fallthru
          _
        // Predicated region
        $region109: #{tpu_custom_call.1} parent=87 // pred_check
          %p723 = pneg %p192
        $region110: #{tpu_custom_call.1} parent=87 // pred_check_branch
          %725 = sbr.rel (%p723) target = $region112
        $region111: #{tpu_custom_call.1} parent=87 // pred_region
          %726 = dma.done [#allocation14], 16
        $region112: #{tpu_custom_call.1} parent=87 // pred_fallthru
          _
        // Predicated region
        $region113: #{tpu_custom_call.1} parent=87 // pred_check
          %p727 = pneg %p213
        $region114: #{tpu_custom_call.1} parent=87 // pred_check_branch
          %729 = sbr.rel (%p727) target = $region116
        $region115: #{tpu_custom_call.1} parent=87 // pred_region
          %730 = dma.done [#allocation14], 16
        $region116: #{tpu_custom_call.1} parent=87 // pred_fallthru
          _
        // Predicated region
        $region117: #{tpu_custom_call.1} parent=87 // pred_check
          %p731 = pneg %p234
        $region118: #{tpu_custom_call.1} parent=87 // pred_check_branch
          %733 = sbr.rel (%p731) target = $region120
        $region119: #{tpu_custom_call.1} parent=87 // pred_region
          %734 = dma.done [#allocation17], 1024
        $region120: #{tpu_custom_call.1} parent=87 // pred_fallthru
          _
        // Predicated region
        $region121: #{tpu_custom_call.1} parent=87 // pred_check
          %p735 = pneg %p255
        $region122: #{tpu_custom_call.1} parent=87 // pred_check_branch
          %737 = sbr.rel (%p735) target = $region124
        $region123: #{tpu_custom_call.1} parent=87 // pred_region
          %738 = dma.done [#allocation17], 16
        $region124: #{tpu_custom_call.1} parent=87 // pred_fallthru
          _
        // Predicated region
        $region125: #{tpu_custom_call.1} parent=87 // pred_check
          %p739 = pneg %p276
        $region126: #{tpu_custom_call.1} parent=87 // pred_check_branch
          %741 = sbr.rel (%p739) target = $region128
        $region127: #{tpu_custom_call.1} parent=87 // pred_region
          %742 = dma.done [#allocation20], 2048
        $region128: #{tpu_custom_call.1} parent=87 // pred_fallthru
          _
        // Predicated region
        $region129: #{tpu_custom_call.1} parent=87 // pred_check
          %p743 = pneg %p297
        $region130: #{tpu_custom_call.1} parent=87 // pred_check_branch
          %745 = sbr.rel (%p743) target = $region132
        $region131: #{tpu_custom_call.1} parent=87 // pred_region
          %746 = dma.done [#allocation20], 32
        $region132: #{tpu_custom_call.1} parent=87 // pred_fallthru
          _
        // Predicated region
        $region133: #{tpu_custom_call.1} parent=87 // pred_check
          %p747 = pneg %p318
        $region134: #{tpu_custom_call.1} parent=87 // pred_check_branch
          %749 = sbr.rel (%p747) target = $region136
        $region135: #{tpu_custom_call.1} parent=87 // pred_region
          %750 = dma.done [#allocation23], 1024
        $region136: #{tpu_custom_call.1} parent=87 // pred_fallthru
          _
        // Predicated region
        $region137: #{tpu_custom_call.1} parent=87 // pred_check
          %p751 = pneg %p339
        $region138: #{tpu_custom_call.1} parent=87 // pred_check_branch
          %753 = sbr.rel (%p751) target = $region140
        $region139: #{tpu_custom_call.1} parent=87 // pred_region
          %754 = dma.done [#allocation23], 16
        $region140: #{tpu_custom_call.1} parent=87 // pred_fallthru
          _
        // Predicated region
        $region141: #{tpu_custom_call.1} parent=87 // pred_check
          %p755 = pneg %p360
        $region142: #{tpu_custom_call.1} parent=87 // pred_check_branch
          %757 = sbr.rel (%p755) target = $region144
        $region143: #{tpu_custom_call.1} parent=87 // pred_region
          %758 = dma.done [#allocation26], 2048
        $region144: #{tpu_custom_call.1} parent=87 // pred_fallthru
          _
        // Predicated region
        $region145: #{tpu_custom_call.1} parent=87 // pred_check
          %p759 = pneg %p381
        $region146: #{tpu_custom_call.1} parent=87 // pred_check_branch
          %761 = sbr.rel (%p759) target = $region148
        $region147: #{tpu_custom_call.1} parent=87 // pred_region
          %762 = dma.done [#allocation26], 32
        $region148: #{tpu_custom_call.1} parent=87 // pred_fallthru
          _
        // Predicated region
        $region149: #{tpu_custom_call.1} parent=87 // pred_check
          %p763 = pneg %p402
        $region150: #{tpu_custom_call.1} parent=87 // pred_check_branch
          %765 = sbr.rel (%p763) target = $region152
        $region151: #{tpu_custom_call.1} parent=87 // pred_region
          %766 = dma.done [#allocation29], 2048
        $region152: #{tpu_custom_call.1} parent=87 // pred_fallthru
          _
        // Predicated region
        $region153: #{tpu_custom_call.1} parent=87 // pred_check
          %p767 = pneg %p423
        $region154: #{tpu_custom_call.1} parent=87 // pred_check_branch
          %769 = sbr.rel (%p767) target = $region156
        $region155: #{tpu_custom_call.1} parent=87 // pred_region
          %770 = dma.done [#allocation29], 16
        $region156: #{tpu_custom_call.1} parent=87 // pred_fallthru
          _
        %p771 = pneg %p75
        %p772 = pneg %p72
        %s773 = sand.u32 %s42, 1
        %s774 = scalar_lea.sflag [#allocation8], %s773
        %s775 = sand.u32 %s90, 1
        %s776 = smul.addr %s775, 8
        %s777 = scalar_lea.vmem [#allocation7], %s776
        %p778 = pneg %p103
        %p779 = pneg %p100
        %s780 = sand.u32 %s42, 1
        %s781 = scalar_lea.sflag [#allocation8], %s780
        %s782 = sand.u32 %s116, 1
        %s783 = scalar_lea.vmem [#allocation9], %s782
        %p784 = pneg %p129
        %p785 = pneg %p126
        %p786 = pneg %p150
        %p787 = pneg %p147
        %p788 = pneg %p171
        %p789 = pneg %p168
        %p790 = pneg %p192
        %p791 = pneg %p189
        %p792 = pneg %p213
        %p793 = pneg %p210
        %p794 = pneg %p234
        %p795 = pneg %p231
        %p796 = pneg %p255
        %p797 = pneg %p252
        %p798 = pneg %p276
        %p799 = pneg %p273
        %p800 = pneg %p297
        %p801 = pneg %p294
        %p802 = pneg %p318
        %p803 = pneg %p315
        %p804 = pneg %p339
        %p805 = pneg %p336
        %p806 = pneg %p360
        %p807 = pneg %p357
        %p808 = pneg %p381
        %p809 = pneg %p378
        %p810 = pneg %p402
        %p811 = pneg %p399
        %p812 = pneg %p423
        %p813 = pneg %p420
        %p814 = pneg %p451
        %p815 = pneg %p448
        %s816 = sand.u32 %s438, 1
        %s817 = scalar_lea.sflag [#allocation6], %s816
        %s818 = sand.u32 %s438, 1
        %s819 = smul.addr %s818, 8
        %s820 = scalar_lea.vmem [#allocation31], %s819
        %v822 = vld [vmem:[#allocation10] sm:$0x1]
        %v823 = vld [vmem:[#allocation12] sm:$0x1]
        %p824 = scmp.eq.s32.totalorder %s47, 0
        // Predicated region
        $region157: #{tpu_custom_call.1} parent=87 // pred_check
          %p825 = pneg %p824
        $region158: #{tpu_custom_call.1} parent=87 // pred_check_branch
          %827 = sbr.rel (%p825) target = $region160
        $region159: #{tpu_custom_call.1} parent=87 // pred_region
          %v828 = vld [vmem:[#allocation4] sm:$0xff]
          %v829 = vld [vmem:[#allocation4 + $0x8] sm:$0xff]
          %830 = vadd.xlane.f32.xlu0 %v828
          %v831 = vpop.xlane.xlu0 %830
          %832 = vadd.xlane.f32.xlu0 %v829
          %v833 = vpop.xlane.xlu0 %832
          %v834 = vrcp.pop 128.0
          %v835 = vmul.f32 %v831, %v834
          %v836 = vmul.f32 %v833, %v834
          %v837 = vsub.f32 %v828, %v835
          %v838 = vsub.f32 %v829, %v836
          %v839 = vmul.f32 %v837, %v837
          %v840 = vmul.f32 %v838, %v838
          %841 = vadd.xlane.f32.xlu0 %v839
          %v842 = vpop.xlane.xlu0 %841
          %843 = vadd.xlane.f32.xlu0 %v840
          %v844 = vpop.xlane.xlu0 %843
          %v845 = vmul.f32 %v842, %v834
          %v846 = vmul.f32 %v844, %v834
          %v847 = vadd.f32 %v845, 1e-12
          %v848 = vadd.f32 %v846, 1e-12
          %v849 = vrsqrt.pop %v847
          %v850 = vrsqrt.pop %v848
          %v851 = vmul.f32 %v837, %v849
          %v852 = vmul.f32 %v838, %v850
          %v854 = vlaneseq
          %v855 = vshrl.u32 %v854, 7
          %v856 = vsub.s32 0, %v855
          %v857 = vrot.slane %v822, %v856
          %v859 = vmul.f32 %v851, %v857
          %v860 = vmul.f32 %v852, %v857
          %v862 = vlaneseq
          %v863 = vshrl.u32 %v862, 7
          %v864 = vsub.s32 0, %v863
          %v865 = vrot.slane %v823, %v864
          %v867 = vadd.f32 %v859, %v865
          %v868 = vadd.f32 %v860, %v865
          %v869 = vpack.c.bf16 %v868, %v867
          %v870 = vld [vmem:[#allocation19] sm:$0xff]
          %v871 = vld [vmem:[#allocation19 + $0x8] sm:$0xff]
          %v872 = vld [vmem:[#allocation19 + $0x10] sm:$0xff]
          %v873 = vld [vmem:[#allocation19 + $0x18] sm:$0xff]
          %v874 = vld [vmem:[#allocation19 + $0x20] sm:$0xff]
          %v875 = vld [vmem:[#allocation19 + $0x28] sm:$0xff]
          %v876 = vld [vmem:[#allocation19 + $0x30] sm:$0xff]
          %v877 = vld [vmem:[#allocation19 + $0x38] sm:$0xff]
          %v878 = vld [vmem:[#allocation19 + $0x40] sm:$0xff]
          %v879 = vld [vmem:[#allocation19 + $0x48] sm:$0xff]
          %v880 = vld [vmem:[#allocation19 + $0x50] sm:$0xff]
          %v881 = vld [vmem:[#allocation19 + $0x58] sm:$0xff]
          %v882 = vld [vmem:[#allocation19 + $0x60] sm:$0xff]
          %v883 = vld [vmem:[#allocation19 + $0x68] sm:$0xff]
          %v884 = vld [vmem:[#allocation19 + $0x70] sm:$0xff]
          %v885 = vld [vmem:[#allocation19 + $0x78] sm:$0xff]
          %v886 = vld [vmem:[#allocation21] sm:$0x3]
          %v888 = vlaneseq
          %v889 = vshrl.u32 %v888, 7
          %v890 = vsub.s32 0, %v889
          %v891 = vrot.slane %v886, %v890
          %v892 = vlaneseq
          %v893 = vshrl.u32 %v892, 7
          %v894 = vsub.s32 1, %v893
          %v895 = vrot.slane %v886, %v894
          %v914 = vunpack.c.l.b16 %v870
          %v915 = vunpack.c.h.b16 %v870
          %v916 = vunpack.c.l.b16 %v871
          %v917 = vunpack.c.h.b16 %v871
          %v918 = vunpack.c.l.b16 %v872
          %v919 = vunpack.c.h.b16 %v872
          %v920 = vunpack.c.l.b16 %v873
          %v921 = vunpack.c.h.b16 %v873
          %v922 = vunpack.c.l.b16 %v874
          %v923 = vunpack.c.h.b16 %v874
          %v924 = vunpack.c.l.b16 %v875
          %v925 = vunpack.c.h.b16 %v875
          %v926 = vunpack.c.l.b16 %v876
          %v927 = vunpack.c.h.b16 %v876
          %v928 = vunpack.c.l.b16 %v877
          %v929 = vunpack.c.h.b16 %v877
          %v930 = vunpack.c.l.b16 %v878
          %v931 = vunpack.c.h.b16 %v878
          %v932 = vunpack.c.l.b16 %v879
          %v933 = vunpack.c.h.b16 %v879
          %v934 = vunpack.c.l.b16 %v880
          %v935 = vunpack.c.h.b16 %v880
          %v936 = vunpack.c.l.b16 %v881
          %v937 = vunpack.c.h.b16 %v881
          %v938 = vunpack.c.l.b16 %v882
          %v939 = vunpack.c.h.b16 %v882
          %v940 = vunpack.c.l.b16 %v883
          %v941 = vunpack.c.h.b16 %v883
          %v942 = vunpack.c.l.b16 %v884
          %v943 = vunpack.c.h.b16 %v884
          %v944 = vunpack.c.l.b16 %v885
          %v945 = vunpack.c.h.b16 %v885
          %v946 = vpack.c.b16 %v916, %v914
          %v947 = vpack.c.b16 %v917, %v915
          %v948 = vpack.c.b16 %v920, %v918
          %v949 = vpack.c.b16 %v921, %v919
          %v950 = vpack.c.b16 %v924, %v922
          %v951 = vpack.c.b16 %v925, %v923
          %v952 = vpack.c.b16 %v928, %v926
          %v953 = vpack.c.b16 %v929, %v927
          %v954 = vpack.c.b16 %v932, %v930
          %v955 = vpack.c.b16 %v933, %v931
          %v956 = vpack.c.b16 %v936, %v934
          %v957 = vpack.c.b16 %v937, %v935
          %v958 = vpack.c.b16 %v940, %v938
          %v959 = vpack.c.b16 %v941, %v939
          %v960 = vpack.c.b16 %v944, %v942
          %v961 = vpack.c.b16 %v945, %v943
          %978 = vmatprep.subr.bf16.mxu0 %v947
          %979 = vmatpush1.bf16.msra.mxu0 %v946
          %980 = vmatprep.subr.bf16.mxu0 %v949
          %981 = vmatpush1.bf16.msra.mxu0 %v948
          %982 = vmatprep.subr.bf16.mxu0 %v951
          %983 = vmatpush1.bf16.msra.mxu0 %v950
          %984 = vmatprep.subr.bf16.mxu0 %v953
          %985 = vmatpush1.bf16.msra.mxu0 %v952
          %986 = vmatprep.subr.bf16.mxu0 %v955
          %987 = vmatpush1.bf16.msra.mxu0 %v954
          %988 = vmatprep.subr.bf16.mxu0 %v957
          %989 = vmatpush1.bf16.msra.mxu0 %v956
          %990 = vmatprep.subr.bf16.mxu0 %v959
          %991 = vmatpush1.bf16.msra.mxu0 %v958
          %992 = vmatprep.subr.bf16.mxu0 %v961
          %993 = vmatpush1.bf16.msra.mxu0 %v960
          %994 = vmatprep.subr.bf16.mxu0 0
          %995 = vmatpush1.bf16.msra.mxu0 0
          %996 = vmatprep.subr.bf16.mxu0 0
          %997 = vmatpush1.bf16.msra.mxu0 0
          %998 = vmatprep.subr.bf16.mxu0 0
          %999 = vmatpush1.bf16.msra.mxu0 0
          %1000 = vmatprep.subr.bf16.mxu0 0
          %1001 = vmatpush1.bf16.msra.mxu0 0
          %1002 = vmatprep.subr.bf16.mxu0 0
          %1003 = vmatpush1.bf16.msra.mxu0 0
          %1004 = vmatprep.subr.bf16.mxu0 0
          %1005 = vmatpush1.bf16.msra.mxu0 0
          %1006 = vmatprep.subr.bf16.mxu0 0
          %1007 = vmatpush1.bf16.msra.mxu0 0
          %1008 = vmatprep.subr.bf16.mxu0 0
          %1009 = vmatpush1.bf16.msra.mxu0 0
          %1010 = vmatprep.mubr.bf16.mxu0 0
          %1011 = vmatmul.mubr.bf16.gmra.mrb[0].mxu0 %v869
          %v1012 = vpop.f32.mrb[0].mxu0
          %v1013 = vadd.f32 %v891, %v1012
          %v1014 = vpop.f32.mrb[0].mxu0
          %v1015 = vadd.f32 %v895, %v1014
          %v1016 = vpop.f32.mrb[0].mxu0
          %v1017 = vadd.f32 %v891, %v1016
          %v1018 = vpop.f32.mrb[0].mxu0
          %v1019 = vadd.f32 %v895, %v1018
          %1020 = vdwg.mxu0
          %1021 = vxpose.xlu0.b32.start [1/16] %v1013, 128
          %1022 = vxpose.xlu0.b32.cont [2/16] %v1017, 128
          %1023 = vxpose.xlu0.b32.cont [3/16] 0.0, 128
          %1024 = vxpose.xlu0.b32.cont [4/16] 0.0, 128
          %1025 = vxpose.xlu0.b32.cont [5/16] 0.0, 128
          %1026 = vxpose.xlu0.b32.cont [6/16] 0.0, 128
          %1027 = vxpose.xlu0.b32.cont [7/16] 0.0, 128
          %1028 = vxpose.xlu0.b32.cont [8/16] 0.0, 128
          %1029 = vxpose.xlu0.b32.cont [9/16] 0.0, 128
          %1030 = vxpose.xlu0.b32.cont [10/16] 0.0, 128
          %1031 = vxpose.xlu0.b32.cont [11/16] 0.0, 128
          %1032 = vxpose.xlu0.b32.cont [12/16] 0.0, 128
          %1033 = vxpose.xlu0.b32.cont [13/16] 0.0, 128
          %1034 = vxpose.xlu0.b32.cont [14/16] 0.0, 128
          %1035 = vxpose.xlu0.b32.cont [15/16] 0.0, 128
          %1036 = vxpose.xlu0.b32.end [16/16] 0.0, 128
          %v1037 = vpop.trf.xlu0
          %v1038 = vpop.trf.xlu0
          %v1039 = vpop.trf.xlu0
          %v1040 = vpop.trf.xlu0
          %v1041 = vpop.trf.xlu0
          %v1042 = vpop.trf.xlu0
          %v1043 = vpop.trf.xlu0
          %v1044 = vpop.trf.xlu0
          %v1045 = vpop.trf.xlu0
          %v1046 = vpop.trf.xlu0
          %v1047 = vpop.trf.xlu0
          %v1048 = vpop.trf.xlu0
          %v1049 = vpop.trf.xlu0
          %v1050 = vpop.trf.xlu0
          %v1051 = vpop.trf.xlu0
          %v1052 = vpop.trf.xlu0
          %v1053 = vpack.c.bf16 %v1038, %v1037
          %v1054 = vpack.c.bf16 %v1040, %v1039
          %v1055 = vpack.c.bf16 %v1042, %v1041
          %v1056 = vpack.c.bf16 %v1044, %v1043
          %v1057 = vpack.c.bf16 %v1046, %v1045
          %v1058 = vpack.c.bf16 %v1048, %v1047
          %v1059 = vpack.c.bf16 %v1050, %v1049
          %v1060 = vpack.c.bf16 %v1052, %v1051
          %v1061 = vpack.c.bf16 %v1019, %v1015
          %vm1062 = vcmask 130048
          %1063 = vst.msk [vmem:[#allocation2] sm:$0xff] %vm1062, %v1053
          %1064 = vst.msk [vmem:[#allocation2 + $0x8] sm:$0xff] %vm1062, %v1054
          %1065 = vst.msk [vmem:[#allocation2 + $0x10] sm:$0xff] %vm1062, %v1055
          %1066 = vst.msk [vmem:[#allocation2 + $0x18] sm:$0xff] %vm1062, %v1056
          %1067 = vst.msk [vmem:[#allocation2 + $0x20] sm:$0xff] %vm1062, %v1057
          %1068 = vst.msk [vmem:[#allocation2 + $0x28] sm:$0xff] %vm1062, %v1058
          %1069 = vst.msk [vmem:[#allocation2 + $0x30] sm:$0xff] %vm1062, %v1059
          %1070 = vst.msk [vmem:[#allocation2 + $0x38] sm:$0xff] %vm1062, %v1060
          %1071 = vst [vmem:[#allocation3] sm:$0xff] %v1061
        $region160: #{tpu_custom_call.1} parent=87 // pred_fallthru
          _
        %v1072 = vld [vmem:[%s702] sm:$0xff]
        %1073 = vadd.xlane.f32.xlu0 %v1072
        %v1074 = vpop.xlane.xlu0 %1073
        %v1075 = vrcp.pop 128.0
        %v1076 = vmul.f32 %v1074, %v1075
        %v1077 = vsub.f32 %v1072, %v1076
        %v1078 = vmul.f32 %v1077, %v1077
        %1079 = vadd.xlane.f32.xlu0 %v1078
        %v1080 = vpop.xlane.xlu0 %1079
        %v1081 = vmul.f32 %v1080, %v1075
        %v1082 = vadd.f32 %v1081, 1e-12
        %v1083 = vrsqrt.pop %v1082
        %v1084 = vmul.f32 %v1077, %v1083
        %v1086 = vlaneseq
        %v1087 = vshrl.u32 %v1086, 7
        %v1088 = vsub.s32 0, %v1087
        %v1089 = vrot.slane %v822, %v1088
        %v1091 = vmul.f32 %v1084, %v1089
        %v1093 = vlaneseq
        %v1094 = vshrl.u32 %v1093, 7
        %v1095 = vsub.s32 0, %v1094
        %v1096 = vrot.slane %v823, %v1095
        %v1098 = vadd.f32 %v1091, %v1096
        %v1099 = vpack.c.bf16 %v1098, %v1098
        %v1100 = vld [vmem:[#allocation16] sm:$0xf]
        %v1101 = vld [vmem:[#allocation16 + $0x4] sm:$0xf]
        %v1102 = vld [vmem:[#allocation16 + $0x8] sm:$0xf]
        %v1103 = vld [vmem:[#allocation16 + $0xc] sm:$0xf]
        %v1104 = vld [vmem:[#allocation16 + $0x10] sm:$0xf]
        %v1105 = vld [vmem:[#allocation16 + $0x14] sm:$0xf]
        %v1106 = vld [vmem:[#allocation16 + $0x18] sm:$0xf]
        %v1107 = vld [vmem:[#allocation16 + $0x1c] sm:$0xf]
        %v1108 = vld [vmem:[#allocation16 + $0x20] sm:$0xf]
        %v1109 = vld [vmem:[#allocation16 + $0x24] sm:$0xf]
        %v1110 = vld [vmem:[#allocation16 + $0x28] sm:$0xf]
        %v1111 = vld [vmem:[#allocation16 + $0x2c] sm:$0xf]
        %v1112 = vld [vmem:[#allocation16 + $0x30] sm:$0xf]
        %v1113 = vld [vmem:[#allocation16 + $0x34] sm:$0xf]
        %v1114 = vld [vmem:[#allocation16 + $0x38] sm:$0xf]
        %v1115 = vld [vmem:[#allocation16 + $0x3c] sm:$0xf]
        %v1116 = vld [vmem:[#allocation18] sm:$0x1]
        %v1118 = vlaneseq
        %v1119 = vshrl.u32 %v1118, 7
        %v1120 = vsub.s32 0, %v1119
        %v1121 = vrot.slane %v1116, %v1120
        %v1139 = vunpack.c.l.b16 %v1100
        %v1140 = vunpack.c.l.b16 %v1101
        %v1141 = vunpack.c.l.b16 %v1102
        %v1142 = vunpack.c.l.b16 %v1103
        %v1143 = vunpack.c.l.b16 %v1104
        %v1144 = vunpack.c.l.b16 %v1105
        %v1145 = vunpack.c.l.b16 %v1106
        %v1146 = vunpack.c.l.b16 %v1107
        %v1147 = vunpack.c.l.b16 %v1108
        %v1148 = vunpack.c.l.b16 %v1109
        %v1149 = vunpack.c.l.b16 %v1110
        %v1150 = vunpack.c.l.b16 %v1111
        %v1151 = vunpack.c.l.b16 %v1112
        %v1152 = vunpack.c.l.b16 %v1113
        %v1153 = vunpack.c.l.b16 %v1114
        %v1154 = vunpack.c.l.b16 %v1115
        %v1155 = vpack.c.b16 %v1140, %v1139
        %v1156 = vpack.c.b16 %v1142, %v1141
        %v1157 = vpack.c.b16 %v1144, %v1143
        %v1158 = vpack.c.b16 %v1146, %v1145
        %v1159 = vpack.c.b16 %v1148, %v1147
        %v1160 = vpack.c.b16 %v1150, %v1149
        %v1161 = vpack.c.b16 %v1152, %v1151
        %v1162 = vpack.c.b16 %v1154, %v1153
        %1171 = vmatprep.subr.bf16.mxu0 0
        %1172 = vmatpush1.bf16.msra.mxu0 %v1155
        %1173 = vmatprep.subr.bf16.mxu0 0
        %1174 = vmatpush1.bf16.msra.mxu0 %v1156
        %1175 = vmatprep.subr.bf16.mxu0 0
        %1176 = vmatpush1.bf16.msra.mxu0 %v1157
        %1177 = vmatprep.subr.bf16.mxu0 0
        %1178 = vmatpush1.bf16.msra.mxu0 %v1158
        %1179 = vmatprep.subr.bf16.mxu0 0
        %1180 = vmatpush1.bf16.msra.mxu0 %v1159
        %1181 = vmatprep.subr.bf16.mxu0 0
        %1182 = vmatpush1.bf16.msra.mxu0 %v1160
        %1183 = vmatprep.subr.bf16.mxu0 0
        %1184 = vmatpush1.bf16.msra.mxu0 %v1161
        %1185 = vmatprep.subr.bf16.mxu0 0
        %1186 = vmatpush1.bf16.msra.mxu0 %v1162
        %1187 = vmatprep.subr.bf16.mxu0 0
        %1188 = vmatpush1.bf16.msra.mxu0 0
        %1189 = vmatprep.subr.bf16.mxu0 0
        %1190 = vmatpush1.bf16.msra.mxu0 0
        %1191 = vmatprep.subr.bf16.mxu0 0
        %1192 = vmatpush1.bf16.msra.mxu0 0
        %1193 = vmatprep.subr.bf16.mxu0 0
        %1194 = vmatpush1.bf16.msra.mxu0 0
        %1195 = vmatprep.subr.bf16.mxu0 0
        %1196 = vmatpush1.bf16.msra.mxu0 0
        %1197 = vmatprep.subr.bf16.mxu0 0
        %1198 = vmatpush1.bf16.msra.mxu0 0
        %1199 = vmatprep.subr.bf16.mxu0 0
        %1200 = vmatpush1.bf16.msra.mxu0 0
        %1201 = vmatprep.subr.bf16.mxu0 0
        %1202 = vmatpush1.bf16.msra.mxu0 0
        %1203 = vmatprep.mubr.bf16.mxu0 0
        %1204 = vmatmul.mubr.bf16.gmra.mrb[0].mxu0 %v1099
        %v1205 = vpop.f32.mrb[0].mxu0
        %v1206 = vadd.f32 %v1121, %v1205
        %v1207 = vpop.f32.mrb[0].mxu0
        %v1208 = vpop.f32.mrb[0].mxu0
        %v1209 = vpop.f32.mrb[0].mxu0
        %1210 = vdwg.mxu0
        %v1211 = vmul.f32 %v1206, 0.17677669
        %v1212 = vpack.c.bf16 %v1211, %v1211
        %1214 = vrot.lane.b32.xlu0 %v1212, 96
        %v1215 = vpop.permute.xlu0 %1214
        %1216 = vrot.lane.b32.xlu0 %v1212, 64
        %v1217 = vpop.permute.xlu0 %1216
        %1218 = vrot.lane.b32.xlu0 %v1212, 32
        %v1219 = vpop.permute.xlu0 %1218
        %v1221 = vunpack.c.l.s4 1983009808
        %v1222 = vunpack.c.0.s8 %v1221
        %v1223 = vlaneseq
        %v1224 = vshrl.u32 %v1223, 7
        %v1225 = vsub.s32 %v1222, %v1224
        %v1226 = vrot.slane %v1212, %v1225
        %v1229 = vunpack.c.l.s4 1983009808
        %v1230 = vunpack.c.0.s8 %v1229
        %v1231 = vlaneseq
        %v1232 = vshrl.u32 %v1231, 7
        %v1233 = vsub.s32 %v1230, %v1232
        %v1234 = vrot.slane %v1217, %v1233
        %v1235 = vcombine.low %v1226, %v1234
        %v1236 = vcombine.high %v1226, %v1234
        %v1238 = vunpack.c.l.s4 1934713408
        %v1239 = vunpack.c.0.s8 %v1238
        %v1240 = vlaneseq
        %v1241 = vshrl.u32 %v1240, 7
        %v1242 = vsub.s32 %v1239, %v1241
        %v1243 = vrot.slane %v1235, %v1242
        %v1245 = vunpack.c.l.s4 1934713408
        %v1246 = vunpack.c.0.s8 %v1245
        %v1247 = vlaneseq
        %v1248 = vshrl.u32 %v1247, 7
        %v1249 = vsub.s32 %v1246, %v1248
        %v1250 = vrot.slane %v1236, %v1249
        %v1251 = vcombine.high %v1243, 0
        %v1252 = vcombine.high %v1250, 0
        %v1255 = vunpack.c.l.s4 1983009808
        %v1256 = vunpack.c.0.s8 %v1255
        %v1257 = vlaneseq
        %v1258 = vshrl.u32 %v1257, 7
        %v1259 = vsub.s32 %v1256, %v1258
        %v1260 = vrot.slane %v1215, %v1259
        %v1263 = vunpack.c.l.s4 1983009808
        %v1264 = vunpack.c.0.s8 %v1263
        %v1265 = vlaneseq
        %v1266 = vshrl.u32 %v1265, 7
        %v1267 = vsub.s32 %v1264, %v1266
        %v1268 = vrot.slane %v1219, %v1267
        %v1269 = vcombine.low %v1260, %v1268
        %v1270 = vcombine.high %v1260, %v1268
        %v1272 = vunpack.c.l.s4 1934713408
        %v1273 = vunpack.c.0.s8 %v1272
        %v1274 = vlaneseq
        %v1275 = vshrl.u32 %v1274, 7
        %v1276 = vsub.s32 %v1273, %v1275
        %v1277 = vrot.slane %v1269, %v1276
        %v1279 = vunpack.c.l.s4 1934713408
        %v1280 = vunpack.c.0.s8 %v1279
        %v1281 = vlaneseq
        %v1282 = vshrl.u32 %v1281, 7
        %v1283 = vsub.s32 %v1280, %v1282
        %v1284 = vrot.slane %v1270, %v1283
        %v1285 = vcombine.high %v1277, 0
        %v1286 = vcombine.high %v1284, 0
        %v1289 = vpack.i.b16 %v1277, %v1243
        %v1291 = vshrl.u32 %v1243, 16
        %v1292 = vshrl.u32 %v1277, 16
        %v1293 = vpack.i.b16 %v1292, %v1291
        %v1297 = vpack.i.b16 %v1285, %v1251
        %v1299 = vshrl.u32 %v1251, 16
        %v1300 = vshrl.u32 %v1285, 16
        %v1301 = vpack.i.b16 %v1300, %v1299
        %v1305 = vpack.i.b16 %v1284, %v1250
        %v1307 = vshrl.u32 %v1250, 16
        %v1308 = vshrl.u32 %v1284, 16
        %v1309 = vpack.i.b16 %v1308, %v1307
        %v1313 = vpack.i.b16 %v1286, %v1252
        %v1315 = vshrl.u32 %v1252, 16
        %v1316 = vshrl.u32 %v1286, 16
        %v1317 = vpack.i.b16 %v1316, %v1315
        %v1319 = vcombine.low %v1289, %v1305
        %v1321 = vunpack.c.l.s4 1983009808
        %v1322 = vunpack.c.0.s8 %v1321
        %v1323 = vlaneseq
        %v1324 = vshrl.u32 %v1323, 7
        %v1325 = vsub.s32 %v1322, %v1324
        %v1326 = vrot.slane %v1319, %v1325
        %v1327 = vcombine.low %v1297, %v1313
        %v1329 = vunpack.c.l.s4 1983009808
        %v1330 = vunpack.c.0.s8 %v1329
        %v1331 = vlaneseq
        %v1332 = vshrl.u32 %v1331, 7
        %v1333 = vsub.s32 %v1330, %v1332
        %v1334 = vrot.slane %v1327, %v1333
        %v1335 = vcombine.low %v1326, %v1334
        %v1337 = vunpack.c.l.s4 1934713408
        %v1338 = vunpack.c.0.s8 %v1337
        %v1339 = vlaneseq
        %v1340 = vshrl.u32 %v1339, 7
        %v1341 = vsub.s32 %v1338, %v1340
        %v1342 = vrot.slane %v1335, %v1341
        %v1343 = vcombine.high %v1342, 0
        %v1344 = vcombine.low %v1293, %v1309
        %v1346 = vunpack.c.l.s4 1983009808
        %v1347 = vunpack.c.0.s8 %v1346
        %v1348 = vlaneseq
        %v1349 = vshrl.u32 %v1348, 7
        %v1350 = vsub.s32 %v1347, %v1349
        %v1351 = vrot.slane %v1344, %v1350
        %v1352 = vcombine.low %v1301, %v1317
        %v1354 = vunpack.c.l.s4 1983009808
        %v1355 = vunpack.c.0.s8 %v1354
        %v1356 = vlaneseq
        %v1357 = vshrl.u32 %v1356, 7
        %v1358 = vsub.s32 %v1355, %v1357
        %v1359 = vrot.slane %v1352, %v1358
        %v1360 = vcombine.low %v1351, %v1359
        %v1362 = vunpack.c.l.s4 1934713408
        %v1363 = vunpack.c.0.s8 %v1362
        %v1364 = vlaneseq
        %v1365 = vshrl.u32 %v1364, 7
        %v1366 = vsub.s32 %v1363, %v1365
        %v1367 = vrot.slane %v1360, %v1366
        %v1368 = vcombine.high %v1367, 0
        %v1371 = vpack.i.b16 %v1367, %v1342
        %v1372 = vshrl.u32 %v1342, 16
        %v1373 = vshrl.u32 %v1367, 16
        %v1374 = vpack.i.b16 %v1373, %v1372
        %v1377 = vpack.i.b16 %v1368, %v1343
        %v1378 = vshrl.u32 %v1343, 16
        %v1379 = vshrl.u32 %v1368, 16
        %v1380 = vpack.i.b16 %v1379, %v1378
        %v1381 = vld [vmem:[#allocation2] sm:$0xff]
        %v1382 = vld [vmem:[#allocation2 + $0x8] sm:$0xff]
        %v1383 = vld [vmem:[#allocation2 + $0x10] sm:$0xff]
        %v1384 = vld [vmem:[#allocation2 + $0x18] sm:$0xff]
        %v1385 = vld [vmem:[#allocation2 + $0x20] sm:$0xff]
        %v1386 = vld [vmem:[#allocation2 + $0x28] sm:$0xff]
        %v1387 = vld [vmem:[#allocation2 + $0x30] sm:$0xff]
        %v1388 = vld [vmem:[#allocation2 + $0x38] sm:$0xff]
        %v1389 = vld [vmem:[#allocation3] sm:$0xff]
        %v1390 = vld [vmem:[%s710] sm:$0x1]
        %vm1391 = vcmp.gt.f32.partialorder %v1390, 0.0
        %vm1392 = vcmask 261120
        %v1394 = vsel %vm1392, %v1371, 0
        %1396 = vmatprep.subr.bf16.mxu0 0
        %1397 = vmatpush1.bf16.msra.mxu0 %v1381
        %1398 = vmatprep.subr.bf16.mxu0 0
        %1399 = vmatpush1.bf16.msra.mxu0 %v1382
        %1400 = vmatprep.subr.bf16.mxu0 0
        %1401 = vmatpush1.bf16.msra.mxu0 0
        %1402 = vmatprep.subr.bf16.mxu0 0
        %1403 = vmatpush1.bf16.msra.mxu0 0
        %1404 = vmatprep.subr.bf16.mxu0 0
        %1405 = vmatpush1.bf16.msra.mxu0 0
        %1406 = vmatprep.subr.bf16.mxu0 0
        %1407 = vmatpush1.bf16.msra.mxu0 0
        %1408 = vmatprep.subr.bf16.mxu0 0
        %1409 = vmatpush1.bf16.msra.mxu0 0
        %1410 = vmatprep.subr.bf16.mxu0 0
        %1411 = vmatpush1.bf16.msra.mxu0 0
        %1412 = vmatprep.subr.bf16.mxu0 0
        %1413 = vmatpush1.bf16.msra.mxu0 0
        %1414 = vmatprep.subr.bf16.mxu0 0
        %1415 = vmatpush1.bf16.msra.mxu0 0
        %1416 = vmatprep.subr.bf16.mxu0 0
        %1417 = vmatpush1.bf16.msra.mxu0 0
        %1418 = vmatprep.subr.bf16.mxu0 0
        %1419 = vmatpush1.bf16.msra.mxu0 0
        %1420 = vmatprep.subr.bf16.mxu0 0
        %1421 = vmatpush1.bf16.msra.mxu0 0
        %1422 = vmatprep.subr.bf16.mxu0 0
        %1423 = vmatpush1.bf16.msra.mxu0 0
        %1424 = vmatprep.subr.bf16.mxu0 0
        %1425 = vmatpush1.bf16.msra.mxu0 0
        %1426 = vmatprep.subr.bf16.mxu0 0
        %1427 = vmatpush1.bf16.msra.mxu0 0
        %1428 = vmatprep.mubr.bf16.mxu0 0
        %1429 = vmatmul.mubr.bf16.gmra.mrb[0].mxu0 %v1394
        %v1430 = vpop.f32.mrb[0].mxu0
        %v1431 = vadd.f32 0.0, %v1430
        %v1432 = vpop.f32.mrb[0].mxu0
        %v1433 = vpop.f32.mrb[0].mxu0
        %v1434 = vpop.f32.mrb[0].mxu0
        %1435 = vdwg.mxu0
        %v1437 = vsel %vm1392, %v1374, 0
        %1439 = vmatprep.subr.bf16.mxu0 0
        %1440 = vmatpush1.bf16.msra.mxu0 %v1383
        %1441 = vmatprep.subr.bf16.mxu0 0
        %1442 = vmatpush1.bf16.msra.mxu0 %v1384
        %1443 = vmatprep.subr.bf16.mxu0 0
        %1444 = vmatpush1.bf16.msra.mxu0 0
        %1445 = vmatprep.subr.bf16.mxu0 0
        %1446 = vmatpush1.bf16.msra.mxu0 0
        %1447 = vmatprep.subr.bf16.mxu0 0
        %1448 = vmatpush1.bf16.msra.mxu0 0
        %1449 = vmatprep.subr.bf16.mxu0 0
        %1450 = vmatpush1.bf16.msra.mxu0 0
        %1451 = vmatprep.subr.bf16.mxu0 0
        %1452 = vmatpush1.bf16.msra.mxu0 0
        %1453 = vmatprep.subr.bf16.mxu0 0
        %1454 = vmatpush1.bf16.msra.mxu0 0
        %1455 = vmatprep.subr.bf16.mxu0 0
        %1456 = vmatpush1.bf16.msra.mxu0 0
        %1457 = vmatprep.subr.bf16.mxu0 0
        %1458 = vmatpush1.bf16.msra.mxu0 0
        %1459 = vmatprep.subr.bf16.mxu0 0
        %1460 = vmatpush1.bf16.msra.mxu0 0
        %1461 = vmatprep.subr.bf16.mxu0 0
        %1462 = vmatpush1.bf16.msra.mxu0 0
        %1463 = vmatprep.subr.bf16.mxu0 0
        %1464 = vmatpush1.bf16.msra.mxu0 0
        %1465 = vmatprep.subr.bf16.mxu0 0
        %1466 = vmatpush1.bf16.msra.mxu0 0
        %1467 = vmatprep.subr.bf16.mxu0 0
        %1468 = vmatpush1.bf16.msra.mxu0 0
        %1469 = vmatprep.subr.bf16.mxu0 0
        %1470 = vmatpush1.bf16.msra.mxu0 0
        %1471 = vmatprep.mubr.bf16.mxu0 0
        %1472 = vmatmul.mubr.bf16.gmra.mrb[0].mxu0 %v1437
        %v1473 = vpop.f32.mrb[0].mxu0
        %v1474 = vadd.f32 0.0, %v1473
        %v1475 = vpop.f32.mrb[0].mxu0
        %v1476 = vpop.f32.mrb[0].mxu0
        %v1477 = vpop.f32.mrb[0].mxu0
        %1478 = vdwg.mxu0
        %v1480 = vsel %vm1392, %v1377, 0
        %1482 = vmatprep.subr.bf16.mxu0 0
        %1483 = vmatpush1.bf16.msra.mxu0 %v1385
        %1484 = vmatprep.subr.bf16.mxu0 0
        %1485 = vmatpush1.bf16.msra.mxu0 %v1386
        %1486 = vmatprep.subr.bf16.mxu0 0
        %1487 = vmatpush1.bf16.msra.mxu0 0
        %1488 = vmatprep.subr.bf16.mxu0 0
        %1489 = vmatpush1.bf16.msra.mxu0 0
        %1490 = vmatprep.subr.bf16.mxu0 0
        %1491 = vmatpush1.bf16.msra.mxu0 0
        %1492 = vmatprep.subr.bf16.mxu0 0
        %1493 = vmatpush1.bf16.msra.mxu0 0
        %1494 = vmatprep.subr.bf16.mxu0 0
        %1495 = vmatpush1.bf16.msra.mxu0 0
        %1496 = vmatprep.subr.bf16.mxu0 0
        %1497 = vmatpush1.bf16.msra.mxu0 0
        %1498 = vmatprep.subr.bf16.mxu0 0
        %1499 = vmatpush1.bf16.msra.mxu0 0
        %1500 = vmatprep.subr.bf16.mxu0 0
        %1501 = vmatpush1.bf16.msra.mxu0 0
        %1502 = vmatprep.subr.bf16.mxu0 0
        %1503 = vmatpush1.bf16.msra.mxu0 0
        %1504 = vmatprep.subr.bf16.mxu0 0
        %1505 = vmatpush1.bf16.msra.mxu0 0
        %1506 = vmatprep.subr.bf16.mxu0 0
        %1507 = vmatpush1.bf16.msra.mxu0 0
        %1508 = vmatprep.subr.bf16.mxu0 0
        %1509 = vmatpush1.bf16.msra.mxu0 0
        %1510 = vmatprep.subr.bf16.mxu0 0
        %1511 = vmatpush1.bf16.msra.mxu0 0
        %1512 = vmatprep.subr.bf16.mxu0 0
        %1513 = vmatpush1.bf16.msra.mxu0 0
        %1514 = vmatprep.mubr.bf16.mxu0 0
        %1515 = vmatmul.mubr.bf16.gmra.mrb[0].mxu0 %v1480
        %v1516 = vpop.f32.mrb[0].mxu0
        %v1517 = vadd.f32 0.0, %v1516
        %v1518 = vpop.f32.mrb[0].mxu0
        %v1519 = vpop.f32.mrb[0].mxu0
        %v1520 = vpop.f32.mrb[0].mxu0
        %1521 = vdwg.mxu0
        %v1523 = vsel %vm1392, %v1380, 0
        %1525 = vmatprep.subr.bf16.mxu0 0
        %1526 = vmatpush1.bf16.msra.mxu0 %v1387
        %1527 = vmatprep.subr.bf16.mxu0 0
        %1528 = vmatpush1.bf16.msra.mxu0 %v1388
        %1529 = vmatprep.subr.bf16.mxu0 0
        %1530 = vmatpush1.bf16.msra.mxu0 0
        %1531 = vmatprep.subr.bf16.mxu0 0
        %1532 = vmatpush1.bf16.msra.mxu0 0
        %1533 = vmatprep.subr.bf16.mxu0 0
        %1534 = vmatpush1.bf16.msra.mxu0 0
        %1535 = vmatprep.subr.bf16.mxu0 0
        %1536 = vmatpush1.bf16.msra.mxu0 0
        %1537 = vmatprep.subr.bf16.mxu0 0
        %1538 = vmatpush1.bf16.msra.mxu0 0
        %1539 = vmatprep.subr.bf16.mxu0 0
        %1540 = vmatpush1.bf16.msra.mxu0 0
        %1541 = vmatprep.subr.bf16.mxu0 0
        %1542 = vmatpush1.bf16.msra.mxu0 0
        %1543 = vmatprep.subr.bf16.mxu0 0
        %1544 = vmatpush1.bf16.msra.mxu0 0
        %1545 = vmatprep.subr.bf16.mxu0 0
        %1546 = vmatpush1.bf16.msra.mxu0 0
        %1547 = vmatprep.subr.bf16.mxu0 0
        %1548 = vmatpush1.bf16.msra.mxu0 0
        %1549 = vmatprep.subr.bf16.mxu0 0
        %1550 = vmatpush1.bf16.msra.mxu0 0
        %1551 = vmatprep.subr.bf16.mxu0 0
        %1552 = vmatpush1.bf16.msra.mxu0 0
        %1553 = vmatprep.subr.bf16.mxu0 0
        %1554 = vmatpush1.bf16.msra.mxu0 0
        %1555 = vmatprep.subr.bf16.mxu0 0
        %1556 = vmatpush1.bf16.msra.mxu0 0
        %1557 = vmatprep.mubr.bf16.mxu0 0
        %1558 = vmatmul.mubr.bf16.gmra.mrb[0].mxu0 %v1523
        %v1559 = vpop.f32.mrb[0].mxu0
        %v1560 = vadd.f32 0.0, %v1559
        %v1561 = vpop.f32.mrb[0].mxu0
        %v1562 = vpop.f32.mrb[0].mxu0
        %v1563 = vpop.f32.mrb[0].mxu0
        %1564 = vdwg.mxu0
        %v1565 = vsel %vm1391, 1, 0
        %v1566 = vlaneseq
        %v1567 = vshrl.u32 %v1566, 7
        %v1568 = vsub.s32 0, %v1567
        %v1569 = vrot.slane %v1565, %v1568
        %vm1570 = vcmp.eq.s32.totalorder %v1569, 1
        %v1571 = vsel %vm1570, %v1431, -1.7014117e+38
        %v1572 = vsel %vm1570, %v1474, -1.7014117e+38
        %v1573 = vsel %vm1570, %v1517, -1.7014117e+38
        %v1574 = vsel %vm1570, %v1560, -1.7014117e+38
        %vm1575 = vcmask 130048
        %v1576 = vsel %vm1575, %v1571, -inf
        %1577 = vmax.xlane.f32.xlu0 %v1576
        %v1578 = vpop.xlane.xlu0 %1577
        %v1579 = vsel %vm1575, %v1572, -inf
        %1580 = vmax.xlane.f32.xlu0 %v1579
        %v1581 = vpop.xlane.xlu0 %1580
        %v1582 = vsel %vm1575, %v1573, -inf
        %1583 = vmax.xlane.f32.xlu0 %v1582
        %v1584 = vpop.xlane.xlu0 %1583
        %v1585 = vsel %vm1575, %v1574, -inf
        %1586 = vmax.xlane.f32.xlu0 %v1585
        %v1587 = vpop.xlane.xlu0 %1586
        %v1588 = vmax.f32 %v1578, -1.7014117e+38
        %v1589 = vmax.f32 %v1581, -1.7014117e+38
        %v1590 = vmax.f32 %v1584, -1.7014117e+38
        %v1591 = vmax.f32 %v1587, -1.7014117e+38
        %v1592 = vsub.f32 -1.7014117e+38, %v1588
        %v1593 = vsub.f32 -1.7014117e+38, %v1589
        %v1594 = vsub.f32 -1.7014117e+38, %v1590
        %v1595 = vsub.f32 -1.7014117e+38, %v1591
        %v1596 = vmul.f32 %v1592, 1.442695
        %v1597 = vpow.pop %v1596
        %v1598 = vmul.f32 %v1593, 1.442695
        %v1599 = vpow.pop %v1598
        %v1600 = vmul.f32 %v1594, 1.442695
        %v1601 = vpow.pop %v1600
        %v1602 = vmul.f32 %v1595, 1.442695
        %v1603 = vpow.pop %v1602
        %v1604 = vsub.f32 %v1571, %v1588
        %v1605 = vsub.f32 %v1572, %v1589
        %v1606 = vsub.f32 %v1573, %v1590
        %v1607 = vsub.f32 %v1574, %v1591
        %v1608 = vmul.f32 %v1604, 1.442695
        %v1609 = vpow.pop %v1608
        %v1610 = vmul.f32 %v1605, 1.442695
        %v1611 = vpow.pop %v1610
        %v1612 = vmul.f32 %v1606, 1.442695
        %v1613 = vpow.pop %v1612
        %v1614 = vmul.f32 %v1607, 1.442695
        %v1615 = vpow.pop %v1614
        %v1616 = vsel %vm1570, %v1609, 0.0
        %v1617 = vsel %vm1570, %v1611, 0.0
        %v1618 = vsel %vm1570, %v1613, 0.0
        %v1619 = vsel %vm1570, %v1615, 0.0
        %v1620 = vmul.f32 %v1597, 0.0
        %v1621 = vmul.f32 %v1599, 0.0
        %v1622 = vmul.f32 %v1601, 0.0
        %v1623 = vmul.f32 %v1603, 0.0
        %v1624 = vsel %vm1575, %v1616, 0.0
        %1625 = vadd.xlane.f32.xlu0 %v1624
        %v1626 = vpop.xlane.xlu0 %1625
        %v1627 = vsel %vm1575, %v1617, 0.0
        %1628 = vadd.xlane.f32.xlu0 %v1627
        %v1629 = vpop.xlane.xlu0 %1628
        %v1630 = vsel %vm1575, %v1618, 0.0
        %1631 = vadd.xlane.f32.xlu0 %v1630
        %v1632 = vpop.xlane.xlu0 %1631
        %v1633 = vsel %vm1575, %v1619, 0.0
        %1634 = vadd.xlane.f32.xlu0 %v1633
        %v1635 = vpop.xlane.xlu0 %1634
        %v1636 = vadd.f32 %v1620, %v1626
        %v1637 = vadd.f32 %v1621, %v1629
        %v1638 = vadd.f32 %v1622, %v1632
        %v1639 = vadd.f32 %v1623, %v1635
        %v1640 = vpack.c.bf16 %v1616, %v1616
        %v1641 = vpack.c.bf16 %v1617, %v1617
        %v1642 = vpack.c.bf16 %v1618, %v1618
        %v1643 = vpack.c.bf16 %v1619, %v1619
        %v1645 = vsel %vm1575, %v1640, 0
        %1647 = vmatprep.subr.bf16.mxu0 0
        %1648 = vmatpush1.bf16.msra.mxu0 %v1389
        %1649 = vmatprep.subr.bf16.mxu0 0
        %1650 = vmatpush1.bf16.msra.mxu0 0
        %1651 = vmatprep.subr.bf16.mxu0 0
        %1652 = vmatpush1.bf16.msra.mxu0 0
        %1653 = vmatprep.subr.bf16.mxu0 0
        %1654 = vmatpush1.bf16.msra.mxu0 0
        %1655 = vmatprep.subr.bf16.mxu0 0
        %1656 = vmatpush1.bf16.msra.mxu0 0
        %1657 = vmatprep.subr.bf16.mxu0 0
        %1658 = vmatpush1.bf16.msra.mxu0 0
        %1659 = vmatprep.subr.bf16.mxu0 0
        %1660 = vmatpush1.bf16.msra.mxu0 0
        %1661 = vmatprep.subr.bf16.mxu0 0
        %1662 = vmatpush1.bf16.msra.mxu0 0
        %1663 = vmatprep.subr.bf16.mxu0 0
        %1664 = vmatpush1.bf16.msra.mxu0 0
        %1665 = vmatprep.subr.bf16.mxu0 0
        %1666 = vmatpush1.bf16.msra.mxu0 0
        %1667 = vmatprep.subr.bf16.mxu0 0
        %1668 = vmatpush1.bf16.msra.mxu0 0
        %1669 = vmatprep.subr.bf16.mxu0 0
        %1670 = vmatpush1.bf16.msra.mxu0 0
        %1671 = vmatprep.subr.bf16.mxu0 0
        %1672 = vmatpush1.bf16.msra.mxu0 0
        %1673 = vmatprep.subr.bf16.mxu0 0
        %1674 = vmatpush1.bf16.msra.mxu0 0
        %1675 = vmatprep.subr.bf16.mxu0 0
        %1676 = vmatpush1.bf16.msra.mxu0 0
        %1677 = vmatprep.subr.bf16.mxu0 0
        %1678 = vmatpush1.bf16.msra.mxu0 0
        %1679 = vmatprep.mubr.bf16.mxu0 0
        %1680 = vmatmul.mubr.bf16.gmra.mrb[0].mxu0 %v1645
        %v1681 = vpop.f32.mrb[0].mxu0
        %v1682 = vadd.f32 0.0, %v1681
        %v1683 = vpop.f32.mrb[0].mxu0
        %v1684 = vpop.f32.mrb[0].mxu0
        %v1685 = vpop.f32.mrb[0].mxu0
        %1686 = vdwg.mxu0
        %1688 = vrot.lane.b32.xlu0 %v1389, 96
        %v1689 = vpop.permute.xlu0 %1688
        %v1692 = vsel %vm1575, %v1641, 0
        %1694 = vmatprep.subr.bf16.mxu0 0
        %1695 = vmatpush1.bf16.msra.mxu0 %v1689
        %1696 = vmatprep.subr.bf16.mxu0 0
        %1697 = vmatpush1.bf16.msra.mxu0 0
        %1698 = vmatprep.subr.bf16.mxu0 0
        %1699 = vmatpush1.bf16.msra.mxu0 0
        %1700 = vmatprep.subr.bf16.mxu0 0
        %1701 = vmatpush1.bf16.msra.mxu0 0
        %1702 = vmatprep.subr.bf16.mxu0 0
        %1703 = vmatpush1.bf16.msra.mxu0 0
        %1704 = vmatprep.subr.bf16.mxu0 0
        %1705 = vmatpush1.bf16.msra.mxu0 0
        %1706 = vmatprep.subr.bf16.mxu0 0
        %1707 = vmatpush1.bf16.msra.mxu0 0
        %1708 = vmatprep.subr.bf16.mxu0 0
        %1709 = vmatpush1.bf16.msra.mxu0 0
        %1710 = vmatprep.subr.bf16.mxu0 0
        %1711 = vmatpush1.bf16.msra.mxu0 0
        %1712 = vmatprep.subr.bf16.mxu0 0
        %1713 = vmatpush1.bf16.msra.mxu0 0
        %1714 = vmatprep.subr.bf16.mxu0 0
        %1715 = vmatpush1.bf16.msra.mxu0 0
        %1716 = vmatprep.subr.bf16.mxu0 0
        %1717 = vmatpush1.bf16.msra.mxu0 0
        %1718 = vmatprep.subr.bf16.mxu0 0
        %1719 = vmatpush1.bf16.msra.mxu0 0
        %1720 = vmatprep.subr.bf16.mxu0 0
        %1721 = vmatpush1.bf16.msra.mxu0 0
        %1722 = vmatprep.subr.bf16.mxu0 0
        %1723 = vmatpush1.bf16.msra.mxu0 0
        %1724 = vmatprep.subr.bf16.mxu0 0
        %1725 = vmatpush1.bf16.msra.mxu0 0
        %1726 = vmatprep.mubr.bf16.mxu0 0
        %1727 = vmatmul.mubr.bf16.gmra.mrb[0].mxu0 %v1692
        %v1728 = vpop.f32.mrb[0].mxu0
        %v1729 = vadd.f32 0.0, %v1728
        %v1730 = vpop.f32.mrb[0].mxu0
        %v1731 = vpop.f32.mrb[0].mxu0
        %v1732 = vpop.f32.mrb[0].mxu0
        %1733 = vdwg.mxu0
        %1734 = vrot.lane.b32.xlu0 %v1389, 64
        %v1735 = vpop.permute.xlu0 %1734
        %v1738 = vsel %vm1575, %v1642, 0
        %1740 = vmatprep.subr.bf16.mxu0 0
        %1741 = vmatpush1.bf16.msra.mxu0 %v1735
        %1742 = vmatprep.subr.bf16.mxu0 0
        %1743 = vmatpush1.bf16.msra.mxu0 0
        %1744 = vmatprep.subr.bf16.mxu0 0
        %1745 = vmatpush1.bf16.msra.mxu0 0
        %1746 = vmatprep.subr.bf16.mxu0 0
        %1747 = vmatpush1.bf16.msra.mxu0 0
        %1748 = vmatprep.subr.bf16.mxu0 0
        %1749 = vmatpush1.bf16.msra.mxu0 0
        %1750 = vmatprep.subr.bf16.mxu0 0
        %1751 = vmatpush1.bf16.msra.mxu0 0
        %1752 = vmatprep.subr.bf16.mxu0 0
        %1753 = vmatpush1.bf16.msra.mxu0 0
        %1754 = vmatprep.subr.bf16.mxu0 0
        %1755 = vmatpush1.bf16.msra.mxu0 0
        %1756 = vmatprep.subr.bf16.mxu0 0
        %1757 = vmatpush1.bf16.msra.mxu0 0
        %1758 = vmatprep.subr.bf16.mxu0 0
        %1759 = vmatpush1.bf16.msra.mxu0 0
        %1760 = vmatprep.subr.bf16.mxu0 0
        %1761 = vmatpush1.bf16.msra.mxu0 0
        %1762 = vmatprep.subr.bf16.mxu0 0
        %1763 = vmatpush1.bf16.msra.mxu0 0
        %1764 = vmatprep.subr.bf16.mxu0 0
        %1765 = vmatpush1.bf16.msra.mxu0 0
        %1766 = vmatprep.subr.bf16.mxu0 0
        %1767 = vmatpush1.bf16.msra.mxu0 0
        %1768 = vmatprep.subr.bf16.mxu0 0
        %1769 = vmatpush1.bf16.msra.mxu0 0
        %1770 = vmatprep.subr.bf16.mxu0 0
        %1771 = vmatpush1.bf16.msra.mxu0 0
        %1772 = vmatprep.mubr.bf16.mxu0 0
        %1773 = vmatmul.mubr.bf16.gmra.mrb[0].mxu0 %v1738
        %v1774 = vpop.f32.mrb[0].mxu0
        %v1775 = vadd.f32 0.0, %v1774
        %v1776 = vpop.f32.mrb[0].mxu0
        %v1777 = vpop.f32.mrb[0].mxu0
        %v1778 = vpop.f32.mrb[0].mxu0
        %1779 = vdwg.mxu0
        %1780 = vrot.lane.b32.xlu0 %v1389, 32
        %v1781 = vpop.permute.xlu0 %1780
        %v1784 = vsel %vm1575, %v1643, 0
        %1786 = vmatprep.subr.bf16.mxu0 0
        %1787 = vmatpush1.bf16.msra.mxu0 %v1781
        %1788 = vmatprep.subr.bf16.mxu0 0
        %1789 = vmatpush1.bf16.msra.mxu0 0
        %1790 = vmatprep.subr.bf16.mxu0 0
        %1791 = vmatpush1.bf16.msra.mxu0 0
        %1792 = vmatprep.subr.bf16.mxu0 0
        %1793 = vmatpush1.bf16.msra.mxu0 0
        %1794 = vmatprep.subr.bf16.mxu0 0
        %1795 = vmatpush1.bf16.msra.mxu0 0
        %1796 = vmatprep.subr.bf16.mxu0 0
        %1797 = vmatpush1.bf16.msra.mxu0 0
        %1798 = vmatprep.subr.bf16.mxu0 0
        %1799 = vmatpush1.bf16.msra.mxu0 0
        %1800 = vmatprep.subr.bf16.mxu0 0
        %1801 = vmatpush1.bf16.msra.mxu0 0
        %1802 = vmatprep.subr.bf16.mxu0 0
        %1803 = vmatpush1.bf16.msra.mxu0 0
        %1804 = vmatprep.subr.bf16.mxu0 0
        %1805 = vmatpush1.bf16.msra.mxu0 0
        %1806 = vmatprep.subr.bf16.mxu0 0
        %1807 = vmatpush1.bf16.msra.mxu0 0
        %1808 = vmatprep.subr.bf16.mxu0 0
        %1809 = vmatpush1.bf16.msra.mxu0 0
        %1810 = vmatprep.subr.bf16.mxu0 0
        %1811 = vmatpush1.bf16.msra.mxu0 0
        %1812 = vmatprep.subr.bf16.mxu0 0
        %1813 = vmatpush1.bf16.msra.mxu0 0
        %1814 = vmatprep.subr.bf16.mxu0 0
        %1815 = vmatpush1.bf16.msra.mxu0 0
        %1816 = vmatprep.subr.bf16.mxu0 0
        %1817 = vmatpush1.bf16.msra.mxu0 0
        %1818 = vmatprep.mubr.bf16.mxu0 0
        %1819 = vmatmul.mubr.bf16.gmra.mrb[0].mxu0 %v1784
        %v1820 = vpop.f32.mrb[0].mxu0
        %v1821 = vadd.f32 0.0, %v1820
        %v1822 = vpop.f32.mrb[0].mxu0
        %v1823 = vpop.f32.mrb[0].mxu0
        %v1824 = vpop.f32.mrb[0].mxu0
        %1825 = vdwg.mxu0
        %v1826 = vadd.f32 %v1620, %v1682
        %v1827 = vadd.f32 %v1621, %v1729
        %v1828 = vadd.f32 %v1622, %v1775
        %v1829 = vadd.f32 %v1623, %v1821
        %v1830 = vmax.f32 %v1636, 1e-30
        %v1831 = vmax.f32 %v1637, 1e-30
        %v1832 = vmax.f32 %v1638, 1e-30
        %v1833 = vmax.f32 %v1639, 1e-30
        %v1834 = vrcp.pop %v1830
        %v1835 = vrcp.pop %v1831
        %v1836 = vrcp.pop %v1832
        %v1837 = vrcp.pop %v1833
        %v1838 = vmul.f32 %v1826, %v1834
        %v1839 = vmul.f32 %v1827, %v1835
        %v1840 = vmul.f32 %v1828, %v1836
        %v1841 = vmul.f32 %v1829, %v1837
        %v1842 = vcombine.low %v1838, %v1840
        %v1843 = vcombine.high %v1838, %v1840
        %v1845 = vunpack.c.l.s4 1983009808
        %v1846 = vunpack.c.0.s8 %v1845
        %v1847 = vlaneseq
        %v1848 = vshrl.u32 %v1847, 7
        %v1849 = vsub.s32 %v1846, %v1848
        %v1850 = vrot.slane %v1842, %v1849
        %v1852 = vunpack.c.l.s4 1983009808
        %v1853 = vunpack.c.0.s8 %v1852
        %v1854 = vlaneseq
        %v1855 = vshrl.u32 %v1854, 7
        %v1856 = vsub.s32 %v1853, %v1855
        %v1857 = vrot.slane %v1843, %v1856
        %v1858 = vcombine.low %v1839, %v1841
        %v1859 = vcombine.high %v1839, %v1841
        %v1861 = vunpack.c.l.s4 1983009808
        %v1862 = vunpack.c.0.s8 %v1861
        %v1863 = vlaneseq
        %v1864 = vshrl.u32 %v1863, 7
        %v1865 = vsub.s32 %v1862, %v1864
        %v1866 = vrot.slane %v1858, %v1865
        %v1868 = vunpack.c.l.s4 1983009808
        %v1869 = vunpack.c.0.s8 %v1868
        %v1870 = vlaneseq
        %v1871 = vshrl.u32 %v1870, 7
        %v1872 = vsub.s32 %v1869, %v1871
        %v1873 = vrot.slane %v1859, %v1872
        %v1874 = vcombine.low %v1850, %v1866
        %v1875 = vcombine.high %v1850, %v1866
        %v1877 = vunpack.c.l.s4 1934713408
        %v1878 = vunpack.c.0.s8 %v1877
        %v1879 = vlaneseq
        %v1880 = vshrl.u32 %v1879, 7
        %v1881 = vsub.s32 %v1878, %v1880
        %v1882 = vrot.slane %v1874, %v1881
        %v1884 = vunpack.c.l.s4 1934713408
        %v1885 = vunpack.c.0.s8 %v1884
        %v1886 = vlaneseq
        %v1887 = vshrl.u32 %v1886, 7
        %v1888 = vsub.s32 %v1885, %v1887
        %v1889 = vrot.slane %v1875, %v1888
        %v1890 = vcombine.low %v1857, %v1873
        %v1891 = vcombine.high %v1857, %v1873
        %v1893 = vunpack.c.l.s4 1934713408
        %v1894 = vunpack.c.0.s8 %v1893
        %v1895 = vlaneseq
        %v1896 = vshrl.u32 %v1895, 7
        %v1897 = vsub.s32 %v1894, %v1896
        %v1898 = vrot.slane %v1890, %v1897
        %v1900 = vunpack.c.l.s4 1934713408
        %v1901 = vunpack.c.0.s8 %v1900
        %v1902 = vlaneseq
        %v1903 = vshrl.u32 %v1902, 7
        %v1904 = vsub.s32 %v1901, %v1903
        %v1905 = vrot.slane %v1891, %v1904
        %v1906 = vcombine.high %v1882, 0.0
        %v1907 = vcombine.high %v1889, 0.0
        %v1908 = vcombine.high %v1898, 0.0
        %v1909 = vcombine.high %v1905, 0.0
        %v1910 = vcombine.low %v1882, %v1889
        %v1912 = vunpack.c.l.s4 1983009808
        %v1913 = vunpack.c.0.s8 %v1912
        %v1914 = vlaneseq
        %v1915 = vshrl.u32 %v1914, 7
        %v1916 = vsub.s32 %v1913, %v1915
        %v1917 = vrot.slane %v1910, %v1916
        %v1918 = vcombine.low %v1906, %v1907
        %v1920 = vunpack.c.l.s4 1983009808
        %v1921 = vunpack.c.0.s8 %v1920
        %v1922 = vlaneseq
        %v1923 = vshrl.u32 %v1922, 7
        %v1924 = vsub.s32 %v1921, %v1923
        %v1925 = vrot.slane %v1918, %v1924
        %v1926 = vcombine.low %v1898, %v1905
        %v1928 = vunpack.c.l.s4 1983009808
        %v1929 = vunpack.c.0.s8 %v1928
        %v1930 = vlaneseq
        %v1931 = vshrl.u32 %v1930, 7
        %v1932 = vsub.s32 %v1929, %v1931
        %v1933 = vrot.slane %v1926, %v1932
        %v1934 = vcombine.low %v1908, %v1909
        %v1936 = vunpack.c.l.s4 1983009808
        %v1937 = vunpack.c.0.s8 %v1936
        %v1938 = vlaneseq
        %v1939 = vshrl.u32 %v1938, 7
        %v1940 = vsub.s32 %v1937, %v1939
        %v1941 = vrot.slane %v1934, %v1940
        %v1942 = vcombine.low %v1917, %v1925
        %v1943 = vcombine.high %v1917, %v1925
        %v1945 = vunpack.c.l.s4 1934713408
        %v1946 = vunpack.c.0.s8 %v1945
        %v1947 = vlaneseq
        %v1948 = vshrl.u32 %v1947, 7
        %v1949 = vsub.s32 %v1946, %v1948
        %v1950 = vrot.slane %v1942, %v1949
        %v1952 = vunpack.c.l.s4 1934713408
        %v1953 = vunpack.c.0.s8 %v1952
        %v1954 = vlaneseq
        %v1955 = vshrl.u32 %v1954, 7
        %v1956 = vsub.s32 %v1953, %v1955
        %v1957 = vrot.slane %v1943, %v1956
        %v1958 = vcombine.low %v1933, %v1941
        %v1959 = vcombine.high %v1933, %v1941
        %v1961 = vunpack.c.l.s4 1934713408
        %v1962 = vunpack.c.0.s8 %v1961
        %v1963 = vlaneseq
        %v1964 = vshrl.u32 %v1963, 7
        %v1965 = vsub.s32 %v1962, %v1964
        %v1966 = vrot.slane %v1958, %v1965
        %v1968 = vunpack.c.l.s4 1934713408
        %v1969 = vunpack.c.0.s8 %v1968
        %v1970 = vlaneseq
        %v1971 = vshrl.u32 %v1970, 7
        %v1972 = vsub.s32 %v1969, %v1971
        %v1973 = vrot.slane %v1959, %v1972
        %v1974 = vcombine.low %v1950, %v1966
        %v1975 = vcombine.high %v1950, %v1966
        %v1976 = vcombine.low %v1957, %v1973
        %v1977 = vcombine.high %v1957, %v1973
        %1979 = vrot.lane.b32.xlu0 %v1975, 32
        %v1980 = vpop.permute.xlu0 %1979
        %1983 = vrot.lane.b32.xlu0 %v1976, 64
        %v1984 = vpop.permute.xlu0 %1983
        %1987 = vrot.lane.b32.xlu0 %v1977, 96
        %v1988 = vpop.permute.xlu0 %1987
        %v1990 = vsel %vm1392, %v1974, %v1980
        %vm1991 = vcmask 523264
        %v1992 = vsel %vm1991, %v1990, %v1984
        %vm1993 = vcmask 785408
        %v1994 = vsel %vm1993, %v1992, %v1988
        %v1995 = vpack.c.bf16 %v1994, %v1994
        %v1996 = vld [vmem:[#allocation22] sm:$0xf]
        %v1997 = vld [vmem:[#allocation22 + $0x4] sm:$0xf]
        %v1998 = vld [vmem:[#allocation22 + $0x8] sm:$0xf]
        %v1999 = vld [vmem:[#allocation22 + $0xc] sm:$0xf]
        %v2000 = vld [vmem:[#allocation22 + $0x10] sm:$0xf]
        %v2001 = vld [vmem:[#allocation22 + $0x14] sm:$0xf]
        %v2002 = vld [vmem:[#allocation22 + $0x18] sm:$0xf]
        %v2003 = vld [vmem:[#allocation22 + $0x1c] sm:$0xf]
        %v2004 = vld [vmem:[#allocation22 + $0x20] sm:$0xf]
        %v2005 = vld [vmem:[#allocation22 + $0x24] sm:$0xf]
        %v2006 = vld [vmem:[#allocation22 + $0x28] sm:$0xf]
        %v2007 = vld [vmem:[#allocation22 + $0x2c] sm:$0xf]
        %v2008 = vld [vmem:[#allocation22 + $0x30] sm:$0xf]
        %v2009 = vld [vmem:[#allocation22 + $0x34] sm:$0xf]
        %v2010 = vld [vmem:[#allocation22 + $0x38] sm:$0xf]
        %v2011 = vld [vmem:[#allocation22 + $0x3c] sm:$0xf]
        %v2012 = vld [vmem:[#allocation24] sm:$0x1]
        %v2014 = vlaneseq
        %v2015 = vshrl.u32 %v2014, 7
        %v2016 = vsub.s32 0, %v2015
        %v2017 = vrot.slane %v2012, %v2016
        %v2035 = vunpack.c.l.b16 %v1996
        %v2036 = vunpack.c.l.b16 %v1997
        %v2037 = vunpack.c.l.b16 %v1998
        %v2038 = vunpack.c.l.b16 %v1999
        %v2039 = vunpack.c.l.b16 %v2000
        %v2040 = vunpack.c.l.b16 %v2001
        %v2041 = vunpack.c.l.b16 %v2002
        %v2042 = vunpack.c.l.b16 %v2003
        %v2043 = vunpack.c.l.b16 %v2004
        %v2044 = vunpack.c.l.b16 %v2005
        %v2045 = vunpack.c.l.b16 %v2006
        %v2046 = vunpack.c.l.b16 %v2007
        %v2047 = vunpack.c.l.b16 %v2008
        %v2048 = vunpack.c.l.b16 %v2009
        %v2049 = vunpack.c.l.b16 %v2010
        %v2050 = vunpack.c.l.b16 %v2011
        %v2051 = vpack.c.b16 %v2036, %v2035
        %v2052 = vpack.c.b16 %v2038, %v2037
        %v2053 = vpack.c.b16 %v2040, %v2039
        %v2054 = vpack.c.b16 %v2042, %v2041
        %v2055 = vpack.c.b16 %v2044, %v2043
        %v2056 = vpack.c.b16 %v2046, %v2045
        %v2057 = vpack.c.b16 %v2048, %v2047
        %v2058 = vpack.c.b16 %v2050, %v2049
        %2067 = vmatprep.subr.bf16.mxu0 0
        %2068 = vmatpush1.bf16.msra.mxu0 %v2051
        %2069 = vmatprep.subr.bf16.mxu0 0
        %2070 = vmatpush1.bf16.msra.mxu0 %v2052
        %2071 = vmatprep.subr.bf16.mxu0 0
        %2072 = vmatpush1.bf16.msra.mxu0 %v2053
        %2073 = vmatprep.subr.bf16.mxu0 0
        %2074 = vmatpush1.bf16.msra.mxu0 %v2054
        %2075 = vmatprep.subr.bf16.mxu0 0
        %2076 = vmatpush1.bf16.msra.mxu0 %v2055
        %2077 = vmatprep.subr.bf16.mxu0 0
        %2078 = vmatpush1.bf16.msra.mxu0 %v2056
        %2079 = vmatprep.subr.bf16.mxu0 0
        %2080 = vmatpush1.bf16.msra.mxu0 %v2057
        %2081 = vmatprep.subr.bf16.mxu0 0
        %2082 = vmatpush1.bf16.msra.mxu0 %v2058
        %2083 = vmatprep.subr.bf16.mxu0 0
        %2084 = vmatpush1.bf16.msra.mxu0 0
        %2085 = vmatprep.subr.bf16.mxu0 0
        %2086 = vmatpush1.bf16.msra.mxu0 0
        %2087 = vmatprep.subr.bf16.mxu0 0
        %2088 = vmatpush1.bf16.msra.mxu0 0
        %2089 = vmatprep.subr.bf16.mxu0 0
        %2090 = vmatpush1.bf16.msra.mxu0 0
        %2091 = vmatprep.subr.bf16.mxu0 0
        %2092 = vmatpush1.bf16.msra.mxu0 0
        %2093 = vmatprep.subr.bf16.mxu0 0
        %2094 = vmatpush1.bf16.msra.mxu0 0
        %2095 = vmatprep.subr.bf16.mxu0 0
        %2096 = vmatpush1.bf16.msra.mxu0 0
        %2097 = vmatprep.subr.bf16.mxu0 0
        %2098 = vmatpush1.bf16.msra.mxu0 0
        %2099 = vmatprep.mubr.bf16.mxu0 0
        %2100 = vmatmul.mubr.bf16.gmra.mrb[0].mxu0 %v1995
        %v2101 = vpop.f32.mrb[0].mxu0
        %v2102 = vadd.f32 %v2017, %v2101
        %v2103 = vpop.f32.mrb[0].mxu0
        %v2104 = vpop.f32.mrb[0].mxu0
        %v2105 = vpop.f32.mrb[0].mxu0
        %2106 = vdwg.mxu0
        %v2107 = vadd.f32 %v1072, %v2102
        %v2108 = vld [vmem:[#allocation13] sm:$0x1]
        %v2109 = vld [vmem:[#allocation15] sm:$0x1]
        %2110 = vadd.xlane.f32.xlu0 %v2107
        %v2111 = vpop.xlane.xlu0 %2110
        %v2112 = vmul.f32 %v2111, %v1075
        %v2113 = vsub.f32 %v2107, %v2112
        %v2114 = vmul.f32 %v2113, %v2113
        %2115 = vadd.xlane.f32.xlu0 %v2114
        %v2116 = vpop.xlane.xlu0 %2115
        %v2117 = vmul.f32 %v2116, %v1075
        %v2118 = vadd.f32 %v2117, 1e-12
        %v2119 = vrsqrt.pop %v2118
        %v2120 = vmul.f32 %v2113, %v2119
        %v2122 = vlaneseq
        %v2123 = vshrl.u32 %v2122, 7
        %v2124 = vsub.s32 0, %v2123
        %v2125 = vrot.slane %v2108, %v2124
        %v2127 = vmul.f32 %v2120, %v2125
        %v2129 = vlaneseq
        %v2130 = vshrl.u32 %v2129, 7
        %v2131 = vsub.s32 0, %v2130
        %v2132 = vrot.slane %v2109, %v2131
        %v2134 = vadd.f32 %v2127, %v2132
        %v2135 = vpack.c.bf16 %v2134, %v2134
        %v2136 = vld [vmem:[#allocation25] sm:$0xff]
        %v2137 = vld [vmem:[#allocation25 + $0x8] sm:$0xff]
        %v2138 = vld [vmem:[#allocation25 + $0x10] sm:$0xff]
        %v2139 = vld [vmem:[#allocation25 + $0x18] sm:$0xff]
        %v2140 = vld [vmem:[#allocation25 + $0x20] sm:$0xff]
        %v2141 = vld [vmem:[#allocation25 + $0x28] sm:$0xff]
        %v2142 = vld [vmem:[#allocation25 + $0x30] sm:$0xff]
        %v2143 = vld [vmem:[#allocation25 + $0x38] sm:$0xff]
        %v2144 = vld [vmem:[#allocation25 + $0x40] sm:$0xff]
        %v2145 = vld [vmem:[#allocation25 + $0x48] sm:$0xff]
        %v2146 = vld [vmem:[#allocation25 + $0x50] sm:$0xff]
        %v2147 = vld [vmem:[#allocation25 + $0x58] sm:$0xff]
        %v2148 = vld [vmem:[#allocation25 + $0x60] sm:$0xff]
        %v2149 = vld [vmem:[#allocation25 + $0x68] sm:$0xff]
        %v2150 = vld [vmem:[#allocation25 + $0x70] sm:$0xff]
        %v2151 = vld [vmem:[#allocation25 + $0x78] sm:$0xff]
        %v2152 = vld [vmem:[#allocation27] sm:$0x3]
        %v2154 = vlaneseq
        %v2155 = vshrl.u32 %v2154, 7
        %v2156 = vsub.s32 0, %v2155
        %v2157 = vrot.slane %v2152, %v2156
        %v2158 = vlaneseq
        %v2159 = vshrl.u32 %v2158, 7
        %v2160 = vsub.s32 1, %v2159
        %v2161 = vrot.slane %v2152, %v2160
        %v2180 = vunpack.c.l.b16 %v2136
        %v2181 = vunpack.c.h.b16 %v2136
        %v2182 = vunpack.c.l.b16 %v2137
        %v2183 = vunpack.c.h.b16 %v2137
        %v2184 = vunpack.c.l.b16 %v2138
        %v2185 = vunpack.c.h.b16 %v2138
        %v2186 = vunpack.c.l.b16 %v2139
        %v2187 = vunpack.c.h.b16 %v2139
        %v2188 = vunpack.c.l.b16 %v2140
        %v2189 = vunpack.c.h.b16 %v2140
        %v2190 = vunpack.c.l.b16 %v2141
        %v2191 = vunpack.c.h.b16 %v2141
        %v2192 = vunpack.c.l.b16 %v2142
        %v2193 = vunpack.c.h.b16 %v2142
        %v2194 = vunpack.c.l.b16 %v2143
        %v2195 = vunpack.c.h.b16 %v2143
        %v2196 = vunpack.c.l.b16 %v2144
        %v2197 = vunpack.c.h.b16 %v2144
        %v2198 = vunpack.c.l.b16 %v2145
        %v2199 = vunpack.c.h.b16 %v2145
        %v2200 = vunpack.c.l.b16 %v2146
        %v2201 = vunpack.c.h.b16 %v2146
        %v2202 = vunpack.c.l.b16 %v2147
        %v2203 = vunpack.c.h.b16 %v2147
        %v2204 = vunpack.c.l.b16 %v2148
        %v2205 = vunpack.c.h.b16 %v2148
        %v2206 = vunpack.c.l.b16 %v2149
        %v2207 = vunpack.c.h.b16 %v2149
        %v2208 = vunpack.c.l.b16 %v2150
        %v2209 = vunpack.c.h.b16 %v2150
        %v2210 = vunpack.c.l.b16 %v2151
        %v2211 = vunpack.c.h.b16 %v2151
        %v2212 = vpack.c.b16 %v2182, %v2180
        %v2213 = vpack.c.b16 %v2183, %v2181
        %v2214 = vpack.c.b16 %v2186, %v2184
        %v2215 = vpack.c.b16 %v2187, %v2185
        %v2216 = vpack.c.b16 %v2190, %v2188
        %v2217 = vpack.c.b16 %v2191, %v2189
        %v2218 = vpack.c.b16 %v2194, %v2192
        %v2219 = vpack.c.b16 %v2195, %v2193
        %v2220 = vpack.c.b16 %v2198, %v2196
        %v2221 = vpack.c.b16 %v2199, %v2197
        %v2222 = vpack.c.b16 %v2202, %v2200
        %v2223 = vpack.c.b16 %v2203, %v2201
        %v2224 = vpack.c.b16 %v2206, %v2204
        %v2225 = vpack.c.b16 %v2207, %v2205
        %v2226 = vpack.c.b16 %v2210, %v2208
        %v2227 = vpack.c.b16 %v2211, %v2209
        %2244 = vmatprep.subr.bf16.mxu0 %v2213
        %2245 = vmatpush1.bf16.msra.mxu0 %v2212
        %2246 = vmatprep.subr.bf16.mxu0 %v2215
        %2247 = vmatpush1.bf16.msra.mxu0 %v2214
        %2248 = vmatprep.subr.bf16.mxu0 %v2217
        %2249 = vmatpush1.bf16.msra.mxu0 %v2216
        %2250 = vmatprep.subr.bf16.mxu0 %v2219
        %2251 = vmatpush1.bf16.msra.mxu0 %v2218
        %2252 = vmatprep.subr.bf16.mxu0 %v2221
        %2253 = vmatpush1.bf16.msra.mxu0 %v2220
        %2254 = vmatprep.subr.bf16.mxu0 %v2223
        %2255 = vmatpush1.bf16.msra.mxu0 %v2222
        %2256 = vmatprep.subr.bf16.mxu0 %v2225
        %2257 = vmatpush1.bf16.msra.mxu0 %v2224
        %2258 = vmatprep.subr.bf16.mxu0 %v2227
        %2259 = vmatpush1.bf16.msra.mxu0 %v2226
        %2260 = vmatprep.subr.bf16.mxu0 0
        %2261 = vmatpush1.bf16.msra.mxu0 0
        %2262 = vmatprep.subr.bf16.mxu0 0
        %2263 = vmatpush1.bf16.msra.mxu0 0
        %2264 = vmatprep.subr.bf16.mxu0 0
        %2265 = vmatpush1.bf16.msra.mxu0 0
        %2266 = vmatprep.subr.bf16.mxu0 0
        %2267 = vmatpush1.bf16.msra.mxu0 0
        %2268 = vmatprep.subr.bf16.mxu0 0
        %2269 = vmatpush1.bf16.msra.mxu0 0
        %2270 = vmatprep.subr.bf16.mxu0 0
        %2271 = vmatpush1.bf16.msra.mxu0 0
        %2272 = vmatprep.subr.bf16.mxu0 0
        %2273 = vmatpush1.bf16.msra.mxu0 0
        %2274 = vmatprep.subr.bf16.mxu0 0
        %2275 = vmatpush1.bf16.msra.mxu0 0
        %2276 = vmatprep.mubr.bf16.mxu0 0
        %2277 = vmatmul.mubr.bf16.gmra.mrb[0].mxu0 %v2135
        %v2278 = vpop.f32.mrb[0].mxu0
        %v2279 = vadd.f32 %v2157, %v2278
        %v2280 = vpop.f32.mrb[0].mxu0
        %v2281 = vadd.f32 %v2161, %v2280
        %v2282 = vpop.f32.mrb[0].mxu0
        %v2283 = vpop.f32.mrb[0].mxu0
        %2284 = vdwg.mxu0
        %v2285 = vmax.f32 %v2279, 0.0
        %v2286 = vmax.f32 %v2281, 0.0
        %v2287 = vpack.c.bf16 %v2285, %v2285
        %v2288 = vpack.c.bf16 %v2286, %v2286
        %v2289 = vld [vmem:[#allocation28] sm:$0xf]
        %v2290 = vld [vmem:[#allocation28 + $0x4] sm:$0xf]
        %v2291 = vld [vmem:[#allocation28 + $0x8] sm:$0xf]
        %v2292 = vld [vmem:[#allocation28 + $0xc] sm:$0xf]
        %v2293 = vld [vmem:[#allocation28 + $0x10] sm:$0xf]
        %v2294 = vld [vmem:[#allocation28 + $0x14] sm:$0xf]
        %v2295 = vld [vmem:[#allocation28 + $0x18] sm:$0xf]
        %v2296 = vld [vmem:[#allocation28 + $0x1c] sm:$0xf]
        %v2297 = vld [vmem:[#allocation28 + $0x20] sm:$0xf]
        %v2298 = vld [vmem:[#allocation28 + $0x24] sm:$0xf]
        %v2299 = vld [vmem:[#allocation28 + $0x28] sm:$0xf]
        %v2300 = vld [vmem:[#allocation28 + $0x2c] sm:$0xf]
        %v2301 = vld [vmem:[#allocation28 + $0x30] sm:$0xf]
        %v2302 = vld [vmem:[#allocation28 + $0x34] sm:$0xf]
        %v2303 = vld [vmem:[#allocation28 + $0x38] sm:$0xf]
        %v2304 = vld [vmem:[#allocation28 + $0x3c] sm:$0xf]
        %v2305 = vld [vmem:[#allocation28 + $0x40] sm:$0xf]
        %v2306 = vld [vmem:[#allocation28 + $0x44] sm:$0xf]
        %v2307 = vld [vmem:[#allocation28 + $0x48] sm:$0xf]
        %v2308 = vld [vmem:[#allocation28 + $0x4c] sm:$0xf]
        %v2309 = vld [vmem:[#allocation28 + $0x50] sm:$0xf]
        %v2310 = vld [vmem:[#allocation28 + $0x54] sm:$0xf]
        %v2311 = vld [vmem:[#allocation28 + $0x58] sm:$0xf]
        %v2312 = vld [vmem:[#allocation28 + $0x5c] sm:$0xf]
        %v2313 = vld [vmem:[#allocation28 + $0x60] sm:$0xf]
        %v2314 = vld [vmem:[#allocation28 + $0x64] sm:$0xf]
        %v2315 = vld [vmem:[#allocation28 + $0x68] sm:$0xf]
        %v2316 = vld [vmem:[#allocation28 + $0x6c] sm:$0xf]
        %v2317 = vld [vmem:[#allocation28 + $0x70] sm:$0xf]
        %v2318 = vld [vmem:[#allocation28 + $0x74] sm:$0xf]
        %v2319 = vld [vmem:[#allocation28 + $0x78] sm:$0xf]
        %v2320 = vld [vmem:[#allocation28 + $0x7c] sm:$0xf]
        %v2321 = vld [vmem:[#allocation30] sm:$0x1]
        %v2323 = vlaneseq
        %v2324 = vshrl.u32 %v2323, 7
        %v2325 = vsub.s32 0, %v2324
        %v2326 = vrot.slane %v2321, %v2325
        %v2360 = vunpack.c.l.b16 %v2289
        %v2361 = vunpack.c.l.b16 %v2290
        %v2362 = vunpack.c.l.b16 %v2291
        %v2363 = vunpack.c.l.b16 %v2292
        %v2364 = vunpack.c.l.b16 %v2293
        %v2365 = vunpack.c.l.b16 %v2294
        %v2366 = vunpack.c.l.b16 %v2295
        %v2367 = vunpack.c.l.b16 %v2296
        %v2368 = vunpack.c.l.b16 %v2297
        %v2369 = vunpack.c.l.b16 %v2298
        %v2370 = vunpack.c.l.b16 %v2299
        %v2371 = vunpack.c.l.b16 %v2300
        %v2372 = vunpack.c.l.b16 %v2301
        %v2373 = vunpack.c.l.b16 %v2302
        %v2374 = vunpack.c.l.b16 %v2303
        %v2375 = vunpack.c.l.b16 %v2304
        %v2376 = vunpack.c.l.b16 %v2305
        %v2377 = vunpack.c.l.b16 %v2306
        %v2378 = vunpack.c.l.b16 %v2307
        %v2379 = vunpack.c.l.b16 %v2308
        %v2380 = vunpack.c.l.b16 %v2309
        %v2381 = vunpack.c.l.b16 %v2310
        %v2382 = vunpack.c.l.b16 %v2311
        %v2383 = vunpack.c.l.b16 %v2312
        %v2384 = vunpack.c.l.b16 %v2313
        %v2385 = vunpack.c.l.b16 %v2314
        %v2386 = vunpack.c.l.b16 %v2315
        %v2387 = vunpack.c.l.b16 %v2316
        %v2388 = vunpack.c.l.b16 %v2317
        %v2389 = vunpack.c.l.b16 %v2318
        %v2390 = vunpack.c.l.b16 %v2319
        %v2391 = vunpack.c.l.b16 %v2320
        %v2392 = vpack.c.b16 %v2361, %v2360
        %v2393 = vpack.c.b16 %v2363, %v2362
        %v2394 = vpack.c.b16 %v2365, %v2364
        %v2395 = vpack.c.b16 %v2367, %v2366
        %v2396 = vpack.c.b16 %v2369, %v2368
        %v2397 = vpack.c.b16 %v2371, %v2370
        %v2398 = vpack.c.b16 %v2373, %v2372
        %v2399 = vpack.c.b16 %v2375, %v2374
        %v2400 = vpack.c.b16 %v2377, %v2376
        %v2401 = vpack.c.b16 %v2379, %v2378
        %v2402 = vpack.c.b16 %v2381, %v2380
        %v2403 = vpack.c.b16 %v2383, %v2382
        %v2404 = vpack.c.b16 %v2385, %v2384
        %v2405 = vpack.c.b16 %v2387, %v2386
        %v2406 = vpack.c.b16 %v2389, %v2388
        %v2407 = vpack.c.b16 %v2391, %v2390
        %2424 = vmatprep.subr.bf16.mxu0 0
        %2425 = vmatpush1.bf16.msra.mxu0 %v2392
        %2426 = vmatprep.subr.bf16.mxu0 0
        %2427 = vmatpush1.bf16.msra.mxu0 %v2393
        %2428 = vmatprep.subr.bf16.mxu0 0
        %2429 = vmatpush1.bf16.msra.mxu0 %v2394
        %2430 = vmatprep.subr.bf16.mxu0 0
        %2431 = vmatpush1.bf16.msra.mxu0 %v2395
        %2432 = vmatprep.subr.bf16.mxu0 0
        %2433 = vmatpush1.bf16.msra.mxu0 %v2396
        %2434 = vmatprep.subr.bf16.mxu0 0
        %2435 = vmatpush1.bf16.msra.mxu0 %v2397
        %2436 = vmatprep.subr.bf16.mxu0 0
        %2437 = vmatpush1.bf16.msra.mxu0 %v2398
        %2438 = vmatprep.subr.bf16.mxu0 0
        %2439 = vmatpush1.bf16.msra.mxu0 %v2399
        %2440 = vmatprep.subr.bf16.mxu0 0
        %2441 = vmatpush1.bf16.msra.mxu0 %v2400
        %2442 = vmatprep.subr.bf16.mxu0 0
        %2443 = vmatpush1.bf16.msra.mxu0 %v2401
        %2444 = vmatprep.subr.bf16.mxu0 0
        %2445 = vmatpush1.bf16.msra.mxu0 %v2402
        %2446 = vmatprep.subr.bf16.mxu0 0
        %2447 = vmatpush1.bf16.msra.mxu0 %v2403
        %2448 = vmatprep.subr.bf16.mxu0 0
        %2449 = vmatpush1.bf16.msra.mxu0 %v2404
        %2450 = vmatprep.subr.bf16.mxu0 0
        %2451 = vmatpush1.bf16.msra.mxu0 %v2405
        %2452 = vmatprep.subr.bf16.mxu0 0
        %2453 = vmatpush1.bf16.msra.mxu0 %v2406
        %2454 = vmatprep.subr.bf16.mxu0 0
        %2455 = vmatpush1.bf16.msra.mxu0 %v2407
        %2456 = vmatprep.mubr.bf16.mxu0 %v2288
        %2457 = vmatmul.mubr.bf16.gmra.mrb[0].mxu0 %v2287
        %v2458 = vpop.f32.mrb[0].mxu0
        %v2459 = vadd.f32 %v2326, %v2458
        %v2460 = vpop.f32.mrb[0].mxu0
        %v2461 = vpop.f32.mrb[0].mxu0
        %v2462 = vpop.f32.mrb[0].mxu0
        %2463 = vdwg.mxu0
        %v2464 = vadd.f32 %v2107, %v2459
        %2465 = vst [vmem:[%s820] sm:$0xff] %v2464
        %s2466 = sand.u32 %s438, 1
        %s2467 = scalar_lea.sflag [#allocation6], %s2466
        %s2468 = sand.u32 %s438, 1
        %s2469 = smul.addr %s2468, 8
        %s2470 = scalar_lea.vmem [#allocation31], %s2469
        // Predicated region
        $region161: #{tpu_custom_call.1} parent=87 // pred_check
          %p2471 = pneg %p448
        $region162: #{tpu_custom_call.1} parent=87 // pred_check_branch
          %2473 = sbr.rel (%p2471) target = $region164
        $region163: #{tpu_custom_call.1} parent=87 // pred_region
          %s2475 = ssub.s32 128, 128
          %2476 = vsyncadd %s2467, %s2475
          %s2477 = smul.addr %s46, 2
          %s2478 = sadd.s32 %s47, %s2477
          %s2479 = smul.addr %s2478, 128
          %s2480 = scalar_lea.hbm %s17, %s2479
          %s2482 = sshll.u32 %s2470, 4
          %s2483 = int_to_ptr.vmem [resolvable:$true] %s2482
          %2485 = dma.vmem_to_hbm [thread:$0]  %s2483, 128, %s2480, %s2467
        $region164: #{tpu_custom_call.1} parent=87 // pred_fallthru
          _
      $region88: #{tpu_custom_call.1} parent=5 // pred_fallthru
        _
      %p2486 = scmp.le.s32.totalorder 2, %s37
      // Predicated region
      $region165: #{tpu_custom_call.1} parent=5 // pred_check
        %p2487 = pneg %p2486
      $region166: #{tpu_custom_call.1} parent=5 // pred_check_branch
        %2489 = sbr.rel (%p2487) target = $region168
      $region167: #{tpu_custom_call.1} parent=5 // pred_region
        %s2490 = ssub.s32 %s37, 2
        // Predicated region
        $region169: #{tpu_custom_call.1} parent=167 // pred_check
          %p2491 = pneg %p454
        $region170: #{tpu_custom_call.1} parent=167 // pred_check_branch
          %2493 = sbr.rel (%p2491) target = $region172
        $region171: #{tpu_custom_call.1} parent=167 // pred_region
          %s2494 = sand.u32 %s439, 1
          %s2495 = scalar_lea.sflag [#allocation6], %s2494
          %s2496 = sand.u32 %s439, 1
          %s2497 = smul.addr %s2496, 8
          %s2498 = scalar_lea.vmem [#allocation31], %s2497
          %2499 = dma.done %s2495, 128
        $region172: #{tpu_custom_call.1} parent=167 // pred_fallthru
          _
      $region168: #{tpu_custom_call.1} parent=5 // pred_fallthru
        _
    $region6: #{tpu_custom_call.1} parent=1 // loop_footer
      %s41 = sadd.s32 1, %s37
    $region7: #{tpu_custom_call.1} parent=1 // loop_footer_branch
      %36 = sbr.rel target = $region3
    $region8: #{tpu_custom_call.1} parent=1 // loop_exit
      _
    %2500 = vsyncpa [#allocation5], 1
    %s2501 = scalar_lea.sflag [#allocation5], 1
    %2502 = vsyncpa %s2501, 1
    %2503 = vsyncpa [#allocation8], 1
    %s2504 = scalar_lea.sflag [#allocation8], 1
    %2505 = vsyncpa %s2504, 1
    %2506 = vsyncpa [#allocation11], 1
    %2507 = vsyncpa [#allocation14], 1
    %2508 = vsyncpa [#allocation17], 1
    %2509 = vsyncpa [#allocation20], 1
    %2510 = vsyncpa [#allocation23], 1
    %2511 = vsyncpa [#allocation26], 1
    %2512 = vsyncpa [#allocation29], 1
    %2513 = vsyncpa [#allocation6], 1
    %s2514 = scalar_lea.sflag [#allocation6], 1
    %2515 = vsyncpa %s2514, 1

// kernel: tpu_custom_call.1
$region0: #{tpu_custom_call.1}
  #allocation0 [shape = 'u32[]', space=smem, size = 0x4, offset = 0x4, fixed_abs, tag = 'smem constant byte address 0x4 - core index']
  #allocation1 [shape = 'u32[144,128]{1,0:T(1,128)}', space=vmem, size = 0x12000, scoped, tag = 'internal scratch']
  #allocation2 [shape = 'bf16[1,4,32,16]{3,2,1,0:T(16,128)(2,1)}', space=vmem, size = 0x8000, scoped, tag = 'scratch operand']
  #allocation3 [shape = 'bf16[1,16,128]{2,1,0:T(16,128)(2,1)}', space=vmem, size = 0x1000, scoped, tag = 'scratch operand']
  %s0 = inlined_call_operand.hbm [shape: f32[2,16,128], index: 0, kind: input, shape index: {}]
  %s1 = inlined_call_operand.hbm [shape: f32[2,16,128], index: 1, kind: input, shape index: {}]
  %s2 = inlined_call_operand.hbm [shape: f32[2,1,16], index: 2, kind: input, shape index: {}]
  %s3 = inlined_call_operand.hbm [shape: f32[1,128], index: 3, kind: input, shape index: {}]
  %s4 = inlined_call_operand.hbm [shape: f32[1,128], index: 4, kind: input, shape index: {}]
  %s5 = inlined_call_operand.hbm [shape: f32[1,128], index: 5, kind: input, shape index: {}]
  %s6 = inlined_call_operand.hbm [shape: f32[1,128], index: 6, kind: input, shape index: {}]
  %s7 = inlined_call_operand.hbm [shape: bf16[128,128], index: 7, kind: input, shape index: {}]
  %s8 = inlined_call_operand.hbm [shape: f32[1,128], index: 8, kind: input, shape index: {}]
  %s9 = inlined_call_operand.hbm [shape: bf16[128,256], index: 9, kind: input, shape index: {}]
  %s10 = inlined_call_operand.hbm [shape: f32[1,256], index: 10, kind: input, shape index: {}]
  %s11 = inlined_call_operand.hbm [shape: bf16[128,128], index: 11, kind: input, shape index: {}]
  %s12 = inlined_call_operand.hbm [shape: f32[1,128], index: 12, kind: input, shape index: {}]
  %s13 = inlined_call_operand.hbm [shape: bf16[128,256], index: 13, kind: input, shape index: {}]
  %s14 = inlined_call_operand.hbm [shape: f32[1,256], index: 14, kind: input, shape index: {}]
  %s15 = inlined_call_operand.hbm [shape: bf16[256,128], index: 15, kind: input, shape index: {}]
  %s16 = inlined_call_operand.hbm [shape: f32[1,128], index: 16, kind: input, shape index: {}]
  %s17 = inlined_call_operand.hbm [shape: f32[2,16,128], index: 17, kind: output, shape index: {}]
  %s18 = sld [smem:[#allocation0]]
  $region173: #{tpu_custom_call.1} parent=0
    _
  %s20 = ssub.s32 1, %s18
  %s21 = scalar_select 0, %s20, %s18
  $region1: #{tpu_custom_call.1} parent=0
    #allocation4 [shape = 'u8[16384]{0}', space=vmem, size = 0x4000, scoped, tag = 'input window, operand 0']
    #allocation5 [shape = 's32[2]{0}', space=sflag, size = 0x8, scoped, tag = 'scoped memory for tpu_custom_call.1']
    #allocation6 [shape = 's32[2]{0}', space=sflag, size = 0x8, scoped, tag = 'scoped memory for tpu_custom_call.1']
    #allocation7 [shape = 'u8[8192]{0}', space=vmem, size = 0x2000, scoped, tag = 'input window, operand 1']
    #allocation8 [shape = 's32[2]{0}', space=sflag, size = 0x8, scoped, tag = 'scoped memory for tpu_custom_call.1']
    #allocation9 [shape = 'u8[1024]{0}', space=vmem, size = 0x400, scoped, tag = 'input window, operand 2']
    #allocation10 [shape = 'u8[512]{0}', space=vmem, size = 0x400, scoped, tag = 'input window, operand 3, single buffered']
    #allocation11 [shape = 's32[1]{0}', space=sflag, size = 0x4, scoped, tag = 'scoped memory for tpu_custom_call.1']
    #allocation12 [shape = 'u8[512]{0}', space=vmem, size = 0x400, scoped, tag = 'input window, operand 4, single buffered']
    #allocation13 [shape = 'u8[512]{0}', space=vmem, size = 0x400, scoped, tag = 'input window, operand 5, single buffered']
    #allocation14 [shape = 's32[1]{0}', space=sflag, size = 0x4, scoped, tag = 'scoped memory for tpu_custom_call.1']
    #allocation15 [shape = 'u8[512]{0}', space=vmem, size = 0x400, scoped, tag = 'input window, operand 6, single buffered']
    #allocation16 [shape = 'u8[32768]{0}', space=vmem, size = 0x8000, scoped, tag = 'input window, operand 7, single buffered']
    #allocation17 [shape = 's32[1]{0}', space=sflag, size = 0x4, scoped, tag = 'scoped memory for tpu_custom_call.1']
    #allocation18 [shape = 'u8[512]{0}', space=vmem, size = 0x400, scoped, tag = 'input window, operand 8, single buffered']
    #allocation19 [shape = 'u8[65536]{0}', space=vmem, size = 0x10000, scoped, tag = 'input window, operand 9, single buffered']
    #allocation20 [shape = 's32[1]{0}', space=sflag, size = 0x4, scoped, tag = 'scoped memory for tpu_custom_call.1']
    #allocation21 [shape = 'u8[1024]{0}', space=vmem, size = 0x400, scoped, tag = 'input window, operand 10, single buffered']
    #allocation22 [shape = 'u8[32768]{0}', space=vmem, size = 0x8000, scoped, tag = 'input window, operand 11, single buffered']
    #allocation23 [shape = 's32[1]{0}', space=sflag, size = 0x4, scoped, tag = 'scoped memory for tpu_custom_call.1']
    #allocation24 [shape = 'u8[512]{0}', space=vmem, size = 0x400, scoped, tag = 'input window, operand 12, single buffered']
    #allocation25 [shape = 'u8[65536]{0}', space=vmem, size = 0x10000, scoped, tag = 'input window, operand 13, single buffered']
    #allocation26 [shape = 's32[1]{0}', space=sflag, size = 0x4, scoped, tag = 'scoped memory for tpu_custom_call.1']
    #allocation27 [shape = 'u8[1024]{0}', space=vmem, size = 0x400, scoped, tag = 'input window, operand 14, single buffered']
    #allocation28 [shape = 'u8[65536]{0}', space=vmem, size = 0x10000, scoped, tag = 'input window, operand 15, single buffered']
    #allocation29 [shape = 's32[1]{0}', space=sflag, size = 0x4, scoped, tag = 'scoped memory for tpu_custom_call.1']
    #allocation30 [shape = 'u8[512]{0}', space=vmem, size = 0x400, scoped, tag = 'input window, operand 16, single buffered']
    #allocation31 [shape = 'u8[8192]{0}', space=vmem, size = 0x2000, scoped, tag = 'output window, operand 0']
    %22 = vsyncpa [#allocation5], 0
    %s23 = scalar_lea.sflag [#allocation5], 1
    %24 = vsyncpa %s23, 0
    %25 = vsyncpa [#allocation8], 0
    %s26 = scalar_lea.sflag [#allocation8], 1
    %27 = vsyncpa %s26, 0
    %28 = vsyncpa [#allocation11], 0
    %29 = vsyncpa [#allocation14], 0
    %30 = vsyncpa [#allocation17], 0
    %31 = vsyncpa [#allocation20], 0
    %32 = vsyncpa [#allocation23], 0
    %33 = vsyncpa [#allocation26], 0
    %34 = vsyncpa [#allocation29], 0
    %35 = vsyncpa [#allocation6], 0
    %s36 = scalar_lea.sflag [#allocation6], 1
    %37 = vsyncpa %s36, 0
    loop: start=0, step=1, limit=6
    $region2: #{tpu_custom_call.1} parent=1 // loop_pre_header
      _
    $region3: #{tpu_custom_call.1} parent=1 // loop_header
      %s39 = sphi 0, %s43
      %p40 = scmp.ge.s32.totalorder %s39, 6
      %s46 = sphi 0, %s58
      %s47 = sphi 0, %s54
      %s48 = sphi 0, %s46
      %s49 = sphi 0, %s47
      %s50 = sphi 0, %s48
      %s51 = sphi 0, %s49
      %s61 = sphi 0, %s63
      %s64 = sphi 0, %s61
      %s65 = sphi 0, %s64
      %s81 = sphi 0, %s65
      %s89 = sphi 0, %s91
      %s92 = sphi 0, %s89
      %s93 = sphi 0, %s92
      %s109 = sphi 0, %s93
      %s115 = sphi 0, %s117
      %s118 = sphi 0, %s115
      %s119 = sphi 0, %s118
      %s135 = sphi 0, %s119
      %s139 = sphi 0, %s139
      %s141 = sphi 0, %s139
      %s142 = sphi 0, %s141
      %s156 = sphi 0, %s142
      %s160 = sphi 0, %s160
      %s162 = sphi 0, %s160
      %s163 = sphi 0, %s162
      %s177 = sphi 0, %s163
      %s181 = sphi 0, %s181
      %s183 = sphi 0, %s181
      %s184 = sphi 0, %s183
      %s198 = sphi 0, %s184
      %s202 = sphi 0, %s202
      %s204 = sphi 0, %s202
      %s205 = sphi 0, %s204
      %s219 = sphi 0, %s205
      %s223 = sphi 0, %s223
      %s225 = sphi 0, %s223
      %s226 = sphi 0, %s225
      %s240 = sphi 0, %s226
      %s244 = sphi 0, %s244
      %s246 = sphi 0, %s244
      %s247 = sphi 0, %s246
      %s261 = sphi 0, %s247
      %s265 = sphi 0, %s265
      %s267 = sphi 0, %s265
      %s268 = sphi 0, %s267
      %s282 = sphi 0, %s268
      %s286 = sphi 0, %s286
      %s288 = sphi 0, %s286
      %s289 = sphi 0, %s288
      %s303 = sphi 0, %s289
      %s307 = sphi 0, %s307
      %s309 = sphi 0, %s307
      %s310 = sphi 0, %s309
      %s324 = sphi 0, %s310
      %s328 = sphi 0, %s328
      %s330 = sphi 0, %s328
      %s331 = sphi 0, %s330
      %s345 = sphi 0, %s331
      %s349 = sphi 0, %s349
      %s351 = sphi 0, %s349
      %s352 = sphi 0, %s351
      %s366 = sphi 0, %s352
      %s370 = sphi 0, %s370
      %s372 = sphi 0, %s370
      %s373 = sphi 0, %s372
      %s387 = sphi 0, %s373
      %s391 = sphi 0, %s391
      %s393 = sphi 0, %s391
      %s394 = sphi 0, %s393
      %s408 = sphi 0, %s394
      %s412 = sphi 0, %s412
      %s414 = sphi 0, %s412
      %s415 = sphi 0, %s414
      %s429 = sphi 0, %s415
      %s437 = sphi 0, %s439
      %s440 = sphi 0, %s437
      %s441 = sphi 0, %s440
      %s457 = sphi 0, %s441
    $region4: #{tpu_custom_call.1} parent=1 // loop_header_branch
      %42 = sbr.rel (%p40) target = $region8
    $region5: #{tpu_custom_call.1} parent=1 // loop_body
      %s44 = ssub.s32 %s39, 1
      %s45 = ssub.s32 %s39, 2
      %s52 = sadd.s32 1, %s47
      %p53 = scmp.ge.s32.totalorder %s52, 2
      %s54 = scalar_select %p53, 0, %s52
      %s55 = sadd.s32 1, %s46
      %s56 = scalar_select %p53, %s55, %s46
      %p57 = scmp.ge.s32.totalorder %s56, 2
      %s58 = scalar_select %p57, 0, %s56
      %s59 = ssub.s32 %s46, %s58
      %p60 = scmp.eq.s32.totalorder %s59, 0
      %s62 = sadd.s32 %s61, 1
      %s63 = scalar_select %p60, %s61, %s62
      %p66 = pneg %p60
      %p67 = scmp.eq.s32.totalorder %s39, 3
      %p68 = por %p66, %p67
      %p69 = scmp.ne.s32.totalorder %s61, %s64
      %p70 = scmp.eq.s32.totalorder %s39, 0
      %p71 = por %p69, %p70
      %p72 = scmp.ne.s32.totalorder %s61, %s64
      %p73 = scmp.eq.s32.totalorder %s44, 3
      %p74 = por %p72, %p73
      %p75 = scmp.ne.s32.totalorder %s64, %s65
      %p76 = scmp.eq.s32.totalorder %s44, 0
      %p77 = por %p75, %p76
      %p78 = scmp.ne.s32.totalorder %s64, %s65
      %p79 = scmp.eq.s32.totalorder %s45, 3
      %p80 = por %p78, %p79
      %p82 = scmp.ne.s32.totalorder %s65, %s81
      %p83 = scmp.eq.s32.totalorder %s45, 0
      %p84 = por %p82, %p83
      %s85 = ssub.s32 %s46, %s58
      %s86 = ssub.s32 %s47, %s54
      %s87 = sor.u32 %s85, %s86
      %p88 = scmp.eq.s32.totalorder %s87, 0
      %s90 = sadd.s32 %s89, 1
      %s91 = scalar_select %p88, %s89, %s90
      %p94 = pneg %p88
      %p95 = scmp.eq.s32.totalorder %s39, 3
      %p96 = por %p94, %p95
      %p97 = scmp.ne.s32.totalorder %s89, %s92
      %p98 = scmp.eq.s32.totalorder %s39, 0
      %p99 = por %p97, %p98
      %p100 = scmp.ne.s32.totalorder %s89, %s92
      %p101 = scmp.eq.s32.totalorder %s44, 3
      %p102 = por %p100, %p101
      %p103 = scmp.ne.s32.totalorder %s92, %s93
      %p104 = scmp.eq.s32.totalorder %s44, 0
      %p105 = por %p103, %p104
      %p106 = scmp.ne.s32.totalorder %s92, %s93
      %p107 = scmp.eq.s32.totalorder %s45, 3
      %p108 = por %p106, %p107
      %p110 = scmp.ne.s32.totalorder %s93, %s109
      %p111 = scmp.eq.s32.totalorder %s45, 0
      %p112 = por %p110, %p111
      %s113 = ssub.s32 %s46, %s58
      %p114 = scmp.eq.s32.totalorder %s113, 0
      %s116 = sadd.s32 %s115, 1
      %s117 = scalar_select %p114, %s115, %s116
      %p120 = pneg %p114
      %p121 = scmp.eq.s32.totalorder %s39, 3
      %p122 = por %p120, %p121
      %p123 = scmp.ne.s32.totalorder %s115, %s118
      %p124 = scmp.eq.s32.totalorder %s39, 0
      %p125 = por %p123, %p124
      %p126 = scmp.ne.s32.totalorder %s115, %s118
      %p127 = scmp.eq.s32.totalorder %s44, 3
      %p128 = por %p126, %p127
      %p129 = scmp.ne.s32.totalorder %s118, %s119
      %p130 = scmp.eq.s32.totalorder %s44, 0
      %p131 = por %p129, %p130
      %p132 = scmp.ne.s32.totalorder %s118, %s119
      %p133 = scmp.eq.s32.totalorder %s45, 3
      %p134 = por %p132, %p133
      %p136 = scmp.ne.s32.totalorder %s119, %s135
      %p137 = scmp.eq.s32.totalorder %s45, 0
      %p138 = por %p136, %p137
      %s140 = sadd.s32 %s139, 1
      %p143 = scmp.eq.s32.totalorder %s39, 3
      %p144 = scmp.ne.s32.totalorder %s139, %s141
      %p145 = scmp.eq.s32.totalorder %s39, 0
      %p146 = por %p144, %p145
      %p147 = scmp.ne.s32.totalorder %s139, %s141
      %p148 = scmp.eq.s32.totalorder %s44, 3
      %p149 = por %p147, %p148
      %p150 = scmp.ne.s32.totalorder %s141, %s142
      %p151 = scmp.eq.s32.totalorder %s44, 0
      %p152 = por %p150, %p151
      %p153 = scmp.ne.s32.totalorder %s141, %s142
      %p154 = scmp.eq.s32.totalorder %s45, 3
      %p155 = por %p153, %p154
      %p157 = scmp.ne.s32.totalorder %s142, %s156
      %p158 = scmp.eq.s32.totalorder %s45, 0
      %p159 = por %p157, %p158
      %s161 = sadd.s32 %s160, 1
      %p164 = scmp.eq.s32.totalorder %s39, 3
      %p165 = scmp.ne.s32.totalorder %s160, %s162
      %p166 = scmp.eq.s32.totalorder %s39, 0
      %p167 = por %p165, %p166
      %p168 = scmp.ne.s32.totalorder %s160, %s162
      %p169 = scmp.eq.s32.totalorder %s44, 3
      %p170 = por %p168, %p169
      %p171 = scmp.ne.s32.totalorder %s162, %s163
      %p172 = scmp.eq.s32.totalorder %s44, 0
      %p173 = por %p171, %p172
      %p174 = scmp.ne.s32.totalorder %s162, %s163
      %p175 = scmp.eq.s32.totalorder %s45, 3
      %p176 = por %p174, %p175
      %p178 = scmp.ne.s32.totalorder %s163, %s177
      %p179 = scmp.eq.s32.totalorder %s45, 0
      %p180 = por %p178, %p179
      %s182 = sadd.s32 %s181, 1
      %p185 = scmp.eq.s32.totalorder %s39, 3
      %p186 = scmp.ne.s32.totalorder %s181, %s183
      %p187 = scmp.eq.s32.totalorder %s39, 0
      %p188 = por %p186, %p187
      %p189 = scmp.ne.s32.totalorder %s181, %s183
      %p190 = scmp.eq.s32.totalorder %s44, 3
      %p191 = por %p189, %p190
      %p192 = scmp.ne.s32.totalorder %s183, %s184
      %p193 = scmp.eq.s32.totalorder %s44, 0
      %p194 = por %p192, %p193
      %p195 = scmp.ne.s32.totalorder %s183, %s184
      %p196 = scmp.eq.s32.totalorder %s45, 3
      %p197 = por %p195, %p196
      %p199 = scmp.ne.s32.totalorder %s184, %s198
      %p200 = scmp.eq.s32.totalorder %s45, 0
      %p201 = por %p199, %p200
      %s203 = sadd.s32 %s202, 1
      %p206 = scmp.eq.s32.totalorder %s39, 3
      %p207 = scmp.ne.s32.totalorder %s202, %s204
      %p208 = scmp.eq.s32.totalorder %s39, 0
      %p209 = por %p207, %p208
      %p210 = scmp.ne.s32.totalorder %s202, %s204
      %p211 = scmp.eq.s32.totalorder %s44, 3
      %p212 = por %p210, %p211
      %p213 = scmp.ne.s32.totalorder %s204, %s205
      %p214 = scmp.eq.s32.totalorder %s44, 0
      %p215 = por %p213, %p214
      %p216 = scmp.ne.s32.totalorder %s204, %s205
      %p217 = scmp.eq.s32.totalorder %s45, 3
      %p218 = por %p216, %p217
      %p220 = scmp.ne.s32.totalorder %s205, %s219
      %p221 = scmp.eq.s32.totalorder %s45, 0
      %p222 = por %p220, %p221
      %s224 = sadd.s32 %s223, 1
      %p227 = scmp.eq.s32.totalorder %s39, 3
      %p228 = scmp.ne.s32.totalorder %s223, %s225
      %p229 = scmp.eq.s32.totalorder %s39, 0
      %p230 = por %p228, %p229
      %p231 = scmp.ne.s32.totalorder %s223, %s225
      %p232 = scmp.eq.s32.totalorder %s44, 3
      %p233 = por %p231, %p232
      %p234 = scmp.ne.s32.totalorder %s225, %s226
      %p235 = scmp.eq.s32.totalorder %s44, 0
      %p236 = por %p234, %p235
      %p237 = scmp.ne.s32.totalorder %s225, %s226
      %p238 = scmp.eq.s32.totalorder %s45, 3
      %p239 = por %p237, %p238
      %p241 = scmp.ne.s32.totalorder %s226, %s240
      %p242 = scmp.eq.s32.totalorder %s45, 0
      %p243 = por %p241, %p242
      %s245 = sadd.s32 %s244, 1
      %p248 = scmp.eq.s32.totalorder %s39, 3
      %p249 = scmp.ne.s32.totalorder %s244, %s246
      %p250 = scmp.eq.s32.totalorder %s39, 0
      %p251 = por %p249, %p250
      %p252 = scmp.ne.s32.totalorder %s244, %s246
      %p253 = scmp.eq.s32.totalorder %s44, 3
      %p254 = por %p252, %p253
      %p255 = scmp.ne.s32.totalorder %s246, %s247
      %p256 = scmp.eq.s32.totalorder %s44, 0
      %p257 = por %p255, %p256
      %p258 = scmp.ne.s32.totalorder %s246, %s247
      %p259 = scmp.eq.s32.totalorder %s45, 3
      %p260 = por %p258, %p259
      %p262 = scmp.ne.s32.totalorder %s247, %s261
      %p263 = scmp.eq.s32.totalorder %s45, 0
      %p264 = por %p262, %p263
      %s266 = sadd.s32 %s265, 1
      %p269 = scmp.eq.s32.totalorder %s39, 3
      %p270 = scmp.ne.s32.totalorder %s265, %s267
      %p271 = scmp.eq.s32.totalorder %s39, 0
      %p272 = por %p270, %p271
      %p273 = scmp.ne.s32.totalorder %s265, %s267
      %p274 = scmp.eq.s32.totalorder %s44, 3
      %p275 = por %p273, %p274
      %p276 = scmp.ne.s32.totalorder %s267, %s268
      %p277 = scmp.eq.s32.totalorder %s44, 0
      %p278 = por %p276, %p277
      %p279 = scmp.ne.s32.totalorder %s267, %s268
      %p280 = scmp.eq.s32.totalorder %s45, 3
      %p281 = por %p279, %p280
      %p283 = scmp.ne.s32.totalorder %s268, %s282
      %p284 = scmp.eq.s32.totalorder %s45, 0
      %p285 = por %p283, %p284
      %s287 = sadd.s32 %s286, 1
      %p290 = scmp.eq.s32.totalorder %s39, 3
      %p291 = scmp.ne.s32.totalorder %s286, %s288
      %p292 = scmp.eq.s32.totalorder %s39, 0
      %p293 = por %p291, %p292
      %p294 = scmp.ne.s32.totalorder %s286, %s288
      %p295 = scmp.eq.s32.totalorder %s44, 3
      %p296 = por %p294, %p295
      %p297 = scmp.ne.s32.totalorder %s288, %s289
      %p298 = scmp.eq.s32.totalorder %s44, 0
      %p299 = por %p297, %p298
      %p300 = scmp.ne.s32.totalorder %s288, %s289
      %p301 = scmp.eq.s32.totalorder %s45, 3
      %p302 = por %p300, %p301
      %p304 = scmp.ne.s32.totalorder %s289, %s303
      %p305 = scmp.eq.s32.totalorder %s45, 0
      %p306 = por %p304, %p305
      %s308 = sadd.s32 %s307, 1
      %p311 = scmp.eq.s32.totalorder %s39, 3
      %p312 = scmp.ne.s32.totalorder %s307, %s309
      %p313 = scmp.eq.s32.totalorder %s39, 0
      %p314 = por %p312, %p313
      %p315 = scmp.ne.s32.totalorder %s307, %s309
      %p316 = scmp.eq.s32.totalorder %s44, 3
      %p317 = por %p315, %p316
      %p318 = scmp.ne.s32.totalorder %s309, %s310
      %p319 = scmp.eq.s32.totalorder %s44, 0
      %p320 = por %p318, %p319
      %p321 = scmp.ne.s32.totalorder %s309, %s310
      %p322 = scmp.eq.s32.totalorder %s45, 3
      %p323 = por %p321, %p322
      %p325 = scmp.ne.s32.totalorder %s310, %s324
      %p326 = scmp.eq.s32.totalorder %s45, 0
      %p327 = por %p325, %p326
      %s329 = sadd.s32 %s328, 1
      %p332 = scmp.eq.s32.totalorder %s39, 3
      %p333 = scmp.ne.s32.totalorder %s328, %s330
      %p334 = scmp.eq.s32.totalorder %s39, 0
      %p335 = por %p333, %p334
      %p336 = scmp.ne.s32.totalorder %s328, %s330
      %p337 = scmp.eq.s32.totalorder %s44, 3
      %p338 = por %p336, %p337
      %p339 = scmp.ne.s32.totalorder %s330, %s331
      %p340 = scmp.eq.s32.totalorder %s44, 0
      %p341 = por %p339, %p340
      %p342 = scmp.ne.s32.totalorder %s330, %s331
      %p343 = scmp.eq.s32.totalorder %s45, 3
      %p344 = por %p342, %p343
      %p346 = scmp.ne.s32.totalorder %s331, %s345
      %p347 = scmp.eq.s32.totalorder %s45, 0
      %p348 = por %p346, %p347
      %s350 = sadd.s32 %s349, 1
      %p353 = scmp.eq.s32.totalorder %s39, 3
      %p354 = scmp.ne.s32.totalorder %s349, %s351
      %p355 = scmp.eq.s32.totalorder %s39, 0
      %p356 = por %p354, %p355
      %p357 = scmp.ne.s32.totalorder %s349, %s351
      %p358 = scmp.eq.s32.totalorder %s44, 3
      %p359 = por %p357, %p358
      %p360 = scmp.ne.s32.totalorder %s351, %s352
      %p361 = scmp.eq.s32.totalorder %s44, 0
      %p362 = por %p360, %p361
      %p363 = scmp.ne.s32.totalorder %s351, %s352
      %p364 = scmp.eq.s32.totalorder %s45, 3
      %p365 = por %p363, %p364
      %p367 = scmp.ne.s32.totalorder %s352, %s366
      %p368 = scmp.eq.s32.totalorder %s45, 0
      %p369 = por %p367, %p368
      %s371 = sadd.s32 %s370, 1
      %p374 = scmp.eq.s32.totalorder %s39, 3
      %p375 = scmp.ne.s32.totalorder %s370, %s372
      %p376 = scmp.eq.s32.totalorder %s39, 0
      %p377 = por %p375, %p376
      %p378 = scmp.ne.s32.totalorder %s370, %s372
      %p379 = scmp.eq.s32.totalorder %s44, 3
      %p380 = por %p378, %p379
      %p381 = scmp.ne.s32.totalorder %s372, %s373
      %p382 = scmp.eq.s32.totalorder %s44, 0
      %p383 = por %p381, %p382
      %p384 = scmp.ne.s32.totalorder %s372, %s373
      %p385 = scmp.eq.s32.totalorder %s45, 3
      %p386 = por %p384, %p385
      %p388 = scmp.ne.s32.totalorder %s373, %s387
      %p389 = scmp.eq.s32.totalorder %s45, 0
      %p390 = por %p388, %p389
      %s392 = sadd.s32 %s391, 1
      %p395 = scmp.eq.s32.totalorder %s39, 3
      %p396 = scmp.ne.s32.totalorder %s391, %s393
      %p397 = scmp.eq.s32.totalorder %s39, 0
      %p398 = por %p396, %p397
      %p399 = scmp.ne.s32.totalorder %s391, %s393
      %p400 = scmp.eq.s32.totalorder %s44, 3
      %p401 = por %p399, %p400
      %p402 = scmp.ne.s32.totalorder %s393, %s394
      %p403 = scmp.eq.s32.totalorder %s44, 0
      %p404 = por %p402, %p403
      %p405 = scmp.ne.s32.totalorder %s393, %s394
      %p406 = scmp.eq.s32.totalorder %s45, 3
      %p407 = por %p405, %p406
      %p409 = scmp.ne.s32.totalorder %s394, %s408
      %p410 = scmp.eq.s32.totalorder %s45, 0
      %p411 = por %p409, %p410
      %s413 = sadd.s32 %s412, 1
      %p416 = scmp.eq.s32.totalorder %s39, 3
      %p417 = scmp.ne.s32.totalorder %s412, %s414
      %p418 = scmp.eq.s32.totalorder %s39, 0
      %p419 = por %p417, %p418
      %p420 = scmp.ne.s32.totalorder %s412, %s414
      %p421 = scmp.eq.s32.totalorder %s44, 3
      %p422 = por %p420, %p421
      %p423 = scmp.ne.s32.totalorder %s414, %s415
      %p424 = scmp.eq.s32.totalorder %s44, 0
      %p425 = por %p423, %p424
      %p426 = scmp.ne.s32.totalorder %s414, %s415
      %p427 = scmp.eq.s32.totalorder %s45, 3
      %p428 = por %p426, %p427
      %p430 = scmp.ne.s32.totalorder %s415, %s429
      %p431 = scmp.eq.s32.totalorder %s45, 0
      %p432 = por %p430, %p431
      %s433 = ssub.s32 %s46, %s58
      %s434 = ssub.s32 %s47, %s54
      %s435 = sor.u32 %s433, %s434
      %p436 = scmp.eq.s32.totalorder %s435, 0
      %s438 = sadd.s32 %s437, 1
      %s439 = scalar_select %p436, %s437, %s438
      %p442 = pneg %p436
      %p443 = scmp.eq.s32.totalorder %s39, 3
      %p444 = por %p442, %p443
      %p445 = scmp.ne.s32.totalorder %s437, %s440
      %p446 = scmp.eq.s32.totalorder %s39, 0
      %p447 = por %p445, %p446
      %p448 = scmp.ne.s32.totalorder %s437, %s440
      %p449 = scmp.eq.s32.totalorder %s44, 3
      %p450 = por %p448, %p449
      %p451 = scmp.ne.s32.totalorder %s440, %s441
      %p452 = scmp.eq.s32.totalorder %s44, 0
      %p453 = por %p451, %p452
      %p454 = scmp.ne.s32.totalorder %s440, %s441
      %p455 = scmp.eq.s32.totalorder %s45, 3
      %p456 = por %p454, %p455
      %p458 = scmp.ne.s32.totalorder %s441, %s457
      %p459 = scmp.eq.s32.totalorder %s45, 0
      %p460 = por %p458, %p459
      %p461 = scmp.le.s32.totalorder 1, %s39
      %p462 = scmp.lt.s32.totalorder %s39, 5
      %p463 = pnand %p461, %p462
      %p464 = pneg %p463
      // Predicated region
      $region9: #{tpu_custom_call.1} parent=5 // pred_check
        _
      $region10: #{tpu_custom_call.1} parent=5 // pred_check_branch
        %466 = sbr.rel (%p463) target = $region12
      $region11: #{tpu_custom_call.1} parent=5 // pred_region
        %s467 = ssub.s32 %s39, 1
        // Predicated region
        $region13: #{tpu_custom_call.1} parent=11 // pred_check
          %p468 = pneg %p152
        $region14: #{tpu_custom_call.1} parent=11 // pred_check_branch
          %470 = sbr.rel (%p468) target = $region16
        $region15: #{tpu_custom_call.1} parent=11 // pred_region
          %s472 = ssub.s32 16, 16
          %473 = vsyncadd [#allocation11], %s472
          %s475 = sshll.u32 [#allocation10], 4
          %s476 = int_to_ptr.vmem [resolvable:$true] %s475
          %478 = dma.hbm_to_vmem [thread:$0]  %s3, 16, %s476, [#allocation11]
        $region16: #{tpu_custom_call.1} parent=11 // pred_fallthru
          _
        // Predicated region
        $region17: #{tpu_custom_call.1} parent=11 // pred_check
          %p479 = pneg %p173
        $region18: #{tpu_custom_call.1} parent=11 // pred_check_branch
          %481 = sbr.rel (%p479) target = $region20
        $region19: #{tpu_custom_call.1} parent=11 // pred_region
          %s483 = ssub.s32 16, 16
          %484 = vsyncadd [#allocation11], %s483
          %s486 = sshll.u32 [#allocation12], 4
          %s487 = int_to_ptr.vmem [resolvable:$true] %s486
          %489 = dma.hbm_to_vmem [thread:$0]  %s4, 16, %s487, [#allocation11]
        $region20: #{tpu_custom_call.1} parent=11 // pred_fallthru
          _
        // Predicated region
        $region21: #{tpu_custom_call.1} parent=11 // pred_check
          %p490 = pneg %p194
        $region22: #{tpu_custom_call.1} parent=11 // pred_check_branch
          %492 = sbr.rel (%p490) target = $region24
        $region23: #{tpu_custom_call.1} parent=11 // pred_region
          %s494 = ssub.s32 16, 16
          %495 = vsyncadd [#allocation14], %s494
          %s497 = sshll.u32 [#allocation13], 4
          %s498 = int_to_ptr.vmem [resolvable:$true] %s497
          %500 = dma.hbm_to_vmem [thread:$0]  %s5, 16, %s498, [#allocation14]
        $region24: #{tpu_custom_call.1} parent=11 // pred_fallthru
          _
        // Predicated region
        $region25: #{tpu_custom_call.1} parent=11 // pred_check
          %p501 = pneg %p215
        $region26: #{tpu_custom_call.1} parent=11 // pred_check_branch
          %503 = sbr.rel (%p501) target = $region28
        $region27: #{tpu_custom_call.1} parent=11 // pred_region
          %s505 = ssub.s32 16, 16
          %506 = vsyncadd [#allocation14], %s505
          %s508 = sshll.u32 [#allocation15], 4
          %s509 = int_to_ptr.vmem [resolvable:$true] %s508
          %511 = dma.hbm_to_vmem [thread:$0]  %s6, 16, %s509, [#allocation14]
        $region28: #{tpu_custom_call.1} parent=11 // pred_fallthru
          _
        // Predicated region
        $region29: #{tpu_custom_call.1} parent=11 // pred_check
          %p512 = pneg %p236
        $region30: #{tpu_custom_call.1} parent=11 // pred_check_branch
          %514 = sbr.rel (%p512) target = $region32
        $region31: #{tpu_custom_call.1} parent=11 // pred_region
          %s516 = ssub.s32 1024, 1024
          %517 = vsyncadd [#allocation17], %s516
          %s518 = sshll.u32 [#allocation16], 4
          %s519 = int_to_ptr.vmem [resolvable:$true] %s518
          %524 = dma.hbm_to_vmem [thread:$0]  %s7, 1024, %s519, [#allocation17], 64, 64, 4
        $region32: #{tpu_custom_call.1} parent=11 // pred_fallthru
          _
        // Predicated region
        $region33: #{tpu_custom_call.1} parent=11 // pred_check
          %p525 = pneg %p257
        $region34: #{tpu_custom_call.1} parent=11 // pred_check_branch
          %527 = sbr.rel (%p525) target = $region36
        $region35: #{tpu_custom_call.1} parent=11 // pred_region
          %s529 = ssub.s32 16, 16
          %530 = vsyncadd [#allocation17], %s529
          %s532 = sshll.u32 [#allocation18], 4
          %s533 = int_to_ptr.vmem [resolvable:$true] %s532
          %535 = dma.hbm_to_vmem [thread:$0]  %s8, 16, %s533, [#allocation17]
        $region36: #{tpu_custom_call.1} parent=11 // pred_fallthru
          _
        // Predicated region
        $region37: #{tpu_custom_call.1} parent=11 // pred_check
          %p536 = pneg %p278
        $region38: #{tpu_custom_call.1} parent=11 // pred_check_branch
          %538 = sbr.rel (%p536) target = $region40
        $region39: #{tpu_custom_call.1} parent=11 // pred_region
          %s540 = ssub.s32 2048, 2048
          %541 = vsyncadd [#allocation20], %s540
          %s542 = sshll.u32 [#allocation19], 4
          %s543 = int_to_ptr.vmem [resolvable:$true] %s542
          %548 = dma.hbm_to_vmem [thread:$0]  %s9, 2048, %s543, [#allocation20], 128, 128, 8
        $region40: #{tpu_custom_call.1} parent=11 // pred_fallthru
          _
        // Predicated region
        $region41: #{tpu_custom_call.1} parent=11 // pred_check
          %p549 = pneg %p299
        $region42: #{tpu_custom_call.1} parent=11 // pred_check_branch
          %551 = sbr.rel (%p549) target = $region44
        $region43: #{tpu_custom_call.1} parent=11 // pred_region
          %s553 = ssub.s32 32, 32
          %554 = vsyncadd [#allocation20], %s553
          %s556 = sshll.u32 [#allocation21], 4
          %s557 = int_to_ptr.vmem [resolvable:$true] %s556
          %559 = dma.hbm_to_vmem [thread:$0]  %s10, 32, %s557, [#allocation20]
        $region44: #{tpu_custom_call.1} parent=11 // pred_fallthru
          _
        // Predicated region
        $region45: #{tpu_custom_call.1} parent=11 // pred_check
          %p560 = pneg %p320
        $region46: #{tpu_custom_call.1} parent=11 // pred_check_branch
          %562 = sbr.rel (%p560) target = $region48
        $region47: #{tpu_custom_call.1} parent=11 // pred_region
          %s564 = ssub.s32 1024, 1024
          %565 = vsyncadd [#allocation23], %s564
          %s566 = sshll.u32 [#allocation22], 4
          %s567 = int_to_ptr.vmem [resolvable:$true] %s566
          %572 = dma.hbm_to_vmem [thread:$0]  %s11, 1024, %s567, [#allocation23], 64, 64, 4
        $region48: #{tpu_custom_call.1} parent=11 // pred_fallthru
          _
        // Predicated region
        $region49: #{tpu_custom_call.1} parent=11 // pred_check
          %p573 = pneg %p341
        $region50: #{tpu_custom_call.1} parent=11 // pred_check_branch
          %575 = sbr.rel (%p573) target = $region52
        $region51: #{tpu_custom_call.1} parent=11 // pred_region
          %s577 = ssub.s32 16, 16
          %578 = vsyncadd [#allocation23], %s577
          %s580 = sshll.u32 [#allocation24], 4
          %s581 = int_to_ptr.vmem [resolvable:$true] %s580
          %583 = dma.hbm_to_vmem [thread:$0]  %s12, 16, %s581, [#allocation23]
        $region52: #{tpu_custom_call.1} parent=11 // pred_fallthru
          _
        // Predicated region
        $region53: #{tpu_custom_call.1} parent=11 // pred_check
          %p584 = pneg %p362
        $region54: #{tpu_custom_call.1} parent=11 // pred_check_branch
          %586 = sbr.rel (%p584) target = $region56
        $region55: #{tpu_custom_call.1} parent=11 // pred_region
          %s588 = ssub.s32 2048, 2048
          %589 = vsyncadd [#allocation26], %s588
          %s590 = sshll.u32 [#allocation25], 4
          %s591 = int_to_ptr.vmem [resolvable:$true] %s590
          %596 = dma.hbm_to_vmem [thread:$0]  %s13, 2048, %s591, [#allocation26], 128, 128, 8
        $region56: #{tpu_custom_call.1} parent=11 // pred_fallthru
          _
        // Predicated region
        $region57: #{tpu_custom_call.1} parent=11 // pred_check
          %p597 = pneg %p383
        $region58: #{tpu_custom_call.1} parent=11 // pred_check_branch
          %599 = sbr.rel (%p597) target = $region60
        $region59: #{tpu_custom_call.1} parent=11 // pred_region
          %s601 = ssub.s32 32, 32
          %602 = vsyncadd [#allocation26], %s601
          %s604 = sshll.u32 [#allocation27], 4
          %s605 = int_to_ptr.vmem [resolvable:$true] %s604
          %607 = dma.hbm_to_vmem [thread:$0]  %s14, 32, %s605, [#allocation26]
        $region60: #{tpu_custom_call.1} parent=11 // pred_fallthru
          _
        // Predicated region
        $region61: #{tpu_custom_call.1} parent=11 // pred_check
          %p608 = pneg %p404
        $region62: #{tpu_custom_call.1} parent=11 // pred_check_branch
          %610 = sbr.rel (%p608) target = $region64
        $region63: #{tpu_custom_call.1} parent=11 // pred_region
          %s612 = ssub.s32 2048, 2048
          %613 = vsyncadd [#allocation29], %s612
          %s614 = sshll.u32 [#allocation28], 4
          %s615 = int_to_ptr.vmem [resolvable:$true] %s614
          %620 = dma.hbm_to_vmem [thread:$0]  %s15, 2048, %s615, [#allocation29], 64, 64, 4
        $region64: #{tpu_custom_call.1} parent=11 // pred_fallthru
          _
        // Predicated region
        $region65: #{tpu_custom_call.1} parent=11 // pred_check
          %p621 = pneg %p425
        $region66: #{tpu_custom_call.1} parent=11 // pred_check_branch
          %623 = sbr.rel (%p621) target = $region68
        $region67: #{tpu_custom_call.1} parent=11 // pred_region
          %s625 = ssub.s32 16, 16
          %626 = vsyncadd [#allocation29], %s625
          %s628 = sshll.u32 [#allocation30], 4
          %s629 = int_to_ptr.vmem [resolvable:$true] %s628
          %631 = dma.hbm_to_vmem [thread:$0]  %s16, 16, %s629, [#allocation29]
        $region68: #{tpu_custom_call.1} parent=11 // pred_fallthru
          _
      $region12: #{tpu_custom_call.1} parent=5 // pred_fallthru
        _
      %p632 = scmp.lt.s32.totalorder %s39, 4
      // Predicated region
      $region69: #{tpu_custom_call.1} parent=5 // pred_check
        %p633 = pneg %p632
      $region70: #{tpu_custom_call.1} parent=5 // pred_check_branch
        %635 = sbr.rel (%p633) target = $region72
      $region71: #{tpu_custom_call.1} parent=5 // pred_region
        // Predicated region
        $region73: #{tpu_custom_call.1} parent=71 // pred_check
          %p636 = pneg %p71
        $region74: #{tpu_custom_call.1} parent=71 // pred_check_branch
          %638 = sbr.rel (%p636) target = $region76
        $region75: #{tpu_custom_call.1} parent=71 // pred_region
          %s639 = sand.u32 %s61, 1
          %s640 = scalar_lea.sflag [#allocation5], %s639
          %s641 = sand.u32 %s61, 1
          %s642 = smul.addr %s641, 16
          %s643 = scalar_lea.vmem [#allocation4], %s642
          %s645 = ssub.s32 256, 256
          %646 = vsyncadd %s640, %s645
          %s647 = smul.addr %s46, 2
          %s648 = smul.addr %s647, 128
          %s649 = scalar_lea.hbm %s0, %s648
          %s650 = sshll.u32 %s643, 4
          %s651 = int_to_ptr.vmem [resolvable:$true] %s650
          %656 = dma.hbm_to_vmem [thread:$0]  %s649, 256, %s651, %s640, 128, 128, 8
        $region76: #{tpu_custom_call.1} parent=71 // pred_fallthru
          _
        // Predicated region
        $region77: #{tpu_custom_call.1} parent=71 // pred_check
          %p657 = pneg %p99
        $region78: #{tpu_custom_call.1} parent=71 // pred_check_branch
          %659 = sbr.rel (%p657) target = $region80
        $region79: #{tpu_custom_call.1} parent=71 // pred_region
          %s660 = sand.u32 %s39, 1
          %s661 = scalar_lea.sflag [#allocation8], %s660
          %s662 = sand.u32 %s89, 1
          %s663 = smul.addr %s662, 8
          %s664 = scalar_lea.vmem [#allocation7], %s663
          %s666 = ssub.s32 128, 128
          %667 = vsyncadd %s661, %s666
          %s668 = smul.addr %s46, 2
          %s669 = sadd.s32 %s47, %s668
          %s670 = smul.addr %s669, 128
          %s671 = scalar_lea.hbm %s1, %s670
          %s673 = sshll.u32 %s664, 4
          %s674 = int_to_ptr.vmem [resolvable:$true] %s673
          %676 = dma.hbm_to_vmem [thread:$0]  %s671, 128, %s674, %s661
        $region80: #{tpu_custom_call.1} parent=71 // pred_fallthru
          _
        // Predicated region
        $region81: #{tpu_custom_call.1} parent=71 // pred_check
          %p677 = pneg %p125
        $region82: #{tpu_custom_call.1} parent=71 // pred_check_branch
          %679 = sbr.rel (%p677) target = $region84
        $region83: #{tpu_custom_call.1} parent=71 // pred_region
          %s680 = sand.u32 %s39, 1
          %s681 = scalar_lea.sflag [#allocation8], %s680
          %s682 = sand.u32 %s115, 1
          %s683 = scalar_lea.vmem [#allocation9], %s682
          %s685 = ssub.s32 16, 16
          %686 = vsyncadd %s681, %s685
          %s687 = smul.addr %s46, 16
          %s688 = scalar_lea.hbm %s2, %s687
          %s690 = sshll.u32 %s683, 4
          %s691 = int_to_ptr.vmem [resolvable:$true] %s690
          %693 = dma.hbm_to_vmem [thread:$0]  %s688, 16, %s691, %s681
        $region84: #{tpu_custom_call.1} parent=71 // pred_fallthru
          _
      $region72: #{tpu_custom_call.1} parent=5 // pred_fallthru
        _
      %p694 = scmp.le.s32.totalorder 1, %s39
      %p695 = scmp.lt.s32.totalorder %s39, 5
      %p696 = pnand %p694, %p695
      %p697 = pneg %p696
      // Predicated region
      $region85: #{tpu_custom_call.1} parent=5 // pred_check
        _
      $region86: #{tpu_custom_call.1} parent=5 // pred_check_branch
        %699 = sbr.rel (%p696) target = $region88
      $region87: #{tpu_custom_call.1} parent=5 // pred_region
        %s700 = ssub.s32 %s39, 1
        %s701 = sand.u32 %s64, 1
        %s702 = scalar_lea.sflag [#allocation5], %s701
        %s703 = sand.u32 %s64, 1
        %s704 = smul.addr %s703, 16
        %s705 = scalar_lea.vmem [#allocation4], %s704
        // Predicated region
        $region89: #{tpu_custom_call.1} parent=87 // pred_check
          %p706 = pneg %p77
        $region90: #{tpu_custom_call.1} parent=87 // pred_check_branch
          %708 = sbr.rel (%p706) target = $region92
        $region91: #{tpu_custom_call.1} parent=87 // pred_region
          %709 = dma.done %s702, 256
        $region92: #{tpu_custom_call.1} parent=87 // pred_fallthru
          _
        %s710 = sand.u32 %s44, 1
        %s711 = scalar_lea.sflag [#allocation8], %s710
        %s712 = sand.u32 %s92, 1
        %s713 = smul.addr %s712, 8
        %s714 = scalar_lea.vmem [#allocation7], %s713
        // Predicated region
        $region93: #{tpu_custom_call.1} parent=87 // pred_check
          %p715 = pneg %p105
        $region94: #{tpu_custom_call.1} parent=87 // pred_check_branch
          %717 = sbr.rel (%p715) target = $region96
        $region95: #{tpu_custom_call.1} parent=87 // pred_region
          %718 = dma.done %s711, 128
        $region96: #{tpu_custom_call.1} parent=87 // pred_fallthru
          _
        %s719 = sand.u32 %s44, 1
        %s720 = scalar_lea.sflag [#allocation8], %s719
        %s721 = sand.u32 %s118, 1
        %s722 = scalar_lea.vmem [#allocation9], %s721
        // Predicated region
        $region97: #{tpu_custom_call.1} parent=87 // pred_check
          %p723 = pneg %p131
        $region98: #{tpu_custom_call.1} parent=87 // pred_check_branch
          %725 = sbr.rel (%p723) target = $region100
        $region99: #{tpu_custom_call.1} parent=87 // pred_region
          %726 = dma.done %s720, 16
        $region100: #{tpu_custom_call.1} parent=87 // pred_fallthru
          _
        // Predicated region
        $region101: #{tpu_custom_call.1} parent=87 // pred_check
          %p727 = pneg %p152
        $region102: #{tpu_custom_call.1} parent=87 // pred_check_branch
          %729 = sbr.rel (%p727) target = $region104
        $region103: #{tpu_custom_call.1} parent=87 // pred_region
          %730 = dma.done [#allocation11], 16
        $region104: #{tpu_custom_call.1} parent=87 // pred_fallthru
          _
        // Predicated region
        $region105: #{tpu_custom_call.1} parent=87 // pred_check
          %p731 = pneg %p173
        $region106: #{tpu_custom_call.1} parent=87 // pred_check_branch
          %733 = sbr.rel (%p731) target = $region108
        $region107: #{tpu_custom_call.1} parent=87 // pred_region
          %734 = dma.done [#allocation11], 16
        $region108: #{tpu_custom_call.1} parent=87 // pred_fallthru
          _
        // Predicated region
        $region109: #{tpu_custom_call.1} parent=87 // pred_check
          %p735 = pneg %p194
        $region110: #{tpu_custom_call.1} parent=87 // pred_check_branch
          %737 = sbr.rel (%p735) target = $region112
        $region111: #{tpu_custom_call.1} parent=87 // pred_region
          %738 = dma.done [#allocation14], 16
        $region112: #{tpu_custom_call.1} parent=87 // pred_fallthru
          _
        // Predicated region
        $region113: #{tpu_custom_call.1} parent=87 // pred_check
          %p739 = pneg %p215
        $region114: #{tpu_custom_call.1} parent=87 // pred_check_branch
          %741 = sbr.rel (%p739) target = $region116
        $region115: #{tpu_custom_call.1} parent=87 // pred_region
          %742 = dma.done [#allocation14], 16
        $region116: #{tpu_custom_call.1} parent=87 // pred_fallthru
          _
        // Predicated region
        $region117: #{tpu_custom_call.1} parent=87 // pred_check
          %p743 = pneg %p236
        $region118: #{tpu_custom_call.1} parent=87 // pred_check_branch
          %745 = sbr.rel (%p743) target = $region120
        $region119: #{tpu_custom_call.1} parent=87 // pred_region
          %746 = dma.done [#allocation17], 1024
        $region120: #{tpu_custom_call.1} parent=87 // pred_fallthru
          _
        // Predicated region
        $region121: #{tpu_custom_call.1} parent=87 // pred_check
          %p747 = pneg %p257
        $region122: #{tpu_custom_call.1} parent=87 // pred_check_branch
          %749 = sbr.rel (%p747) target = $region124
        $region123: #{tpu_custom_call.1} parent=87 // pred_region
          %750 = dma.done [#allocation17], 16
        $region124: #{tpu_custom_call.1} parent=87 // pred_fallthru
          _
        // Predicated region
        $region125: #{tpu_custom_call.1} parent=87 // pred_check
          %p751 = pneg %p278
        $region126: #{tpu_custom_call.1} parent=87 // pred_check_branch
          %753 = sbr.rel (%p751) target = $region128
        $region127: #{tpu_custom_call.1} parent=87 // pred_region
          %754 = dma.done [#allocation20], 2048
        $region128: #{tpu_custom_call.1} parent=87 // pred_fallthru
          _
        // Predicated region
        $region129: #{tpu_custom_call.1} parent=87 // pred_check
          %p755 = pneg %p299
        $region130: #{tpu_custom_call.1} parent=87 // pred_check_branch
          %757 = sbr.rel (%p755) target = $region132
        $region131: #{tpu_custom_call.1} parent=87 // pred_region
          %758 = dma.done [#allocation20], 32
        $region132: #{tpu_custom_call.1} parent=87 // pred_fallthru
          _
        // Predicated region
        $region133: #{tpu_custom_call.1} parent=87 // pred_check
          %p759 = pneg %p320
        $region134: #{tpu_custom_call.1} parent=87 // pred_check_branch
          %761 = sbr.rel (%p759) target = $region136
        $region135: #{tpu_custom_call.1} parent=87 // pred_region
          %762 = dma.done [#allocation23], 1024
        $region136: #{tpu_custom_call.1} parent=87 // pred_fallthru
          _
        // Predicated region
        $region137: #{tpu_custom_call.1} parent=87 // pred_check
          %p763 = pneg %p341
        $region138: #{tpu_custom_call.1} parent=87 // pred_check_branch
          %765 = sbr.rel (%p763) target = $region140
        $region139: #{tpu_custom_call.1} parent=87 // pred_region
          %766 = dma.done [#allocation23], 16
        $region140: #{tpu_custom_call.1} parent=87 // pred_fallthru
          _
        // Predicated region
        $region141: #{tpu_custom_call.1} parent=87 // pred_check
          %p767 = pneg %p362
        $region142: #{tpu_custom_call.1} parent=87 // pred_check_branch
          %769 = sbr.rel (%p767) target = $region144
        $region143: #{tpu_custom_call.1} parent=87 // pred_region
          %770 = dma.done [#allocation26], 2048
        $region144: #{tpu_custom_call.1} parent=87 // pred_fallthru
          _
        // Predicated region
        $region145: #{tpu_custom_call.1} parent=87 // pred_check
          %p771 = pneg %p383
        $region146: #{tpu_custom_call.1} parent=87 // pred_check_branch
          %773 = sbr.rel (%p771) target = $region148
        $region147: #{tpu_custom_call.1} parent=87 // pred_region
          %774 = dma.done [#allocation26], 32
        $region148: #{tpu_custom_call.1} parent=87 // pred_fallthru
          _
        // Predicated region
        $region149: #{tpu_custom_call.1} parent=87 // pred_check
          %p775 = pneg %p404
        $region150: #{tpu_custom_call.1} parent=87 // pred_check_branch
          %777 = sbr.rel (%p775) target = $region152
        $region151: #{tpu_custom_call.1} parent=87 // pred_region
          %778 = dma.done [#allocation29], 2048
        $region152: #{tpu_custom_call.1} parent=87 // pred_fallthru
          _
        // Predicated region
        $region153: #{tpu_custom_call.1} parent=87 // pred_check
          %p779 = pneg %p425
        $region154: #{tpu_custom_call.1} parent=87 // pred_check_branch
          %781 = sbr.rel (%p779) target = $region156
        $region155: #{tpu_custom_call.1} parent=87 // pred_region
          %782 = dma.done [#allocation29], 16
        $region156: #{tpu_custom_call.1} parent=87 // pred_fallthru
          _
        %s783 = sand.u32 %s64, 1
        %s784 = scalar_lea.sflag [#allocation5], %s783
        %s785 = sand.u32 %s64, 1
        %s786 = smul.addr %s785, 16
        %s787 = scalar_lea.vmem [#allocation4], %s786
        %p788 = pneg %p77
        %p789 = pneg %p74
        %s790 = sand.u32 %s44, 1
        %s791 = scalar_lea.sflag [#allocation8], %s790
        %s792 = sand.u32 %s92, 1
        %s793 = smul.addr %s792, 8
        %s794 = scalar_lea.vmem [#allocation7], %s793
        %p795 = pneg %p105
        %p796 = pneg %p102
        %s797 = sand.u32 %s44, 1
        %s798 = scalar_lea.sflag [#allocation8], %s797
        %s799 = sand.u32 %s118, 1
        %s800 = scalar_lea.vmem [#allocation9], %s799
        %p801 = pneg %p131
        %p802 = pneg %p128
        %p803 = pneg %p152
        %p804 = pneg %p149
        %p805 = pneg %p173
        %p806 = pneg %p170
        %p807 = pneg %p194
        %p808 = pneg %p191
        %p809 = pneg %p215
        %p810 = pneg %p212
        %p811 = pneg %p236
        %p812 = pneg %p233
        %p813 = pneg %p257
        %p814 = pneg %p254
        %p815 = pneg %p278
        %p816 = pneg %p275
        %p817 = pneg %p299
        %p818 = pneg %p296
        %p819 = pneg %p320
        %p820 = pneg %p317
        %p821 = pneg %p341
        %p822 = pneg %p338
        %p823 = pneg %p362
        %p824 = pneg %p359
        %p825 = pneg %p383
        %p826 = pneg %p380
        %p827 = pneg %p404
        %p828 = pneg %p401
        %p829 = pneg %p425
        %p830 = pneg %p422
        %p831 = pneg %p453
        %p832 = pneg %p450
        %s833 = sand.u32 %s440, 1
        %s834 = scalar_lea.sflag [#allocation6], %s833
        %s835 = sand.u32 %s440, 1
        %s836 = smul.addr %s835, 8
        %s837 = scalar_lea.vmem [#allocation31], %s836
        %v839 = vld [vmem:[#allocation10] sm:$0x1]
        %v840 = vld [vmem:[#allocation12] sm:$0x1]
        %p841 = scmp.eq.s32.totalorder %s49, 0
        // Predicated region
        $region157: #{tpu_custom_call.1} parent=87 // pred_check
          %p842 = pneg %p841
        $region158: #{tpu_custom_call.1} parent=87 // pred_check_branch
          %844 = sbr.rel (%p842) target = $region160
        $region159: #{tpu_custom_call.1} parent=87 // pred_region
          %v845 = vld [vmem:[%s705] sm:$0xff]
          %v846 = vld [vmem:[%s705 + $0x8] sm:$0xff]
          %847 = vadd.xlane.f32.xlu0 %v845
          %v848 = vpop.xlane.xlu0 %847
          %849 = vadd.xlane.f32.xlu0 %v846
          %v850 = vpop.xlane.xlu0 %849
          %v851 = vrcp.pop 128.0
          %v852 = vmul.f32 %v848, %v851
          %v853 = vmul.f32 %v850, %v851
          %v854 = vsub.f32 %v845, %v852
          %v855 = vsub.f32 %v846, %v853
          %v856 = vmul.f32 %v854, %v854
          %v857 = vmul.f32 %v855, %v855
          %858 = vadd.xlane.f32.xlu0 %v856
          %v859 = vpop.xlane.xlu0 %858
          %860 = vadd.xlane.f32.xlu0 %v857
          %v861 = vpop.xlane.xlu0 %860
          %v862 = vmul.f32 %v859, %v851
          %v863 = vmul.f32 %v861, %v851
          %v864 = vadd.f32 %v862, 1e-12
          %v865 = vadd.f32 %v863, 1e-12
          %v866 = vrsqrt.pop %v864
          %v867 = vrsqrt.pop %v865
          %v868 = vmul.f32 %v854, %v866
          %v869 = vmul.f32 %v855, %v867
          %v871 = vlaneseq
          %v872 = vshrl.u32 %v871, 7
          %v873 = vsub.s32 0, %v872
          %v874 = vrot.slane %v839, %v873
          %v876 = vmul.f32 %v868, %v874
          %v877 = vmul.f32 %v869, %v874
          %v879 = vlaneseq
          %v880 = vshrl.u32 %v879, 7
          %v881 = vsub.s32 0, %v880
          %v882 = vrot.slane %v840, %v881
          %v884 = vadd.f32 %v876, %v882
          %v885 = vadd.f32 %v877, %v882
          %v886 = vpack.c.bf16 %v885, %v884
          %v887 = vld [vmem:[#allocation19] sm:$0xff]
          %v888 = vld [vmem:[#allocation19 + $0x8] sm:$0xff]
          %v889 = vld [vmem:[#allocation19 + $0x10] sm:$0xff]
          %v890 = vld [vmem:[#allocation19 + $0x18] sm:$0xff]
          %v891 = vld [vmem:[#allocation19 + $0x20] sm:$0xff]
          %v892 = vld [vmem:[#allocation19 + $0x28] sm:$0xff]
          %v893 = vld [vmem:[#allocation19 + $0x30] sm:$0xff]
          %v894 = vld [vmem:[#allocation19 + $0x38] sm:$0xff]
          %v895 = vld [vmem:[#allocation19 + $0x40] sm:$0xff]
          %v896 = vld [vmem:[#allocation19 + $0x48] sm:$0xff]
          %v897 = vld [vmem:[#allocation19 + $0x50] sm:$0xff]
          %v898 = vld [vmem:[#allocation19 + $0x58] sm:$0xff]
          %v899 = vld [vmem:[#allocation19 + $0x60] sm:$0xff]
          %v900 = vld [vmem:[#allocation19 + $0x68] sm:$0xff]
          %v901 = vld [vmem:[#allocation19 + $0x70] sm:$0xff]
          %v902 = vld [vmem:[#allocation19 + $0x78] sm:$0xff]
          %v903 = vld [vmem:[#allocation21] sm:$0x3]
          %v905 = vlaneseq
          %v906 = vshrl.u32 %v905, 7
          %v907 = vsub.s32 0, %v906
          %v908 = vrot.slane %v903, %v907
          %v909 = vlaneseq
          %v910 = vshrl.u32 %v909, 7
          %v911 = vsub.s32 1, %v910
          %v912 = vrot.slane %v903, %v911
          %v931 = vunpack.c.l.b16 %v887
          %v932 = vunpack.c.h.b16 %v887
          %v933 = vunpack.c.l.b16 %v888
          %v934 = vunpack.c.h.b16 %v888
          %v935 = vunpack.c.l.b16 %v889
          %v936 = vunpack.c.h.b16 %v889
          %v937 = vunpack.c.l.b16 %v890
          %v938 = vunpack.c.h.b16 %v890
          %v939 = vunpack.c.l.b16 %v891
          %v940 = vunpack.c.h.b16 %v891
          %v941 = vunpack.c.l.b16 %v892
          %v942 = vunpack.c.h.b16 %v892
          %v943 = vunpack.c.l.b16 %v893
          %v944 = vunpack.c.h.b16 %v893
          %v945 = vunpack.c.l.b16 %v894
          %v946 = vunpack.c.h.b16 %v894
          %v947 = vunpack.c.l.b16 %v895
          %v948 = vunpack.c.h.b16 %v895
          %v949 = vunpack.c.l.b16 %v896
          %v950 = vunpack.c.h.b16 %v896
          %v951 = vunpack.c.l.b16 %v897
          %v952 = vunpack.c.h.b16 %v897
          %v953 = vunpack.c.l.b16 %v898
          %v954 = vunpack.c.h.b16 %v898
          %v955 = vunpack.c.l.b16 %v899
          %v956 = vunpack.c.h.b16 %v899
          %v957 = vunpack.c.l.b16 %v900
          %v958 = vunpack.c.h.b16 %v900
          %v959 = vunpack.c.l.b16 %v901
          %v960 = vunpack.c.h.b16 %v901
          %v961 = vunpack.c.l.b16 %v902
          %v962 = vunpack.c.h.b16 %v902
          %v963 = vpack.c.b16 %v933, %v931
          %v964 = vpack.c.b16 %v934, %v932
          %v965 = vpack.c.b16 %v937, %v935
          %v966 = vpack.c.b16 %v938, %v936
          %v967 = vpack.c.b16 %v941, %v939
          %v968 = vpack.c.b16 %v942, %v940
          %v969 = vpack.c.b16 %v945, %v943
          %v970 = vpack.c.b16 %v946, %v944
          %v971 = vpack.c.b16 %v949, %v947
          %v972 = vpack.c.b16 %v950, %v948
          %v973 = vpack.c.b16 %v953, %v951
          %v974 = vpack.c.b16 %v954, %v952
          %v975 = vpack.c.b16 %v957, %v955
          %v976 = vpack.c.b16 %v958, %v956
          %v977 = vpack.c.b16 %v961, %v959
          %v978 = vpack.c.b16 %v962, %v960
          %995 = vmatprep.subr.bf16.mxu0 %v964
          %996 = vmatpush1.bf16.msra.mxu0 %v963
          %997 = vmatprep.subr.bf16.mxu0 %v966
          %998 = vmatpush1.bf16.msra.mxu0 %v965
          %999 = vmatprep.subr.bf16.mxu0 %v968
          %1000 = vmatpush1.bf16.msra.mxu0 %v967
          %1001 = vmatprep.subr.bf16.mxu0 %v970
          %1002 = vmatpush1.bf16.msra.mxu0 %v969
          %1003 = vmatprep.subr.bf16.mxu0 %v972
          %1004 = vmatpush1.bf16.msra.mxu0 %v971
          %1005 = vmatprep.subr.bf16.mxu0 %v974
          %1006 = vmatpush1.bf16.msra.mxu0 %v973
          %1007 = vmatprep.subr.bf16.mxu0 %v976
          %1008 = vmatpush1.bf16.msra.mxu0 %v975
          %1009 = vmatprep.subr.bf16.mxu0 %v978
          %1010 = vmatpush1.bf16.msra.mxu0 %v977
          %1011 = vmatprep.subr.bf16.mxu0 0
          %1012 = vmatpush1.bf16.msra.mxu0 0
          %1013 = vmatprep.subr.bf16.mxu0 0
          %1014 = vmatpush1.bf16.msra.mxu0 0
          %1015 = vmatprep.subr.bf16.mxu0 0
          %1016 = vmatpush1.bf16.msra.mxu0 0
          %1017 = vmatprep.subr.bf16.mxu0 0
          %1018 = vmatpush1.bf16.msra.mxu0 0
          %1019 = vmatprep.subr.bf16.mxu0 0
          %1020 = vmatpush1.bf16.msra.mxu0 0
          %1021 = vmatprep.subr.bf16.mxu0 0
          %1022 = vmatpush1.bf16.msra.mxu0 0
          %1023 = vmatprep.subr.bf16.mxu0 0
          %1024 = vmatpush1.bf16.msra.mxu0 0
          %1025 = vmatprep.subr.bf16.mxu0 0
          %1026 = vmatpush1.bf16.msra.mxu0 0
          %1027 = vmatprep.mubr.bf16.mxu0 0
          %1028 = vmatmul.mubr.bf16.gmra.mrb[0].mxu0 %v886
          %v1029 = vpop.f32.mrb[0].mxu0
          %v1030 = vadd.f32 %v908, %v1029
          %v1031 = vpop.f32.mrb[0].mxu0
          %v1032 = vadd.f32 %v912, %v1031
          %v1033 = vpop.f32.mrb[0].mxu0
          %v1034 = vadd.f32 %v908, %v1033
          %v1035 = vpop.f32.mrb[0].mxu0
          %v1036 = vadd.f32 %v912, %v1035
          %1037 = vdwg.mxu0
          %1038 = vxpose.xlu0.b32.start [1/16] %v1030, 128
          %1039 = vxpose.xlu0.b32.cont [2/16] %v1034, 128
          %1040 = vxpose.xlu0.b32.cont [3/16] 0.0, 128
          %1041 = vxpose.xlu0.b32.cont [4/16] 0.0, 128
          %1042 = vxpose.xlu0.b32.cont [5/16] 0.0, 128
          %1043 = vxpose.xlu0.b32.cont [6/16] 0.0, 128
          %1044 = vxpose.xlu0.b32.cont [7/16] 0.0, 128
          %1045 = vxpose.xlu0.b32.cont [8/16] 0.0, 128
          %1046 = vxpose.xlu0.b32.cont [9/16] 0.0, 128
          %1047 = vxpose.xlu0.b32.cont [10/16] 0.0, 128
          %1048 = vxpose.xlu0.b32.cont [11/16] 0.0, 128
          %1049 = vxpose.xlu0.b32.cont [12/16] 0.0, 128
          %1050 = vxpose.xlu0.b32.cont [13/16] 0.0, 128
          %1051 = vxpose.xlu0.b32.cont [14/16] 0.0, 128
          %1052 = vxpose.xlu0.b32.cont [15/16] 0.0, 128
          %1053 = vxpose.xlu0.b32.end [16/16] 0.0, 128
          %v1054 = vpop.trf.xlu0
          %v1055 = vpop.trf.xlu0
          %v1056 = vpop.trf.xlu0
          %v1057 = vpop.trf.xlu0
          %v1058 = vpop.trf.xlu0
          %v1059 = vpop.trf.xlu0
          %v1060 = vpop.trf.xlu0
          %v1061 = vpop.trf.xlu0
          %v1062 = vpop.trf.xlu0
          %v1063 = vpop.trf.xlu0
          %v1064 = vpop.trf.xlu0
          %v1065 = vpop.trf.xlu0
          %v1066 = vpop.trf.xlu0
          %v1067 = vpop.trf.xlu0
          %v1068 = vpop.trf.xlu0
          %v1069 = vpop.trf.xlu0
          %v1070 = vpack.c.bf16 %v1055, %v1054
          %v1071 = vpack.c.bf16 %v1057, %v1056
          %v1072 = vpack.c.bf16 %v1059, %v1058
          %v1073 = vpack.c.bf16 %v1061, %v1060
          %v1074 = vpack.c.bf16 %v1063, %v1062
          %v1075 = vpack.c.bf16 %v1065, %v1064
          %v1076 = vpack.c.bf16 %v1067, %v1066
          %v1077 = vpack.c.bf16 %v1069, %v1068
          %v1078 = vpack.c.bf16 %v1036, %v1032
          %vm1079 = vcmask 130048
          %1080 = vst.msk [vmem:[#allocation2] sm:$0xff] %vm1079, %v1070
          %1081 = vst.msk [vmem:[#allocation2 + $0x8] sm:$0xff] %vm1079, %v1071
          %1082 = vst.msk [vmem:[#allocation2 + $0x10] sm:$0xff] %vm1079, %v1072
          %1083 = vst.msk [vmem:[#allocation2 + $0x18] sm:$0xff] %vm1079, %v1073
          %1084 = vst.msk [vmem:[#allocation2 + $0x20] sm:$0xff] %vm1079, %v1074
          %1085 = vst.msk [vmem:[#allocation2 + $0x28] sm:$0xff] %vm1079, %v1075
          %1086 = vst.msk [vmem:[#allocation2 + $0x30] sm:$0xff] %vm1079, %v1076
          %1087 = vst.msk [vmem:[#allocation2 + $0x38] sm:$0xff] %vm1079, %v1077
          %1088 = vst [vmem:[#allocation3] sm:$0xff] %v1078
        $region160: #{tpu_custom_call.1} parent=87 // pred_fallthru
          _
        %v1089 = vld [vmem:[%s714] sm:$0xff]
        %1090 = vadd.xlane.f32.xlu0 %v1089
        %v1091 = vpop.xlane.xlu0 %1090
        %v1092 = vrcp.pop 128.0
        %v1093 = vmul.f32 %v1091, %v1092
        %v1094 = vsub.f32 %v1089, %v1093
        %v1095 = vmul.f32 %v1094, %v1094
        %1096 = vadd.xlane.f32.xlu0 %v1095
        %v1097 = vpop.xlane.xlu0 %1096
        %v1098 = vmul.f32 %v1097, %v1092
        %v1099 = vadd.f32 %v1098, 1e-12
        %v1100 = vrsqrt.pop %v1099
        %v1101 = vmul.f32 %v1094, %v1100
        %v1103 = vlaneseq
        %v1104 = vshrl.u32 %v1103, 7
        %v1105 = vsub.s32 0, %v1104
        %v1106 = vrot.slane %v839, %v1105
        %v1108 = vmul.f32 %v1101, %v1106
        %v1110 = vlaneseq
        %v1111 = vshrl.u32 %v1110, 7
        %v1112 = vsub.s32 0, %v1111
        %v1113 = vrot.slane %v840, %v1112
        %v1115 = vadd.f32 %v1108, %v1113
        %v1116 = vpack.c.bf16 %v1115, %v1115
        %v1117 = vld [vmem:[#allocation16] sm:$0xf]
        %v1118 = vld [vmem:[#allocation16 + $0x4] sm:$0xf]
        %v1119 = vld [vmem:[#allocation16 + $0x8] sm:$0xf]
        %v1120 = vld [vmem:[#allocation16 + $0xc] sm:$0xf]
        %v1121 = vld [vmem:[#allocation16 + $0x10] sm:$0xf]
        %v1122 = vld [vmem:[#allocation16 + $0x14] sm:$0xf]
        %v1123 = vld [vmem:[#allocation16 + $0x18] sm:$0xf]
        %v1124 = vld [vmem:[#allocation16 + $0x1c] sm:$0xf]
        %v1125 = vld [vmem:[#allocation16 + $0x20] sm:$0xf]
        %v1126 = vld [vmem:[#allocation16 + $0x24] sm:$0xf]
        %v1127 = vld [vmem:[#allocation16 + $0x28] sm:$0xf]
        %v1128 = vld [vmem:[#allocation16 + $0x2c] sm:$0xf]
        %v1129 = vld [vmem:[#allocation16 + $0x30] sm:$0xf]
        %v1130 = vld [vmem:[#allocation16 + $0x34] sm:$0xf]
        %v1131 = vld [vmem:[#allocation16 + $0x38] sm:$0xf]
        %v1132 = vld [vmem:[#allocation16 + $0x3c] sm:$0xf]
        %v1133 = vld [vmem:[#allocation18] sm:$0x1]
        %v1135 = vlaneseq
        %v1136 = vshrl.u32 %v1135, 7
        %v1137 = vsub.s32 0, %v1136
        %v1138 = vrot.slane %v1133, %v1137
        %v1156 = vunpack.c.l.b16 %v1117
        %v1157 = vunpack.c.l.b16 %v1118
        %v1158 = vunpack.c.l.b16 %v1119
        %v1159 = vunpack.c.l.b16 %v1120
        %v1160 = vunpack.c.l.b16 %v1121
        %v1161 = vunpack.c.l.b16 %v1122
        %v1162 = vunpack.c.l.b16 %v1123
        %v1163 = vunpack.c.l.b16 %v1124
        %v1164 = vunpack.c.l.b16 %v1125
        %v1165 = vunpack.c.l.b16 %v1126
        %v1166 = vunpack.c.l.b16 %v1127
        %v1167 = vunpack.c.l.b16 %v1128
        %v1168 = vunpack.c.l.b16 %v1129
        %v1169 = vunpack.c.l.b16 %v1130
        %v1170 = vunpack.c.l.b16 %v1131
        %v1171 = vunpack.c.l.b16 %v1132
        %v1172 = vpack.c.b16 %v1157, %v1156
        %v1173 = vpack.c.b16 %v1159, %v1158
        %v1174 = vpack.c.b16 %v1161, %v1160
        %v1175 = vpack.c.b16 %v1163, %v1162
        %v1176 = vpack.c.b16 %v1165, %v1164
        %v1177 = vpack.c.b16 %v1167, %v1166
        %v1178 = vpack.c.b16 %v1169, %v1168
        %v1179 = vpack.c.b16 %v1171, %v1170
        %1188 = vmatprep.subr.bf16.mxu0 0
        %1189 = vmatpush1.bf16.msra.mxu0 %v1172
        %1190 = vmatprep.subr.bf16.mxu0 0
        %1191 = vmatpush1.bf16.msra.mxu0 %v1173
        %1192 = vmatprep.subr.bf16.mxu0 0
        %1193 = vmatpush1.bf16.msra.mxu0 %v1174
        %1194 = vmatprep.subr.bf16.mxu0 0
        %1195 = vmatpush1.bf16.msra.mxu0 %v1175
        %1196 = vmatprep.subr.bf16.mxu0 0
        %1197 = vmatpush1.bf16.msra.mxu0 %v1176
        %1198 = vmatprep.subr.bf16.mxu0 0
        %1199 = vmatpush1.bf16.msra.mxu0 %v1177
        %1200 = vmatprep.subr.bf16.mxu0 0
        %1201 = vmatpush1.bf16.msra.mxu0 %v1178
        %1202 = vmatprep.subr.bf16.mxu0 0
        %1203 = vmatpush1.bf16.msra.mxu0 %v1179
        %1204 = vmatprep.subr.bf16.mxu0 0
        %1205 = vmatpush1.bf16.msra.mxu0 0
        %1206 = vmatprep.subr.bf16.mxu0 0
        %1207 = vmatpush1.bf16.msra.mxu0 0
        %1208 = vmatprep.subr.bf16.mxu0 0
        %1209 = vmatpush1.bf16.msra.mxu0 0
        %1210 = vmatprep.subr.bf16.mxu0 0
        %1211 = vmatpush1.bf16.msra.mxu0 0
        %1212 = vmatprep.subr.bf16.mxu0 0
        %1213 = vmatpush1.bf16.msra.mxu0 0
        %1214 = vmatprep.subr.bf16.mxu0 0
        %1215 = vmatpush1.bf16.msra.mxu0 0
        %1216 = vmatprep.subr.bf16.mxu0 0
        %1217 = vmatpush1.bf16.msra.mxu0 0
        %1218 = vmatprep.subr.bf16.mxu0 0
        %1219 = vmatpush1.bf16.msra.mxu0 0
        %1220 = vmatprep.mubr.bf16.mxu0 0
        %1221 = vmatmul.mubr.bf16.gmra.mrb[0].mxu0 %v1116
        %v1222 = vpop.f32.mrb[0].mxu0
        %v1223 = vadd.f32 %v1138, %v1222
        %v1224 = vpop.f32.mrb[0].mxu0
        %v1225 = vpop.f32.mrb[0].mxu0
        %v1226 = vpop.f32.mrb[0].mxu0
        %1227 = vdwg.mxu0
        %v1228 = vmul.f32 %v1223, 0.17677669
        %v1229 = vpack.c.bf16 %v1228, %v1228
        %1231 = vrot.lane.b32.xlu0 %v1229, 96
        %v1232 = vpop.permute.xlu0 %1231
        %1233 = vrot.lane.b32.xlu0 %v1229, 64
        %v1234 = vpop.permute.xlu0 %1233
        %1235 = vrot.lane.b32.xlu0 %v1229, 32
        %v1236 = vpop.permute.xlu0 %1235
        %v1238 = vunpack.c.l.s4 1983009808
        %v1239 = vunpack.c.0.s8 %v1238
        %v1240 = vlaneseq
        %v1241 = vshrl.u32 %v1240, 7
        %v1242 = vsub.s32 %v1239, %v1241
        %v1243 = vrot.slane %v1229, %v1242
        %v1246 = vunpack.c.l.s4 1983009808
        %v1247 = vunpack.c.0.s8 %v1246
        %v1248 = vlaneseq
        %v1249 = vshrl.u32 %v1248, 7
        %v1250 = vsub.s32 %v1247, %v1249
        %v1251 = vrot.slane %v1234, %v1250
        %v1252 = vcombine.low %v1243, %v1251
        %v1253 = vcombine.high %v1243, %v1251
        %v1255 = vunpack.c.l.s4 1934713408
        %v1256 = vunpack.c.0.s8 %v1255
        %v1257 = vlaneseq
        %v1258 = vshrl.u32 %v1257, 7
        %v1259 = vsub.s32 %v1256, %v1258
        %v1260 = vrot.slane %v1252, %v1259
        %v1262 = vunpack.c.l.s4 1934713408
        %v1263 = vunpack.c.0.s8 %v1262
        %v1264 = vlaneseq
        %v1265 = vshrl.u32 %v1264, 7
        %v1266 = vsub.s32 %v1263, %v1265
        %v1267 = vrot.slane %v1253, %v1266
        %v1268 = vcombine.high %v1260, 0
        %v1269 = vcombine.high %v1267, 0
        %v1272 = vunpack.c.l.s4 1983009808
        %v1273 = vunpack.c.0.s8 %v1272
        %v1274 = vlaneseq
        %v1275 = vshrl.u32 %v1274, 7
        %v1276 = vsub.s32 %v1273, %v1275
        %v1277 = vrot.slane %v1232, %v1276
        %v1280 = vunpack.c.l.s4 1983009808
        %v1281 = vunpack.c.0.s8 %v1280
        %v1282 = vlaneseq
        %v1283 = vshrl.u32 %v1282, 7
        %v1284 = vsub.s32 %v1281, %v1283
        %v1285 = vrot.slane %v1236, %v1284
        %v1286 = vcombine.low %v1277, %v1285
        %v1287 = vcombine.high %v1277, %v1285
        %v1289 = vunpack.c.l.s4 1934713408
        %v1290 = vunpack.c.0.s8 %v1289
        %v1291 = vlaneseq
        %v1292 = vshrl.u32 %v1291, 7
        %v1293 = vsub.s32 %v1290, %v1292
        %v1294 = vrot.slane %v1286, %v1293
        %v1296 = vunpack.c.l.s4 1934713408
        %v1297 = vunpack.c.0.s8 %v1296
        %v1298 = vlaneseq
        %v1299 = vshrl.u32 %v1298, 7
        %v1300 = vsub.s32 %v1297, %v1299
        %v1301 = vrot.slane %v1287, %v1300
        %v1302 = vcombine.high %v1294, 0
        %v1303 = vcombine.high %v1301, 0
        %v1306 = vpack.i.b16 %v1294, %v1260
        %v1308 = vshrl.u32 %v1260, 16
        %v1309 = vshrl.u32 %v1294, 16
        %v1310 = vpack.i.b16 %v1309, %v1308
        %v1314 = vpack.i.b16 %v1302, %v1268
        %v1316 = vshrl.u32 %v1268, 16
        %v1317 = vshrl.u32 %v1302, 16
        %v1318 = vpack.i.b16 %v1317, %v1316
        %v1322 = vpack.i.b16 %v1301, %v1267
        %v1324 = vshrl.u32 %v1267, 16
        %v1325 = vshrl.u32 %v1301, 16
        %v1326 = vpack.i.b16 %v1325, %v1324
        %v1330 = vpack.i.b16 %v1303, %v1269
        %v1332 = vshrl.u32 %v1269, 16
        %v1333 = vshrl.u32 %v1303, 16
        %v1334 = vpack.i.b16 %v1333, %v1332
        %v1336 = vcombine.low %v1306, %v1322
        %v1338 = vunpack.c.l.s4 1983009808
        %v1339 = vunpack.c.0.s8 %v1338
        %v1340 = vlaneseq
        %v1341 = vshrl.u32 %v1340, 7
        %v1342 = vsub.s32 %v1339, %v1341
        %v1343 = vrot.slane %v1336, %v1342
        %v1344 = vcombine.low %v1314, %v1330
        %v1346 = vunpack.c.l.s4 1983009808
        %v1347 = vunpack.c.0.s8 %v1346
        %v1348 = vlaneseq
        %v1349 = vshrl.u32 %v1348, 7
        %v1350 = vsub.s32 %v1347, %v1349
        %v1351 = vrot.slane %v1344, %v1350
        %v1352 = vcombine.low %v1343, %v1351
        %v1354 = vunpack.c.l.s4 1934713408
        %v1355 = vunpack.c.0.s8 %v1354
        %v1356 = vlaneseq
        %v1357 = vshrl.u32 %v1356, 7
        %v1358 = vsub.s32 %v1355, %v1357
        %v1359 = vrot.slane %v1352, %v1358
        %v1360 = vcombine.high %v1359, 0
        %v1361 = vcombine.low %v1310, %v1326
        %v1363 = vunpack.c.l.s4 1983009808
        %v1364 = vunpack.c.0.s8 %v1363
        %v1365 = vlaneseq
        %v1366 = vshrl.u32 %v1365, 7
        %v1367 = vsub.s32 %v1364, %v1366
        %v1368 = vrot.slane %v1361, %v1367
        %v1369 = vcombine.low %v1318, %v1334
        %v1371 = vunpack.c.l.s4 1983009808
        %v1372 = vunpack.c.0.s8 %v1371
        %v1373 = vlaneseq
        %v1374 = vshrl.u32 %v1373, 7
        %v1375 = vsub.s32 %v1372, %v1374
        %v1376 = vrot.slane %v1369, %v1375
        %v1377 = vcombine.low %v1368, %v1376
        %v1379 = vunpack.c.l.s4 1934713408
        %v1380 = vunpack.c.0.s8 %v1379
        %v1381 = vlaneseq
        %v1382 = vshrl.u32 %v1381, 7
        %v1383 = vsub.s32 %v1380, %v1382
        %v1384 = vrot.slane %v1377, %v1383
        %v1385 = vcombine.high %v1384, 0
        %v1388 = vpack.i.b16 %v1384, %v1359
        %v1389 = vshrl.u32 %v1359, 16
        %v1390 = vshrl.u32 %v1384, 16
        %v1391 = vpack.i.b16 %v1390, %v1389
        %v1394 = vpack.i.b16 %v1385, %v1360
        %v1395 = vshrl.u32 %v1360, 16
        %v1396 = vshrl.u32 %v1385, 16
        %v1397 = vpack.i.b16 %v1396, %v1395
        %v1398 = vld [vmem:[#allocation2] sm:$0xff]
        %v1399 = vld [vmem:[#allocation2 + $0x8] sm:$0xff]
        %v1400 = vld [vmem:[#allocation2 + $0x10] sm:$0xff]
        %v1401 = vld [vmem:[#allocation2 + $0x18] sm:$0xff]
        %v1402 = vld [vmem:[#allocation2 + $0x20] sm:$0xff]
        %v1403 = vld [vmem:[#allocation2 + $0x28] sm:$0xff]
        %v1404 = vld [vmem:[#allocation2 + $0x30] sm:$0xff]
        %v1405 = vld [vmem:[#allocation2 + $0x38] sm:$0xff]
        %v1406 = vld [vmem:[#allocation3] sm:$0xff]
        %v1407 = vld [vmem:[%s722] sm:$0x1]
        %vm1408 = vcmp.gt.f32.partialorder %v1407, 0.0
        %vm1409 = vcmask 261120
        %v1411 = vsel %vm1409, %v1388, 0
        %1413 = vmatprep.subr.bf16.mxu0 0
        %1414 = vmatpush1.bf16.msra.mxu0 %v1398
        %1415 = vmatprep.subr.bf16.mxu0 0
        %1416 = vmatpush1.bf16.msra.mxu0 %v1399
        %1417 = vmatprep.subr.bf16.mxu0 0
        %1418 = vmatpush1.bf16.msra.mxu0 0
        %1419 = vmatprep.subr.bf16.mxu0 0
        %1420 = vmatpush1.bf16.msra.mxu0 0
        %1421 = vmatprep.subr.bf16.mxu0 0
        %1422 = vmatpush1.bf16.msra.mxu0 0
        %1423 = vmatprep.subr.bf16.mxu0 0
        %1424 = vmatpush1.bf16.msra.mxu0 0
        %1425 = vmatprep.subr.bf16.mxu0 0
        %1426 = vmatpush1.bf16.msra.mxu0 0
        %1427 = vmatprep.subr.bf16.mxu0 0
        %1428 = vmatpush1.bf16.msra.mxu0 0
        %1429 = vmatprep.subr.bf16.mxu0 0
        %1430 = vmatpush1.bf16.msra.mxu0 0
        %1431 = vmatprep.subr.bf16.mxu0 0
        %1432 = vmatpush1.bf16.msra.mxu0 0
        %1433 = vmatprep.subr.bf16.mxu0 0
        %1434 = vmatpush1.bf16.msra.mxu0 0
        %1435 = vmatprep.subr.bf16.mxu0 0
        %1436 = vmatpush1.bf16.msra.mxu0 0
        %1437 = vmatprep.subr.bf16.mxu0 0
        %1438 = vmatpush1.bf16.msra.mxu0 0
        %1439 = vmatprep.subr.bf16.mxu0 0
        %1440 = vmatpush1.bf16.msra.mxu0 0
        %1441 = vmatprep.subr.bf16.mxu0 0
        %1442 = vmatpush1.bf16.msra.mxu0 0
        %1443 = vmatprep.subr.bf16.mxu0 0
        %1444 = vmatpush1.bf16.msra.mxu0 0
        %1445 = vmatprep.mubr.bf16.mxu0 0
        %1446 = vmatmul.mubr.bf16.gmra.mrb[0].mxu0 %v1411
        %v1447 = vpop.f32.mrb[0].mxu0
        %v1448 = vadd.f32 0.0, %v1447
        %v1449 = vpop.f32.mrb[0].mxu0
        %v1450 = vpop.f32.mrb[0].mxu0
        %v1451 = vpop.f32.mrb[0].mxu0
        %1452 = vdwg.mxu0
        %v1454 = vsel %vm1409, %v1391, 0
        %1456 = vmatprep.subr.bf16.mxu0 0
        %1457 = vmatpush1.bf16.msra.mxu0 %v1400
        %1458 = vmatprep.subr.bf16.mxu0 0
        %1459 = vmatpush1.bf16.msra.mxu0 %v1401
        %1460 = vmatprep.subr.bf16.mxu0 0
        %1461 = vmatpush1.bf16.msra.mxu0 0
        %1462 = vmatprep.subr.bf16.mxu0 0
        %1463 = vmatpush1.bf16.msra.mxu0 0
        %1464 = vmatprep.subr.bf16.mxu0 0
        %1465 = vmatpush1.bf16.msra.mxu0 0
        %1466 = vmatprep.subr.bf16.mxu0 0
        %1467 = vmatpush1.bf16.msra.mxu0 0
        %1468 = vmatprep.subr.bf16.mxu0 0
        %1469 = vmatpush1.bf16.msra.mxu0 0
        %1470 = vmatprep.subr.bf16.mxu0 0
        %1471 = vmatpush1.bf16.msra.mxu0 0
        %1472 = vmatprep.subr.bf16.mxu0 0
        %1473 = vmatpush1.bf16.msra.mxu0 0
        %1474 = vmatprep.subr.bf16.mxu0 0
        %1475 = vmatpush1.bf16.msra.mxu0 0
        %1476 = vmatprep.subr.bf16.mxu0 0
        %1477 = vmatpush1.bf16.msra.mxu0 0
        %1478 = vmatprep.subr.bf16.mxu0 0
        %1479 = vmatpush1.bf16.msra.mxu0 0
        %1480 = vmatprep.subr.bf16.mxu0 0
        %1481 = vmatpush1.bf16.msra.mxu0 0
        %1482 = vmatprep.subr.bf16.mxu0 0
        %1483 = vmatpush1.bf16.msra.mxu0 0
        %1484 = vmatprep.subr.bf16.mxu0 0
        %1485 = vmatpush1.bf16.msra.mxu0 0
        %1486 = vmatprep.subr.bf16.mxu0 0
        %1487 = vmatpush1.bf16.msra.mxu0 0
        %1488 = vmatprep.mubr.bf16.mxu0 0
        %1489 = vmatmul.mubr.bf16.gmra.mrb[0].mxu0 %v1454
        %v1490 = vpop.f32.mrb[0].mxu0
        %v1491 = vadd.f32 0.0, %v1490
        %v1492 = vpop.f32.mrb[0].mxu0
        %v1493 = vpop.f32.mrb[0].mxu0
        %v1494 = vpop.f32.mrb[0].mxu0
        %1495 = vdwg.mxu0
        %v1497 = vsel %vm1409, %v1394, 0
        %1499 = vmatprep.subr.bf16.mxu0 0
        %1500 = vmatpush1.bf16.msra.mxu0 %v1402
        %1501 = vmatprep.subr.bf16.mxu0 0
        %1502 = vmatpush1.bf16.msra.mxu0 %v1403
        %1503 = vmatprep.subr.bf16.mxu0 0
        %1504 = vmatpush1.bf16.msra.mxu0 0
        %1505 = vmatprep.subr.bf16.mxu0 0
        %1506 = vmatpush1.bf16.msra.mxu0 0
        %1507 = vmatprep.subr.bf16.mxu0 0
        %1508 = vmatpush1.bf16.msra.mxu0 0
        %1509 = vmatprep.subr.bf16.mxu0 0
        %1510 = vmatpush1.bf16.msra.mxu0 0
        %1511 = vmatprep.subr.bf16.mxu0 0
        %1512 = vmatpush1.bf16.msra.mxu0 0
        %1513 = vmatprep.subr.bf16.mxu0 0
        %1514 = vmatpush1.bf16.msra.mxu0 0
        %1515 = vmatprep.subr.bf16.mxu0 0
        %1516 = vmatpush1.bf16.msra.mxu0 0
        %1517 = vmatprep.subr.bf16.mxu0 0
        %1518 = vmatpush1.bf16.msra.mxu0 0
        %1519 = vmatprep.subr.bf16.mxu0 0
        %1520 = vmatpush1.bf16.msra.mxu0 0
        %1521 = vmatprep.subr.bf16.mxu0 0
        %1522 = vmatpush1.bf16.msra.mxu0 0
        %1523 = vmatprep.subr.bf16.mxu0 0
        %1524 = vmatpush1.bf16.msra.mxu0 0
        %1525 = vmatprep.subr.bf16.mxu0 0
        %1526 = vmatpush1.bf16.msra.mxu0 0
        %1527 = vmatprep.subr.bf16.mxu0 0
        %1528 = vmatpush1.bf16.msra.mxu0 0
        %1529 = vmatprep.subr.bf16.mxu0 0
        %1530 = vmatpush1.bf16.msra.mxu0 0
        %1531 = vmatprep.mubr.bf16.mxu0 0
        %1532 = vmatmul.mubr.bf16.gmra.mrb[0].mxu0 %v1497
        %v1533 = vpop.f32.mrb[0].mxu0
        %v1534 = vadd.f32 0.0, %v1533
        %v1535 = vpop.f32.mrb[0].mxu0
        %v1536 = vpop.f32.mrb[0].mxu0
        %v1537 = vpop.f32.mrb[0].mxu0
        %1538 = vdwg.mxu0
        %v1540 = vsel %vm1409, %v1397, 0
        %1542 = vmatprep.subr.bf16.mxu0 0
        %1543 = vmatpush1.bf16.msra.mxu0 %v1404
        %1544 = vmatprep.subr.bf16.mxu0 0
        %1545 = vmatpush1.bf16.msra.mxu0 %v1405
        %1546 = vmatprep.subr.bf16.mxu0 0
        %1547 = vmatpush1.bf16.msra.mxu0 0
        %1548 = vmatprep.subr.bf16.mxu0 0
        %1549 = vmatpush1.bf16.msra.mxu0 0
        %1550 = vmatprep.subr.bf16.mxu0 0
        %1551 = vmatpush1.bf16.msra.mxu0 0
        %1552 = vmatprep.subr.bf16.mxu0 0
        %1553 = vmatpush1.bf16.msra.mxu0 0
        %1554 = vmatprep.subr.bf16.mxu0 0
        %1555 = vmatpush1.bf16.msra.mxu0 0
        %1556 = vmatprep.subr.bf16.mxu0 0
        %1557 = vmatpush1.bf16.msra.mxu0 0
        %1558 = vmatprep.subr.bf16.mxu0 0
        %1559 = vmatpush1.bf16.msra.mxu0 0
        %1560 = vmatprep.subr.bf16.mxu0 0
        %1561 = vmatpush1.bf16.msra.mxu0 0
        %1562 = vmatprep.subr.bf16.mxu0 0
        %1563 = vmatpush1.bf16.msra.mxu0 0
        %1564 = vmatprep.subr.bf16.mxu0 0
        %1565 = vmatpush1.bf16.msra.mxu0 0
        %1566 = vmatprep.subr.bf16.mxu0 0
        %1567 = vmatpush1.bf16.msra.mxu0 0
        %1568 = vmatprep.subr.bf16.mxu0 0
        %1569 = vmatpush1.bf16.msra.mxu0 0
        %1570 = vmatprep.subr.bf16.mxu0 0
        %1571 = vmatpush1.bf16.msra.mxu0 0
        %1572 = vmatprep.subr.bf16.mxu0 0
        %1573 = vmatpush1.bf16.msra.mxu0 0
        %1574 = vmatprep.mubr.bf16.mxu0 0
        %1575 = vmatmul.mubr.bf16.gmra.mrb[0].mxu0 %v1540
        %v1576 = vpop.f32.mrb[0].mxu0
        %v1577 = vadd.f32 0.0, %v1576
        %v1578 = vpop.f32.mrb[0].mxu0
        %v1579 = vpop.f32.mrb[0].mxu0
        %v1580 = vpop.f32.mrb[0].mxu0
        %1581 = vdwg.mxu0
        %v1582 = vsel %vm1408, 1, 0
        %v1583 = vlaneseq
        %v1584 = vshrl.u32 %v1583, 7
        %v1585 = vsub.s32 0, %v1584
        %v1586 = vrot.slane %v1582, %v1585
        %vm1587 = vcmp.eq.s32.totalorder %v1586, 1
        %v1588 = vsel %vm1587, %v1448, -1.7014117e+38
        %v1589 = vsel %vm1587, %v1491, -1.7014117e+38
        %v1590 = vsel %vm1587, %v1534, -1.7014117e+38
        %v1591 = vsel %vm1587, %v1577, -1.7014117e+38
        %vm1592 = vcmask 130048
        %v1593 = vsel %vm1592, %v1588, -inf
        %1594 = vmax.xlane.f32.xlu0 %v1593
        %v1595 = vpop.xlane.xlu0 %1594
        %v1596 = vsel %vm1592, %v1589, -inf
        %1597 = vmax.xlane.f32.xlu0 %v1596
        %v1598 = vpop.xlane.xlu0 %1597
        %v1599 = vsel %vm1592, %v1590, -inf
        %1600 = vmax.xlane.f32.xlu0 %v1599
        %v1601 = vpop.xlane.xlu0 %1600
        %v1602 = vsel %vm1592, %v1591, -inf
        %1603 = vmax.xlane.f32.xlu0 %v1602
        %v1604 = vpop.xlane.xlu0 %1603
        %v1605 = vmax.f32 %v1595, -1.7014117e+38
        %v1606 = vmax.f32 %v1598, -1.7014117e+38
        %v1607 = vmax.f32 %v1601, -1.7014117e+38
        %v1608 = vmax.f32 %v1604, -1.7014117e+38
        %v1609 = vsub.f32 -1.7014117e+38, %v1605
        %v1610 = vsub.f32 -1.7014117e+38, %v1606
        %v1611 = vsub.f32 -1.7014117e+38, %v1607
        %v1612 = vsub.f32 -1.7014117e+38, %v1608
        %v1613 = vmul.f32 %v1609, 1.442695
        %v1614 = vpow.pop %v1613
        %v1615 = vmul.f32 %v1610, 1.442695
        %v1616 = vpow.pop %v1615
        %v1617 = vmul.f32 %v1611, 1.442695
        %v1618 = vpow.pop %v1617
        %v1619 = vmul.f32 %v1612, 1.442695
        %v1620 = vpow.pop %v1619
        %v1621 = vsub.f32 %v1588, %v1605
        %v1622 = vsub.f32 %v1589, %v1606
        %v1623 = vsub.f32 %v1590, %v1607
        %v1624 = vsub.f32 %v1591, %v1608
        %v1625 = vmul.f32 %v1621, 1.442695
        %v1626 = vpow.pop %v1625
        %v1627 = vmul.f32 %v1622, 1.442695
        %v1628 = vpow.pop %v1627
        %v1629 = vmul.f32 %v1623, 1.442695
        %v1630 = vpow.pop %v1629
        %v1631 = vmul.f32 %v1624, 1.442695
        %v1632 = vpow.pop %v1631
        %v1633 = vsel %vm1587, %v1626, 0.0
        %v1634 = vsel %vm1587, %v1628, 0.0
        %v1635 = vsel %vm1587, %v1630, 0.0
        %v1636 = vsel %vm1587, %v1632, 0.0
        %v1637 = vmul.f32 %v1614, 0.0
        %v1638 = vmul.f32 %v1616, 0.0
        %v1639 = vmul.f32 %v1618, 0.0
        %v1640 = vmul.f32 %v1620, 0.0
        %v1641 = vsel %vm1592, %v1633, 0.0
        %1642 = vadd.xlane.f32.xlu0 %v1641
        %v1643 = vpop.xlane.xlu0 %1642
        %v1644 = vsel %vm1592, %v1634, 0.0
        %1645 = vadd.xlane.f32.xlu0 %v1644
        %v1646 = vpop.xlane.xlu0 %1645
        %v1647 = vsel %vm1592, %v1635, 0.0
        %1648 = vadd.xlane.f32.xlu0 %v1647
        %v1649 = vpop.xlane.xlu0 %1648
        %v1650 = vsel %vm1592, %v1636, 0.0
        %1651 = vadd.xlane.f32.xlu0 %v1650
        %v1652 = vpop.xlane.xlu0 %1651
        %v1653 = vadd.f32 %v1637, %v1643
        %v1654 = vadd.f32 %v1638, %v1646
        %v1655 = vadd.f32 %v1639, %v1649
        %v1656 = vadd.f32 %v1640, %v1652
        %v1657 = vpack.c.bf16 %v1633, %v1633
        %v1658 = vpack.c.bf16 %v1634, %v1634
        %v1659 = vpack.c.bf16 %v1635, %v1635
        %v1660 = vpack.c.bf16 %v1636, %v1636
        %v1662 = vsel %vm1592, %v1657, 0
        %1664 = vmatprep.subr.bf16.mxu0 0
        %1665 = vmatpush1.bf16.msra.mxu0 %v1406
        %1666 = vmatprep.subr.bf16.mxu0 0
        %1667 = vmatpush1.bf16.msra.mxu0 0
        %1668 = vmatprep.subr.bf16.mxu0 0
        %1669 = vmatpush1.bf16.msra.mxu0 0
        %1670 = vmatprep.subr.bf16.mxu0 0
        %1671 = vmatpush1.bf16.msra.mxu0 0
        %1672 = vmatprep.subr.bf16.mxu0 0
        %1673 = vmatpush1.bf16.msra.mxu0 0
        %1674 = vmatprep.subr.bf16.mxu0 0
        %1675 = vmatpush1.bf16.msra.mxu0 0
        %1676 = vmatprep.subr.bf16.mxu0 0
        %1677 = vmatpush1.bf16.msra.mxu0 0
        %1678 = vmatprep.subr.bf16.mxu0 0
        %1679 = vmatpush1.bf16.msra.mxu0 0
        %1680 = vmatprep.subr.bf16.mxu0 0
        %1681 = vmatpush1.bf16.msra.mxu0 0
        %1682 = vmatprep.subr.bf16.mxu0 0
        %1683 = vmatpush1.bf16.msra.mxu0 0
        %1684 = vmatprep.subr.bf16.mxu0 0
        %1685 = vmatpush1.bf16.msra.mxu0 0
        %1686 = vmatprep.subr.bf16.mxu0 0
        %1687 = vmatpush1.bf16.msra.mxu0 0
        %1688 = vmatprep.subr.bf16.mxu0 0
        %1689 = vmatpush1.bf16.msra.mxu0 0
        %1690 = vmatprep.subr.bf16.mxu0 0
        %1691 = vmatpush1.bf16.msra.mxu0 0
        %1692 = vmatprep.subr.bf16.mxu0 0
        %1693 = vmatpush1.bf16.msra.mxu0 0
        %1694 = vmatprep.subr.bf16.mxu0 0
        %1695 = vmatpush1.bf16.msra.mxu0 0
        %1696 = vmatprep.mubr.bf16.mxu0 0
        %1697 = vmatmul.mubr.bf16.gmra.mrb[0].mxu0 %v1662
        %v1698 = vpop.f32.mrb[0].mxu0
        %v1699 = vadd.f32 0.0, %v1698
        %v1700 = vpop.f32.mrb[0].mxu0
        %v1701 = vpop.f32.mrb[0].mxu0
        %v1702 = vpop.f32.mrb[0].mxu0
        %1703 = vdwg.mxu0
        %1705 = vrot.lane.b32.xlu0 %v1406, 96
        %v1706 = vpop.permute.xlu0 %1705
        %v1709 = vsel %vm1592, %v1658, 0
        %1711 = vmatprep.subr.bf16.mxu0 0
        %1712 = vmatpush1.bf16.msra.mxu0 %v1706
        %1713 = vmatprep.subr.bf16.mxu0 0
        %1714 = vmatpush1.bf16.msra.mxu0 0
        %1715 = vmatprep.subr.bf16.mxu0 0
        %1716 = vmatpush1.bf16.msra.mxu0 0
        %1717 = vmatprep.subr.bf16.mxu0 0
        %1718 = vmatpush1.bf16.msra.mxu0 0
        %1719 = vmatprep.subr.bf16.mxu0 0
        %1720 = vmatpush1.bf16.msra.mxu0 0
        %1721 = vmatprep.subr.bf16.mxu0 0
        %1722 = vmatpush1.bf16.msra.mxu0 0
        %1723 = vmatprep.subr.bf16.mxu0 0
        %1724 = vmatpush1.bf16.msra.mxu0 0
        %1725 = vmatprep.subr.bf16.mxu0 0
        %1726 = vmatpush1.bf16.msra.mxu0 0
        %1727 = vmatprep.subr.bf16.mxu0 0
        %1728 = vmatpush1.bf16.msra.mxu0 0
        %1729 = vmatprep.subr.bf16.mxu0 0
        %1730 = vmatpush1.bf16.msra.mxu0 0
        %1731 = vmatprep.subr.bf16.mxu0 0
        %1732 = vmatpush1.bf16.msra.mxu0 0
        %1733 = vmatprep.subr.bf16.mxu0 0
        %1734 = vmatpush1.bf16.msra.mxu0 0
        %1735 = vmatprep.subr.bf16.mxu0 0
        %1736 = vmatpush1.bf16.msra.mxu0 0
        %1737 = vmatprep.subr.bf16.mxu0 0
        %1738 = vmatpush1.bf16.msra.mxu0 0
        %1739 = vmatprep.subr.bf16.mxu0 0
        %1740 = vmatpush1.bf16.msra.mxu0 0
        %1741 = vmatprep.subr.bf16.mxu0 0
        %1742 = vmatpush1.bf16.msra.mxu0 0
        %1743 = vmatprep.mubr.bf16.mxu0 0
        %1744 = vmatmul.mubr.bf16.gmra.mrb[0].mxu0 %v1709
        %v1745 = vpop.f32.mrb[0].mxu0
        %v1746 = vadd.f32 0.0, %v1745
        %v1747 = vpop.f32.mrb[0].mxu0
        %v1748 = vpop.f32.mrb[0].mxu0
        %v1749 = vpop.f32.mrb[0].mxu0
        %1750 = vdwg.mxu0
        %1751 = vrot.lane.b32.xlu0 %v1406, 64
        %v1752 = vpop.permute.xlu0 %1751
        %v1755 = vsel %vm1592, %v1659, 0
        %1757 = vmatprep.subr.bf16.mxu0 0
        %1758 = vmatpush1.bf16.msra.mxu0 %v1752
        %1759 = vmatprep.subr.bf16.mxu0 0
        %1760 = vmatpush1.bf16.msra.mxu0 0
        %1761 = vmatprep.subr.bf16.mxu0 0
        %1762 = vmatpush1.bf16.msra.mxu0 0
        %1763 = vmatprep.subr.bf16.mxu0 0
        %1764 = vmatpush1.bf16.msra.mxu0 0
        %1765 = vmatprep.subr.bf16.mxu0 0
        %1766 = vmatpush1.bf16.msra.mxu0 0
        %1767 = vmatprep.subr.bf16.mxu0 0
        %1768 = vmatpush1.bf16.msra.mxu0 0
        %1769 = vmatprep.subr.bf16.mxu0 0
        %1770 = vmatpush1.bf16.msra.mxu0 0
        %1771 = vmatprep.subr.bf16.mxu0 0
        %1772 = vmatpush1.bf16.msra.mxu0 0
        %1773 = vmatprep.subr.bf16.mxu0 0
        %1774 = vmatpush1.bf16.msra.mxu0 0
        %1775 = vmatprep.subr.bf16.mxu0 0
        %1776 = vmatpush1.bf16.msra.mxu0 0
        %1777 = vmatprep.subr.bf16.mxu0 0
        %1778 = vmatpush1.bf16.msra.mxu0 0
        %1779 = vmatprep.subr.bf16.mxu0 0
        %1780 = vmatpush1.bf16.msra.mxu0 0
        %1781 = vmatprep.subr.bf16.mxu0 0
        %1782 = vmatpush1.bf16.msra.mxu0 0
        %1783 = vmatprep.subr.bf16.mxu0 0
        %1784 = vmatpush1.bf16.msra.mxu0 0
        %1785 = vmatprep.subr.bf16.mxu0 0
        %1786 = vmatpush1.bf16.msra.mxu0 0
        %1787 = vmatprep.subr.bf16.mxu0 0
        %1788 = vmatpush1.bf16.msra.mxu0 0
        %1789 = vmatprep.mubr.bf16.mxu0 0
        %1790 = vmatmul.mubr.bf16.gmra.mrb[0].mxu0 %v1755
        %v1791 = vpop.f32.mrb[0].mxu0
        %v1792 = vadd.f32 0.0, %v1791
        %v1793 = vpop.f32.mrb[0].mxu0
        %v1794 = vpop.f32.mrb[0].mxu0
        %v1795 = vpop.f32.mrb[0].mxu0
        %1796 = vdwg.mxu0
        %1797 = vrot.lane.b32.xlu0 %v1406, 32
        %v1798 = vpop.permute.xlu0 %1797
        %v1801 = vsel %vm1592, %v1660, 0
        %1803 = vmatprep.subr.bf16.mxu0 0
        %1804 = vmatpush1.bf16.msra.mxu0 %v1798
        %1805 = vmatprep.subr.bf16.mxu0 0
        %1806 = vmatpush1.bf16.msra.mxu0 0
        %1807 = vmatprep.subr.bf16.mxu0 0
        %1808 = vmatpush1.bf16.msra.mxu0 0
        %1809 = vmatprep.subr.bf16.mxu0 0
        %1810 = vmatpush1.bf16.msra.mxu0 0
        %1811 = vmatprep.subr.bf16.mxu0 0
        %1812 = vmatpush1.bf16.msra.mxu0 0
        %1813 = vmatprep.subr.bf16.mxu0 0
        %1814 = vmatpush1.bf16.msra.mxu0 0
        %1815 = vmatprep.subr.bf16.mxu0 0
        %1816 = vmatpush1.bf16.msra.mxu0 0
        %1817 = vmatprep.subr.bf16.mxu0 0
        %1818 = vmatpush1.bf16.msra.mxu0 0
        %1819 = vmatprep.subr.bf16.mxu0 0
        %1820 = vmatpush1.bf16.msra.mxu0 0
        %1821 = vmatprep.subr.bf16.mxu0 0
        %1822 = vmatpush1.bf16.msra.mxu0 0
        %1823 = vmatprep.subr.bf16.mxu0 0
        %1824 = vmatpush1.bf16.msra.mxu0 0
        %1825 = vmatprep.subr.bf16.mxu0 0
        %1826 = vmatpush1.bf16.msra.mxu0 0
        %1827 = vmatprep.subr.bf16.mxu0 0
        %1828 = vmatpush1.bf16.msra.mxu0 0
        %1829 = vmatprep.subr.bf16.mxu0 0
        %1830 = vmatpush1.bf16.msra.mxu0 0
        %1831 = vmatprep.subr.bf16.mxu0 0
        %1832 = vmatpush1.bf16.msra.mxu0 0
        %1833 = vmatprep.subr.bf16.mxu0 0
        %1834 = vmatpush1.bf16.msra.mxu0 0
        %1835 = vmatprep.mubr.bf16.mxu0 0
        %1836 = vmatmul.mubr.bf16.gmra.mrb[0].mxu0 %v1801
        %v1837 = vpop.f32.mrb[0].mxu0
        %v1838 = vadd.f32 0.0, %v1837
        %v1839 = vpop.f32.mrb[0].mxu0
        %v1840 = vpop.f32.mrb[0].mxu0
        %v1841 = vpop.f32.mrb[0].mxu0
        %1842 = vdwg.mxu0
        %v1843 = vadd.f32 %v1637, %v1699
        %v1844 = vadd.f32 %v1638, %v1746
        %v1845 = vadd.f32 %v1639, %v1792
        %v1846 = vadd.f32 %v1640, %v1838
        %v1847 = vmax.f32 %v1653, 1e-30
        %v1848 = vmax.f32 %v1654, 1e-30
        %v1849 = vmax.f32 %v1655, 1e-30
        %v1850 = vmax.f32 %v1656, 1e-30
        %v1851 = vrcp.pop %v1847
        %v1852 = vrcp.pop %v1848
        %v1853 = vrcp.pop %v1849
        %v1854 = vrcp.pop %v1850
        %v1855 = vmul.f32 %v1843, %v1851
        %v1856 = vmul.f32 %v1844, %v1852
        %v1857 = vmul.f32 %v1845, %v1853
        %v1858 = vmul.f32 %v1846, %v1854
        %v1859 = vcombine.low %v1855, %v1857
        %v1860 = vcombine.high %v1855, %v1857
        %v1862 = vunpack.c.l.s4 1983009808
        %v1863 = vunpack.c.0.s8 %v1862
        %v1864 = vlaneseq
        %v1865 = vshrl.u32 %v1864, 7
        %v1866 = vsub.s32 %v1863, %v1865
        %v1867 = vrot.slane %v1859, %v1866
        %v1869 = vunpack.c.l.s4 1983009808
        %v1870 = vunpack.c.0.s8 %v1869
        %v1871 = vlaneseq
        %v1872 = vshrl.u32 %v1871, 7
        %v1873 = vsub.s32 %v1870, %v1872
        %v1874 = vrot.slane %v1860, %v1873
        %v1875 = vcombine.low %v1856, %v1858
        %v1876 = vcombine.high %v1856, %v1858
        %v1878 = vunpack.c.l.s4 1983009808
        %v1879 = vunpack.c.0.s8 %v1878
        %v1880 = vlaneseq
        %v1881 = vshrl.u32 %v1880, 7
        %v1882 = vsub.s32 %v1879, %v1881
        %v1883 = vrot.slane %v1875, %v1882
        %v1885 = vunpack.c.l.s4 1983009808
        %v1886 = vunpack.c.0.s8 %v1885
        %v1887 = vlaneseq
        %v1888 = vshrl.u32 %v1887, 7
        %v1889 = vsub.s32 %v1886, %v1888
        %v1890 = vrot.slane %v1876, %v1889
        %v1891 = vcombine.low %v1867, %v1883
        %v1892 = vcombine.high %v1867, %v1883
        %v1894 = vunpack.c.l.s4 1934713408
        %v1895 = vunpack.c.0.s8 %v1894
        %v1896 = vlaneseq
        %v1897 = vshrl.u32 %v1896, 7
        %v1898 = vsub.s32 %v1895, %v1897
        %v1899 = vrot.slane %v1891, %v1898
        %v1901 = vunpack.c.l.s4 1934713408
        %v1902 = vunpack.c.0.s8 %v1901
        %v1903 = vlaneseq
        %v1904 = vshrl.u32 %v1903, 7
        %v1905 = vsub.s32 %v1902, %v1904
        %v1906 = vrot.slane %v1892, %v1905
        %v1907 = vcombine.low %v1874, %v1890
        %v1908 = vcombine.high %v1874, %v1890
        %v1910 = vunpack.c.l.s4 1934713408
        %v1911 = vunpack.c.0.s8 %v1910
        %v1912 = vlaneseq
        %v1913 = vshrl.u32 %v1912, 7
        %v1914 = vsub.s32 %v1911, %v1913
        %v1915 = vrot.slane %v1907, %v1914
        %v1917 = vunpack.c.l.s4 1934713408
        %v1918 = vunpack.c.0.s8 %v1917
        %v1919 = vlaneseq
        %v1920 = vshrl.u32 %v1919, 7
        %v1921 = vsub.s32 %v1918, %v1920
        %v1922 = vrot.slane %v1908, %v1921
        %v1923 = vcombine.high %v1899, 0.0
        %v1924 = vcombine.high %v1906, 0.0
        %v1925 = vcombine.high %v1915, 0.0
        %v1926 = vcombine.high %v1922, 0.0
        %v1927 = vcombine.low %v1899, %v1906
        %v1929 = vunpack.c.l.s4 1983009808
        %v1930 = vunpack.c.0.s8 %v1929
        %v1931 = vlaneseq
        %v1932 = vshrl.u32 %v1931, 7
        %v1933 = vsub.s32 %v1930, %v1932
        %v1934 = vrot.slane %v1927, %v1933
        %v1935 = vcombine.low %v1923, %v1924
        %v1937 = vunpack.c.l.s4 1983009808
        %v1938 = vunpack.c.0.s8 %v1937
        %v1939 = vlaneseq
        %v1940 = vshrl.u32 %v1939, 7
        %v1941 = vsub.s32 %v1938, %v1940
        %v1942 = vrot.slane %v1935, %v1941
        %v1943 = vcombine.low %v1915, %v1922
        %v1945 = vunpack.c.l.s4 1983009808
        %v1946 = vunpack.c.0.s8 %v1945
        %v1947 = vlaneseq
        %v1948 = vshrl.u32 %v1947, 7
        %v1949 = vsub.s32 %v1946, %v1948
        %v1950 = vrot.slane %v1943, %v1949
        %v1951 = vcombine.low %v1925, %v1926
        %v1953 = vunpack.c.l.s4 1983009808
        %v1954 = vunpack.c.0.s8 %v1953
        %v1955 = vlaneseq
        %v1956 = vshrl.u32 %v1955, 7
        %v1957 = vsub.s32 %v1954, %v1956
        %v1958 = vrot.slane %v1951, %v1957
        %v1959 = vcombine.low %v1934, %v1942
        %v1960 = vcombine.high %v1934, %v1942
        %v1962 = vunpack.c.l.s4 1934713408
        %v1963 = vunpack.c.0.s8 %v1962
        %v1964 = vlaneseq
        %v1965 = vshrl.u32 %v1964, 7
        %v1966 = vsub.s32 %v1963, %v1965
        %v1967 = vrot.slane %v1959, %v1966
        %v1969 = vunpack.c.l.s4 1934713408
        %v1970 = vunpack.c.0.s8 %v1969
        %v1971 = vlaneseq
        %v1972 = vshrl.u32 %v1971, 7
        %v1973 = vsub.s32 %v1970, %v1972
        %v1974 = vrot.slane %v1960, %v1973
        %v1975 = vcombine.low %v1950, %v1958
        %v1976 = vcombine.high %v1950, %v1958
        %v1978 = vunpack.c.l.s4 1934713408
        %v1979 = vunpack.c.0.s8 %v1978
        %v1980 = vlaneseq
        %v1981 = vshrl.u32 %v1980, 7
        %v1982 = vsub.s32 %v1979, %v1981
        %v1983 = vrot.slane %v1975, %v1982
        %v1985 = vunpack.c.l.s4 1934713408
        %v1986 = vunpack.c.0.s8 %v1985
        %v1987 = vlaneseq
        %v1988 = vshrl.u32 %v1987, 7
        %v1989 = vsub.s32 %v1986, %v1988
        %v1990 = vrot.slane %v1976, %v1989
        %v1991 = vcombine.low %v1967, %v1983
        %v1992 = vcombine.high %v1967, %v1983
        %v1993 = vcombine.low %v1974, %v1990
        %v1994 = vcombine.high %v1974, %v1990
        %1996 = vrot.lane.b32.xlu0 %v1992, 32
        %v1997 = vpop.permute.xlu0 %1996
        %2000 = vrot.lane.b32.xlu0 %v1993, 64
        %v2001 = vpop.permute.xlu0 %2000
        %2004 = vrot.lane.b32.xlu0 %v1994, 96
        %v2005 = vpop.permute.xlu0 %2004
        %v2007 = vsel %vm1409, %v1991, %v1997
        %vm2008 = vcmask 523264
        %v2009 = vsel %vm2008, %v2007, %v2001
        %vm2010 = vcmask 785408
        %v2011 = vsel %vm2010, %v2009, %v2005
        %v2012 = vpack.c.bf16 %v2011, %v2011
        %v2013 = vld [vmem:[#allocation22] sm:$0xf]
        %v2014 = vld [vmem:[#allocation22 + $0x4] sm:$0xf]
        %v2015 = vld [vmem:[#allocation22 + $0x8] sm:$0xf]
        %v2016 = vld [vmem:[#allocation22 + $0xc] sm:$0xf]
        %v2017 = vld [vmem:[#allocation22 + $0x10] sm:$0xf]
        %v2018 = vld [vmem:[#allocation22 + $0x14] sm:$0xf]
        %v2019 = vld [vmem:[#allocation22 + $0x18] sm:$0xf]
        %v2020 = vld [vmem:[#allocation22 + $0x1c] sm:$0xf]
        %v2021 = vld [vmem:[#allocation22 + $0x20] sm:$0xf]
        %v2022 = vld [vmem:[#allocation22 + $0x24] sm:$0xf]
        %v2023 = vld [vmem:[#allocation22 + $0x28] sm:$0xf]
        %v2024 = vld [vmem:[#allocation22 + $0x2c] sm:$0xf]
        %v2025 = vld [vmem:[#allocation22 + $0x30] sm:$0xf]
        %v2026 = vld [vmem:[#allocation22 + $0x34] sm:$0xf]
        %v2027 = vld [vmem:[#allocation22 + $0x38] sm:$0xf]
        %v2028 = vld [vmem:[#allocation22 + $0x3c] sm:$0xf]
        %v2029 = vld [vmem:[#allocation24] sm:$0x1]
        %v2031 = vlaneseq
        %v2032 = vshrl.u32 %v2031, 7
        %v2033 = vsub.s32 0, %v2032
        %v2034 = vrot.slane %v2029, %v2033
        %v2052 = vunpack.c.l.b16 %v2013
        %v2053 = vunpack.c.l.b16 %v2014
        %v2054 = vunpack.c.l.b16 %v2015
        %v2055 = vunpack.c.l.b16 %v2016
        %v2056 = vunpack.c.l.b16 %v2017
        %v2057 = vunpack.c.l.b16 %v2018
        %v2058 = vunpack.c.l.b16 %v2019
        %v2059 = vunpack.c.l.b16 %v2020
        %v2060 = vunpack.c.l.b16 %v2021
        %v2061 = vunpack.c.l.b16 %v2022
        %v2062 = vunpack.c.l.b16 %v2023
        %v2063 = vunpack.c.l.b16 %v2024
        %v2064 = vunpack.c.l.b16 %v2025
        %v2065 = vunpack.c.l.b16 %v2026
        %v2066 = vunpack.c.l.b16 %v2027
        %v2067 = vunpack.c.l.b16 %v2028
        %v2068 = vpack.c.b16 %v2053, %v2052
        %v2069 = vpack.c.b16 %v2055, %v2054
        %v2070 = vpack.c.b16 %v2057, %v2056
        %v2071 = vpack.c.b16 %v2059, %v2058
        %v2072 = vpack.c.b16 %v2061, %v2060
        %v2073 = vpack.c.b16 %v2063, %v2062
        %v2074 = vpack.c.b16 %v2065, %v2064
        %v2075 = vpack.c.b16 %v2067, %v2066
        %2084 = vmatprep.subr.bf16.mxu0 0
        %2085 = vmatpush1.bf16.msra.mxu0 %v2068
        %2086 = vmatprep.subr.bf16.mxu0 0
        %2087 = vmatpush1.bf16.msra.mxu0 %v2069
        %2088 = vmatprep.subr.bf16.mxu0 0
        %2089 = vmatpush1.bf16.msra.mxu0 %v2070
        %2090 = vmatprep.subr.bf16.mxu0 0
        %2091 = vmatpush1.bf16.msra.mxu0 %v2071
        %2092 = vmatprep.subr.bf16.mxu0 0
        %2093 = vmatpush1.bf16.msra.mxu0 %v2072
        %2094 = vmatprep.subr.bf16.mxu0 0
        %2095 = vmatpush1.bf16.msra.mxu0 %v2073
        %2096 = vmatprep.subr.bf16.mxu0 0
        %2097 = vmatpush1.bf16.msra.mxu0 %v2074
        %2098 = vmatprep.subr.bf16.mxu0 0
        %2099 = vmatpush1.bf16.msra.mxu0 %v2075
        %2100 = vmatprep.subr.bf16.mxu0 0
        %2101 = vmatpush1.bf16.msra.mxu0 0
        %2102 = vmatprep.subr.bf16.mxu0 0
        %2103 = vmatpush1.bf16.msra.mxu0 0
        %2104 = vmatprep.subr.bf16.mxu0 0
        %2105 = vmatpush1.bf16.msra.mxu0 0
        %2106 = vmatprep.subr.bf16.mxu0 0
        %2107 = vmatpush1.bf16.msra.mxu0 0
        %2108 = vmatprep.subr.bf16.mxu0 0
        %2109 = vmatpush1.bf16.msra.mxu0 0
        %2110 = vmatprep.subr.bf16.mxu0 0
        %2111 = vmatpush1.bf16.msra.mxu0 0
        %2112 = vmatprep.subr.bf16.mxu0 0
        %2113 = vmatpush1.bf16.msra.mxu0 0
        %2114 = vmatprep.subr.bf16.mxu0 0
        %2115 = vmatpush1.bf16.msra.mxu0 0
        %2116 = vmatprep.mubr.bf16.mxu0 0
        %2117 = vmatmul.mubr.bf16.gmra.mrb[0].mxu0 %v2012
        %v2118 = vpop.f32.mrb[0].mxu0
        %v2119 = vadd.f32 %v2034, %v2118
        %v2120 = vpop.f32.mrb[0].mxu0
        %v2121 = vpop.f32.mrb[0].mxu0
        %v2122 = vpop.f32.mrb[0].mxu0
        %2123 = vdwg.mxu0
        %v2124 = vadd.f32 %v1089, %v2119
        %v2125 = vld [vmem:[#allocation13] sm:$0x1]
        %v2126 = vld [vmem:[#allocation15] sm:$0x1]
        %2127 = vadd.xlane.f32.xlu0 %v2124
        %v2128 = vpop.xlane.xlu0 %2127
        %v2129 = vmul.f32 %v2128, %v1092
        %v2130 = vsub.f32 %v2124, %v2129
        %v2131 = vmul.f32 %v2130, %v2130
        %2132 = vadd.xlane.f32.xlu0 %v2131
        %v2133 = vpop.xlane.xlu0 %2132
        %v2134 = vmul.f32 %v2133, %v1092
        %v2135 = vadd.f32 %v2134, 1e-12
        %v2136 = vrsqrt.pop %v2135
        %v2137 = vmul.f32 %v2130, %v2136
        %v2139 = vlaneseq
        %v2140 = vshrl.u32 %v2139, 7
        %v2141 = vsub.s32 0, %v2140
        %v2142 = vrot.slane %v2125, %v2141
        %v2144 = vmul.f32 %v2137, %v2142
        %v2146 = vlaneseq
        %v2147 = vshrl.u32 %v2146, 7
        %v2148 = vsub.s32 0, %v2147
        %v2149 = vrot.slane %v2126, %v2148
        %v2151 = vadd.f32 %v2144, %v2149
        %v2152 = vpack.c.bf16 %v2151, %v2151
        %v2153 = vld [vmem:[#allocation25] sm:$0xff]
        %v2154 = vld [vmem:[#allocation25 + $0x8] sm:$0xff]
        %v2155 = vld [vmem:[#allocation25 + $0x10] sm:$0xff]
        %v2156 = vld [vmem:[#allocation25 + $0x18] sm:$0xff]
        %v2157 = vld [vmem:[#allocation25 + $0x20] sm:$0xff]
        %v2158 = vld [vmem:[#allocation25 + $0x28] sm:$0xff]
        %v2159 = vld [vmem:[#allocation25 + $0x30] sm:$0xff]
        %v2160 = vld [vmem:[#allocation25 + $0x38] sm:$0xff]
        %v2161 = vld [vmem:[#allocation25 + $0x40] sm:$0xff]
        %v2162 = vld [vmem:[#allocation25 + $0x48] sm:$0xff]
        %v2163 = vld [vmem:[#allocation25 + $0x50] sm:$0xff]
        %v2164 = vld [vmem:[#allocation25 + $0x58] sm:$0xff]
        %v2165 = vld [vmem:[#allocation25 + $0x60] sm:$0xff]
        %v2166 = vld [vmem:[#allocation25 + $0x68] sm:$0xff]
        %v2167 = vld [vmem:[#allocation25 + $0x70] sm:$0xff]
        %v2168 = vld [vmem:[#allocation25 + $0x78] sm:$0xff]
        %v2169 = vld [vmem:[#allocation27] sm:$0x3]
        %v2171 = vlaneseq
        %v2172 = vshrl.u32 %v2171, 7
        %v2173 = vsub.s32 0, %v2172
        %v2174 = vrot.slane %v2169, %v2173
        %v2175 = vlaneseq
        %v2176 = vshrl.u32 %v2175, 7
        %v2177 = vsub.s32 1, %v2176
        %v2178 = vrot.slane %v2169, %v2177
        %v2197 = vunpack.c.l.b16 %v2153
        %v2198 = vunpack.c.h.b16 %v2153
        %v2199 = vunpack.c.l.b16 %v2154
        %v2200 = vunpack.c.h.b16 %v2154
        %v2201 = vunpack.c.l.b16 %v2155
        %v2202 = vunpack.c.h.b16 %v2155
        %v2203 = vunpack.c.l.b16 %v2156
        %v2204 = vunpack.c.h.b16 %v2156
        %v2205 = vunpack.c.l.b16 %v2157
        %v2206 = vunpack.c.h.b16 %v2157
        %v2207 = vunpack.c.l.b16 %v2158
        %v2208 = vunpack.c.h.b16 %v2158
        %v2209 = vunpack.c.l.b16 %v2159
        %v2210 = vunpack.c.h.b16 %v2159
        %v2211 = vunpack.c.l.b16 %v2160
        %v2212 = vunpack.c.h.b16 %v2160
        %v2213 = vunpack.c.l.b16 %v2161
        %v2214 = vunpack.c.h.b16 %v2161
        %v2215 = vunpack.c.l.b16 %v2162
        %v2216 = vunpack.c.h.b16 %v2162
        %v2217 = vunpack.c.l.b16 %v2163
        %v2218 = vunpack.c.h.b16 %v2163
        %v2219 = vunpack.c.l.b16 %v2164
        %v2220 = vunpack.c.h.b16 %v2164
        %v2221 = vunpack.c.l.b16 %v2165
        %v2222 = vunpack.c.h.b16 %v2165
        %v2223 = vunpack.c.l.b16 %v2166
        %v2224 = vunpack.c.h.b16 %v2166
        %v2225 = vunpack.c.l.b16 %v2167
        %v2226 = vunpack.c.h.b16 %v2167
        %v2227 = vunpack.c.l.b16 %v2168
        %v2228 = vunpack.c.h.b16 %v2168
        %v2229 = vpack.c.b16 %v2199, %v2197
        %v2230 = vpack.c.b16 %v2200, %v2198
        %v2231 = vpack.c.b16 %v2203, %v2201
        %v2232 = vpack.c.b16 %v2204, %v2202
        %v2233 = vpack.c.b16 %v2207, %v2205
        %v2234 = vpack.c.b16 %v2208, %v2206
        %v2235 = vpack.c.b16 %v2211, %v2209
        %v2236 = vpack.c.b16 %v2212, %v2210
        %v2237 = vpack.c.b16 %v2215, %v2213
        %v2238 = vpack.c.b16 %v2216, %v2214
        %v2239 = vpack.c.b16 %v2219, %v2217
        %v2240 = vpack.c.b16 %v2220, %v2218
        %v2241 = vpack.c.b16 %v2223, %v2221
        %v2242 = vpack.c.b16 %v2224, %v2222
        %v2243 = vpack.c.b16 %v2227, %v2225
        %v2244 = vpack.c.b16 %v2228, %v2226
        %2261 = vmatprep.subr.bf16.mxu0 %v2230
        %2262 = vmatpush1.bf16.msra.mxu0 %v2229
        %2263 = vmatprep.subr.bf16.mxu0 %v2232
        %2264 = vmatpush1.bf16.msra.mxu0 %v2231
        %2265 = vmatprep.subr.bf16.mxu0 %v2234
        %2266 = vmatpush1.bf16.msra.mxu0 %v2233
        %2267 = vmatprep.subr.bf16.mxu0 %v2236
        %2268 = vmatpush1.bf16.msra.mxu0 %v2235
        %2269 = vmatprep.subr.bf16.mxu0 %v2238
        %2270 = vmatpush1.bf16.msra.mxu0 %v2237
        %2271 = vmatprep.subr.bf16.mxu0 %v2240
        %2272 = vmatpush1.bf16.msra.mxu0 %v2239
        %2273 = vmatprep.subr.bf16.mxu0 %v2242
        %2274 = vmatpush1.bf16.msra.mxu0 %v2241
        %2275 = vmatprep.subr.bf16.mxu0 %v2244
        %2276 = vmatpush1.bf16.msra.mxu0 %v2243
        %2277 = vmatprep.subr.bf16.mxu0 0
        %2278 = vmatpush1.bf16.msra.mxu0 0
        %2279 = vmatprep.subr.bf16.mxu0 0
        %2280 = vmatpush1.bf16.msra.mxu0 0
        %2281 = vmatprep.subr.bf16.mxu0 0
        %2282 = vmatpush1.bf16.msra.mxu0 0
        %2283 = vmatprep.subr.bf16.mxu0 0
        %2284 = vmatpush1.bf16.msra.mxu0 0
        %2285 = vmatprep.subr.bf16.mxu0 0
        %2286 = vmatpush1.bf16.msra.mxu0 0
        %2287 = vmatprep.subr.bf16.mxu0 0
        %2288 = vmatpush1.bf16.msra.mxu0 0
        %2289 = vmatprep.subr.bf16.mxu0 0
        %2290 = vmatpush1.bf16.msra.mxu0 0
        %2291 = vmatprep.subr.bf16.mxu0 0
        %2292 = vmatpush1.bf16.msra.mxu0 0
        %2293 = vmatprep.mubr.bf16.mxu0 0
        %2294 = vmatmul.mubr.bf16.gmra.mrb[0].mxu0 %v2152
        %v2295 = vpop.f32.mrb[0].mxu0
        %v2296 = vadd.f32 %v2174, %v2295
        %v2297 = vpop.f32.mrb[0].mxu0
        %v2298 = vadd.f32 %v2178, %v2297
        %v2299 = vpop.f32.mrb[0].mxu0
        %v2300 = vpop.f32.mrb[0].mxu0
        %2301 = vdwg.mxu0
        %v2302 = vmax.f32 %v2296, 0.0
        %v2303 = vmax.f32 %v2298, 0.0
        %v2304 = vpack.c.bf16 %v2302, %v2302
        %v2305 = vpack.c.bf16 %v2303, %v2303
        %v2306 = vld [vmem:[#allocation28] sm:$0xf]
        %v2307 = vld [vmem:[#allocation28 + $0x4] sm:$0xf]
        %v2308 = vld [vmem:[#allocation28 + $0x8] sm:$0xf]
        %v2309 = vld [vmem:[#allocation28 + $0xc] sm:$0xf]
        %v2310 = vld [vmem:[#allocation28 + $0x10] sm:$0xf]
        %v2311 = vld [vmem:[#allocation28 + $0x14] sm:$0xf]
        %v2312 = vld [vmem:[#allocation28 + $0x18] sm:$0xf]
        %v2313 = vld [vmem:[#allocation28 + $0x1c] sm:$0xf]
        %v2314 = vld [vmem:[#allocation28 + $0x20] sm:$0xf]
        %v2315 = vld [vmem:[#allocation28 + $0x24] sm:$0xf]
        %v2316 = vld [vmem:[#allocation28 + $0x28] sm:$0xf]
        %v2317 = vld [vmem:[#allocation28 + $0x2c] sm:$0xf]
        %v2318 = vld [vmem:[#allocation28 + $0x30] sm:$0xf]
        %v2319 = vld [vmem:[#allocation28 + $0x34] sm:$0xf]
        %v2320 = vld [vmem:[#allocation28 + $0x38] sm:$0xf]
        %v2321 = vld [vmem:[#allocation28 + $0x3c] sm:$0xf]
        %v2322 = vld [vmem:[#allocation28 + $0x40] sm:$0xf]
        %v2323 = vld [vmem:[#allocation28 + $0x44] sm:$0xf]
        %v2324 = vld [vmem:[#allocation28 + $0x48] sm:$0xf]
        %v2325 = vld [vmem:[#allocation28 + $0x4c] sm:$0xf]
        %v2326 = vld [vmem:[#allocation28 + $0x50] sm:$0xf]
        %v2327 = vld [vmem:[#allocation28 + $0x54] sm:$0xf]
        %v2328 = vld [vmem:[#allocation28 + $0x58] sm:$0xf]
        %v2329 = vld [vmem:[#allocation28 + $0x5c] sm:$0xf]
        %v2330 = vld [vmem:[#allocation28 + $0x60] sm:$0xf]
        %v2331 = vld [vmem:[#allocation28 + $0x64] sm:$0xf]
        %v2332 = vld [vmem:[#allocation28 + $0x68] sm:$0xf]
        %v2333 = vld [vmem:[#allocation28 + $0x6c] sm:$0xf]
        %v2334 = vld [vmem:[#allocation28 + $0x70] sm:$0xf]
        %v2335 = vld [vmem:[#allocation28 + $0x74] sm:$0xf]
        %v2336 = vld [vmem:[#allocation28 + $0x78] sm:$0xf]
        %v2337 = vld [vmem:[#allocation28 + $0x7c] sm:$0xf]
        %v2338 = vld [vmem:[#allocation30] sm:$0x1]
        %v2340 = vlaneseq
        %v2341 = vshrl.u32 %v2340, 7
        %v2342 = vsub.s32 0, %v2341
        %v2343 = vrot.slane %v2338, %v2342
        %v2377 = vunpack.c.l.b16 %v2306
        %v2378 = vunpack.c.l.b16 %v2307
        %v2379 = vunpack.c.l.b16 %v2308
        %v2380 = vunpack.c.l.b16 %v2309
        %v2381 = vunpack.c.l.b16 %v2310
        %v2382 = vunpack.c.l.b16 %v2311
        %v2383 = vunpack.c.l.b16 %v2312
        %v2384 = vunpack.c.l.b16 %v2313
        %v2385 = vunpack.c.l.b16 %v2314
        %v2386 = vunpack.c.l.b16 %v2315
        %v2387 = vunpack.c.l.b16 %v2316
        %v2388 = vunpack.c.l.b16 %v2317
        %v2389 = vunpack.c.l.b16 %v2318
        %v2390 = vunpack.c.l.b16 %v2319
        %v2391 = vunpack.c.l.b16 %v2320
        %v2392 = vunpack.c.l.b16 %v2321
        %v2393 = vunpack.c.l.b16 %v2322
        %v2394 = vunpack.c.l.b16 %v2323
        %v2395 = vunpack.c.l.b16 %v2324
        %v2396 = vunpack.c.l.b16 %v2325
        %v2397 = vunpack.c.l.b16 %v2326
        %v2398 = vunpack.c.l.b16 %v2327
        %v2399 = vunpack.c.l.b16 %v2328
        %v2400 = vunpack.c.l.b16 %v2329
        %v2401 = vunpack.c.l.b16 %v2330
        %v2402 = vunpack.c.l.b16 %v2331
        %v2403 = vunpack.c.l.b16 %v2332
        %v2404 = vunpack.c.l.b16 %v2333
        %v2405 = vunpack.c.l.b16 %v2334
        %v2406 = vunpack.c.l.b16 %v2335
        %v2407 = vunpack.c.l.b16 %v2336
        %v2408 = vunpack.c.l.b16 %v2337
        %v2409 = vpack.c.b16 %v2378, %v2377
        %v2410 = vpack.c.b16 %v2380, %v2379
        %v2411 = vpack.c.b16 %v2382, %v2381
        %v2412 = vpack.c.b16 %v2384, %v2383
        %v2413 = vpack.c.b16 %v2386, %v2385
        %v2414 = vpack.c.b16 %v2388, %v2387
        %v2415 = vpack.c.b16 %v2390, %v2389
        %v2416 = vpack.c.b16 %v2392, %v2391
        %v2417 = vpack.c.b16 %v2394, %v2393
        %v2418 = vpack.c.b16 %v2396, %v2395
        %v2419 = vpack.c.b16 %v2398, %v2397
        %v2420 = vpack.c.b16 %v2400, %v2399
        %v2421 = vpack.c.b16 %v2402, %v2401
        %v2422 = vpack.c.b16 %v2404, %v2403
        %v2423 = vpack.c.b16 %v2406, %v2405
        %v2424 = vpack.c.b16 %v2408, %v2407
        %2441 = vmatprep.subr.bf16.mxu0 0
        %2442 = vmatpush1.bf16.msra.mxu0 %v2409
        %2443 = vmatprep.subr.bf16.mxu0 0
        %2444 = vmatpush1.bf16.msra.mxu0 %v2410
        %2445 = vmatprep.subr.bf16.mxu0 0
        %2446 = vmatpush1.bf16.msra.mxu0 %v2411
        %2447 = vmatprep.subr.bf16.mxu0 0
        %2448 = vmatpush1.bf16.msra.mxu0 %v2412
        %2449 = vmatprep.subr.bf16.mxu0 0
        %2450 = vmatpush1.bf16.msra.mxu0 %v2413
        %2451 = vmatprep.subr.bf16.mxu0 0
        %2452 = vmatpush1.bf16.msra.mxu0 %v2414
        %2453 = vmatprep.subr.bf16.mxu0 0
        %2454 = vmatpush1.bf16.msra.mxu0 %v2415
        %2455 = vmatprep.subr.bf16.mxu0 0
        %2456 = vmatpush1.bf16.msra.mxu0 %v2416
        %2457 = vmatprep.subr.bf16.mxu0 0
        %2458 = vmatpush1.bf16.msra.mxu0 %v2417
        %2459 = vmatprep.subr.bf16.mxu0 0
        %2460 = vmatpush1.bf16.msra.mxu0 %v2418
        %2461 = vmatprep.subr.bf16.mxu0 0
        %2462 = vmatpush1.bf16.msra.mxu0 %v2419
        %2463 = vmatprep.subr.bf16.mxu0 0
        %2464 = vmatpush1.bf16.msra.mxu0 %v2420
        %2465 = vmatprep.subr.bf16.mxu0 0
        %2466 = vmatpush1.bf16.msra.mxu0 %v2421
        %2467 = vmatprep.subr.bf16.mxu0 0
        %2468 = vmatpush1.bf16.msra.mxu0 %v2422
        %2469 = vmatprep.subr.bf16.mxu0 0
        %2470 = vmatpush1.bf16.msra.mxu0 %v2423
        %2471 = vmatprep.subr.bf16.mxu0 0
        %2472 = vmatpush1.bf16.msra.mxu0 %v2424
        %2473 = vmatprep.mubr.bf16.mxu0 %v2305
        %2474 = vmatmul.mubr.bf16.gmra.mrb[0].mxu0 %v2304
        %v2475 = vpop.f32.mrb[0].mxu0
        %v2476 = vadd.f32 %v2343, %v2475
        %v2477 = vpop.f32.mrb[0].mxu0
        %v2478 = vpop.f32.mrb[0].mxu0
        %v2479 = vpop.f32.mrb[0].mxu0
        %2480 = vdwg.mxu0
        %v2481 = vadd.f32 %v2124, %v2476
        %2482 = vst [vmem:[%s837] sm:$0xff] %v2481
        %s2483 = sand.u32 %s440, 1
        %s2484 = scalar_lea.sflag [#allocation6], %s2483
        %s2485 = sand.u32 %s440, 1
        %s2486 = smul.addr %s2485, 8
        %s2487 = scalar_lea.vmem [#allocation31], %s2486
        // Predicated region
        $region161: #{tpu_custom_call.1} parent=87 // pred_check
          %p2488 = pneg %p450
        $region162: #{tpu_custom_call.1} parent=87 // pred_check_branch
          %2490 = sbr.rel (%p2488) target = $region164
        $region163: #{tpu_custom_call.1} parent=87 // pred_region
          %s2492 = ssub.s32 128, 128
          %2493 = vsyncadd %s2484, %s2492
          %s2494 = smul.addr %s48, 2
          %s2495 = sadd.s32 %s49, %s2494
          %s2496 = smul.addr %s2495, 128
          %s2497 = scalar_lea.hbm %s17, %s2496
          %s2499 = sshll.u32 %s2487, 4
          %s2500 = int_to_ptr.vmem [resolvable:$true] %s2499
          %2502 = dma.vmem_to_hbm [thread:$0]  %s2500, 128, %s2497, %s2484
        $region164: #{tpu_custom_call.1} parent=87 // pred_fallthru
          _
      $region88: #{tpu_custom_call.1} parent=5 // pred_fallthru
        _
      %p2503 = scmp.le.s32.totalorder 2, %s39
      // Predicated region
      $region165: #{tpu_custom_call.1} parent=5 // pred_check
        %p2504 = pneg %p2503
      $region166: #{tpu_custom_call.1} parent=5 // pred_check_branch
        %2506 = sbr.rel (%p2504) target = $region168
      $region167: #{tpu_custom_call.1} parent=5 // pred_region
        %s2507 = ssub.s32 %s39, 2
        // Predicated region
        $region169: #{tpu_custom_call.1} parent=167 // pred_check
          %p2508 = pneg %p456
        $region170: #{tpu_custom_call.1} parent=167 // pred_check_branch
          %2510 = sbr.rel (%p2508) target = $region172
        $region171: #{tpu_custom_call.1} parent=167 // pred_region
          %s2511 = sand.u32 %s441, 1
          %s2512 = scalar_lea.sflag [#allocation6], %s2511
          %s2513 = sand.u32 %s441, 1
          %s2514 = smul.addr %s2513, 8
          %s2515 = scalar_lea.vmem [#allocation31], %s2514
          %2516 = dma.done %s2512, 128
        $region172: #{tpu_custom_call.1} parent=167 // pred_fallthru
          _
      $region168: #{tpu_custom_call.1} parent=5 // pred_fallthru
        _
    $region6: #{tpu_custom_call.1} parent=1 // loop_footer
      %s43 = sadd.s32 1, %s39
    $region7: #{tpu_custom_call.1} parent=1 // loop_footer_branch
      %38 = sbr.rel target = $region3
    $region8: #{tpu_custom_call.1} parent=1 // loop_exit
      _
    %2517 = vsyncpa [#allocation5], 1
    %s2518 = scalar_lea.sflag [#allocation5], 1
    %2519 = vsyncpa %s2518, 1
    %2520 = vsyncpa [#allocation8], 1
    %s2521 = scalar_lea.sflag [#allocation8], 1
    %2522 = vsyncpa %s2521, 1
    %2523 = vsyncpa [#allocation11], 1
    %2524 = vsyncpa [#allocation14], 1
    %2525 = vsyncpa [#allocation17], 1
    %2526 = vsyncpa [#allocation20], 1
    %2527 = vsyncpa [#allocation23], 1
    %2528 = vsyncpa [#allocation26], 1
    %2529 = vsyncpa [#allocation29], 1
    %2530 = vsyncpa [#allocation6], 1
    %s2531 = scalar_lea.sflag [#allocation6], 1
    %2532 = vsyncpa %s2531, 1

</llo_original>
